<compile_context>
chip_gen: v7x
topology: tpu7x:2x2x1
jax: 0.10.0
libtpu: 0.0.40
codegen_flags: <defaults>
</compile_context>

<pallas_src>
import jax
import jax.numpy as jnp
from jax import lax
from jax.experimental import pallas as pl
from jax.experimental.pallas import tpu as pltpu

UPSAMPLE = 2
K1, K2, K3 = 9, 1, 5          # conv kernel sizes
P1, P3 = 4, 2                 # paddings for conv1 / conv3
C1, C2 = 64, 32               # hidden channel widths


def _make_sr_kernel(H, W, r2):
    """Returns the kernel body closed over static spatial sizes."""
    HW = H * W
    HIGH = jax.lax.Precision.HIGHEST

    def kernel(p_ref, col_ref, w1_ref, b1_ref, a1_ref, w2_ref, b2_ref, a2_ref,
               w3_ref, b3_ref, out_ref):
        # p_ref  : (81, HW)        im2col patches of the padded input (lane-dense)
        # col_ref: (r2, HW) int32  x-coordinate of each flattened pixel
        # w1_ref : (C1, 81)   w2_ref: (C2, C1)   w3_ref: (25*r2, C2)
        # b*_ref : (C, 1)     a*_ref: (1, 1) in SMEM
        # out_ref: (r2, HW)        pre-pixel-shuffle output (lane-dense)
        f32 = jnp.float32

        # ---- conv1: 9x9, 1 -> C1, as one MXU matmul over im2col patches.
        h1 = jnp.dot(w1_ref[...], p_ref[...],
                     preferred_element_type=f32, precision=HIGH)      # (C1, HW)
        h1 = h1 + b1_ref[...]
        h1 = jnp.where(h1 >= 0, h1, a1_ref[0, 0] * h1)                # PReLU

        # ---- conv2: 1x1, C1 -> C2, single MXU matmul.
        h2 = jnp.dot(w2_ref[...], h1,
                     preferred_element_type=f32, precision=HIGH)      # (C2, HW)
        h2 = h2 + b2_ref[...]
        h2 = jnp.where(h2 >= 0, h2, a2_ref[0, 0] * h2)                # PReLU

        # ---- conv3: 5x5, C2 -> r2.  All 25 taps packed into the matmul
        #      M dimension -> one MXU pass, then shifted adds.
        t = jnp.dot(w3_ref[...], h2,
                    preferred_element_type=f32, precision=HIGH)       # (25*r2, HW)

        # Column-validity masks (one per horizontal offset dx), hoisted out of
        # the tap loop.  Row validity is handled exactly by the zero fill of
        # the lane shift below.
        col = col_ref[...]
        col_ok = {}
        for dx in range(-P3, P3 + 1):
            if dx == 0:
                col_ok[dx] = None
            else:
                cx = col + dx
                col_ok[dx] = (cx >= 0) & (cx < W)

        acc = jnp.zeros((r2, HW), f32)
        for ky in range(K3):
            dy = ky - P3
            for kx in range(K3):
                dx = kx - P3
                s = dy * W + dx                      # flat-index shift of this tap
                tap = ky * K3 + kx
                tt = t[tap * r2:(tap + 1) * r2, :]   # (r2, HW) tap slice
                # zero-filled lane shift: shifted[i] = tt[i + s] (0 outside image rows)
                if s > 0:
                    tt = jnp.concatenate(
                        [tt[:, s:], jnp.zeros((r2, s), f32)], axis=1)
                elif s < 0:
                    tt = jnp.concatenate(
                        [jnp.zeros((r2, -s), f32), tt[:, :HW + s]], axis=1)
                if col_ok[dx] is not None:
                    tt = jnp.where(col_ok[dx], tt, 0.0)
                acc = acc + tt

        out_ref[...] = acc + b3_ref[...]

    return kernel


def simple_sr_forward(x_nchw, params, upsample_factor=UPSAMPLE):
    """x_nchw: (N, 1, H, W) f32  ->  (N, 1, H*r, W*r) f32 (PyTorch semantics)."""
    w1, b1, a1, w2, b2, a2, w3, b3 = params
    N, cin, H, W = x_nchw.shape
    assert cin == 1
    r = upsample_factor
    r2 = r * r
    HW = H * W

    # ---- PyTorch weights -> kernel layouts (glue) ----
    w1k = w1.reshape(C1, K1 * K1).astype(jnp.float32)                 # (64, 81)
    w2k = w2[:, :, 0, 0].astype(jnp.float32)                          # (32, 64)
    # w3: (r2, C2, K3, K3) -> (K3, K3, r2, C2) -> (25*r2, C2); row = tap*r2 + c_out
    w3k = jnp.transpose(w3, (2, 3, 0, 1)).reshape(K3 * K3 * r2, C2).astype(jnp.float32)
    b1k = b1.reshape(C1, 1).astype(jnp.float32)
    b2k = b2.reshape(C2, 1).astype(jnp.float32)
    b3k = b3.reshape(r2, 1).astype(jnp.float32)
    a1k = jnp.reshape(a1, (1, 1)).astype(jnp.float32)
    a2k = jnp.reshape(a2, (1, 1)).astype(jnp.float32)

    # ---- im2col for conv1 in glue (pure data movement): (N, 81, H*W), lane-dense.
    xpad = jnp.pad(x_nchw[:, 0].astype(jnp.float32),
                   ((0, 0), (P1, P1), (P1, P1)))                      # (N, H+8, W+8)
    taps = [xpad[:, ky:ky + H, kx:kx + W].reshape(N, 1, HW)
            for ky in range(K1) for kx in range(K1)]
    patches = jnp.concatenate(taps, axis=1)                           # (N, 81, HW)

    # Static x-coordinate map for conv3 boundary masking.
    col = jnp.tile(jnp.arange(W, dtype=jnp.int32), (r2, H))           # (r2, HW)

    def full_spec(arr):
        nd = arr.ndim
        return pl.BlockSpec(arr.shape, lambda n: (0,) * nd)

    smem_spec = pl.BlockSpec(memory_space=pltpu.MemorySpace.SMEM)

    kernel = _make_sr_kernel(H, W, r2)
    out = pl.pallas_call(
        kernel,
        out_shape=jax.ShapeDtypeStruct((N, r2, HW), jnp.float32),
        grid_spec=pltpu.PrefetchScalarGridSpec(
            num_scalar_prefetch=0,
            grid=(N,),
            in_specs=[
                pl.BlockSpec((None, K1 * K1, HW), lambda n: (n, 0, 0)),
                full_spec(col),
                full_spec(w1k), full_spec(b1k), smem_spec,
                full_spec(w2k), full_spec(b2k), smem_spec,
                full_spec(w3k), full_spec(b3k),
            ],
            out_specs=pl.BlockSpec((None, r2, HW), lambda n: (n, 0, 0)),
        ),
        compiler_params=pltpu.CompilerParams(
            dimension_semantics=("parallel",)),
    )(patches, col, w1k, b1k, a1k, w2k, b2k, a2k, w3k, b3k)

    # ---- PixelShuffle(r): (N, r*r, H*W) -> (N, 1, H*r, W*r)  (glue) ----
    out = out.reshape(N, r, r, H, W)
    out = jnp.transpose(out, (0, 3, 1, 4, 2))          # (N, H, r, W, r)
    return out.reshape(N, 1, H * r, W * r)


def reference_forward(x, params, r):
    """Pure-JAX reference mirroring the PyTorch module."""
    w1, b1, a1, w2, b2, a2, w3, b3 = params

    def conv(x, w, b, pad):
        y = lax.conv_general_dilated(
            x, w, window_strides=(1, 1), padding=((pad, pad), (pad, pad)),
            dimension_numbers=('NCHW', 'OIHW', 'NCHW'),
            precision=lax.Precision.HIGHEST)
        return y + b[None, :, None, None]

    def prelu(x, a):
        return jnp.where(x >= 0, x, a * x)

    h = prelu(conv(x, w1, b1, P1), a1)
    h = prelu(conv(h, w2, b2, 0), a2)
    h = conv(h, w3, b3, P3)
    N, C, H, W = h.shape
    h = h.reshape(N, 1, r, r, H, W)
    h = jnp.transpose(h, (0, 1, 4, 2, 5, 3))           # (N, 1, H, r, W, r)
    return h.reshape(N, 1, H * r, W * r)


if __name__ == "__main__":
    r = UPSAMPLE
    key = jax.random.PRNGKey(0)
    ks = jax.random.split(key, 7)

    # Deterministic parameter init (shapes match nn.Conv2d / nn.PReLU defaults).
    w1 = jax.random.normal(ks[0], (C1, 1, K1, K1), jnp.float32) * 0.1
    b1 = jax.random.normal(ks[1], (C1,), jnp.float32) * 0.1
    w2 = jax.random.normal(ks[2], (C2, C1, K2, K2), jnp.float32) * 0.1
    b2 = jax.random.normal(ks[3], (C2,), jnp.float32) * 0.1
    w3 = jax.random.normal(ks[4], (r * r, C2, K3, K3), jnp.float32) * 0.1
    b3 = jax.random.normal(ks[5], (r * r,), jnp.float32) * 0.1
    a1 = jnp.float32(0.25)     # nn.PReLU() default single parameter
    a2 = jnp.float32(0.25)
    params = (w1, b1, a1, w2, b2, a2, w3, b3)

    x = jax.random.normal(ks[6], (2, 1, 16, 16), jnp.float32)   # (N, C, H, W)

    fwd = jax.jit(lambda xx, pp: simple_sr_forward(xx, pp, r))
    y = jax.block_until_ready(fwd(x, params))
    assert y.shape == (2, 1, 16 * r, 16 * r), y.shape

    y_ref = jax.block_until_ready(reference_forward(x, params, r))
    assert jnp.allclose(y, y_ref, atol=1e-2, rtol=1e-2), (
        float(jnp.max(jnp.abs(y - y_ref))))

    print("KERNEL_OK")
</pallas_src>

<mosaic_0001>
module attributes {stable_mosaic.version = 11 : i64} {
  func.func @kernel(%arg0: i32, %arg1: memref<1x81x256xf32, #tpu.memory_space<vmem>>, %arg2: memref<4x256xi32, #tpu.memory_space<vmem>>, %arg3: memref<64x81xf32, #tpu.memory_space<vmem>>, %arg4: memref<64x1xf32, #tpu.memory_space<vmem>>, %arg5: memref<1x1xf32, #tpu.memory_space<smem>>, %arg6: memref<32x64xf32, #tpu.memory_space<vmem>>, %arg7: memref<32x1xf32, #tpu.memory_space<vmem>>, %arg8: memref<1x1xf32, #tpu.memory_space<smem>>, %arg9: memref<100x32xf32, #tpu.memory_space<vmem>>, %arg10: memref<4x1xf32, #tpu.memory_space<vmem>>, %arg11: memref<1x4x256xf32, #tpu.memory_space<vmem>>) attributes {dimension_semantics = [#tpu.dimension_semantics<parallel>], iteration_bounds = array<i64: 2>, scalar_prefetch = 0 : i64, scratch_operands = 0 : i64, tpu.core_type = #tpu.core_type<tc>, window_params = [{transform_indices = @transform_0, window_bounds = array<i64: 1, 81, 256>}, {pipeline_mode = #tpu.pipeline_mode<synchronous>, transform_indices = @transform_1, window_bounds = array<i64: 4, 256>}, {pipeline_mode = #tpu.pipeline_mode<synchronous>, transform_indices = @transform_2, window_bounds = array<i64: 64, 81>}, {pipeline_mode = #tpu.pipeline_mode<synchronous>, transform_indices = @transform_3, window_bounds = array<i64: 64, 1>}, {transform_indices = @transform_4, window_bounds = array<i64: 1, 1>}, {pipeline_mode = #tpu.pipeline_mode<synchronous>, transform_indices = @transform_5, window_bounds = array<i64: 32, 64>}, {pipeline_mode = #tpu.pipeline_mode<synchronous>, transform_indices = @transform_6, window_bounds = array<i64: 32, 1>}, {transform_indices = @transform_7, window_bounds = array<i64: 1, 1>}, {pipeline_mode = #tpu.pipeline_mode<synchronous>, transform_indices = @transform_8, window_bounds = array<i64: 100, 32>}, {pipeline_mode = #tpu.pipeline_mode<synchronous>, transform_indices = @transform_9, window_bounds = array<i64: 4, 1>}, {transform_indices = @transform_10, window_bounds = array<i64: 1, 4, 256>}]} {
    %c0 = arith.constant 0 : index
    %c0_0 = arith.constant 0 : index
    %0 = vector.load %arg3[%c0, %c0_0] : memref<64x81xf32, #tpu.memory_space<vmem>>, vector<64x81xf32>
    %c0_1 = arith.constant 0 : index
    %c0_2 = arith.constant 0 : index
    %c0_3 = arith.constant 0 : index
    %1 = vector.load %arg1[%c0_1, %c0_2, %c0_3] : memref<1x81x256xf32, #tpu.memory_space<vmem>>, vector<1x81x256xf32>
    %2 = vector.shape_cast %1 : vector<1x81x256xf32> to vector<81x256xf32>
    %cst = arith.constant dense<0.000000e+00> : vector<64x256xf32>
    %3 = tpu.matmul %0, %2, %cst {dimension_numbers = #tpu.dot_dimension_numbers<[1], [0], [0], [1], [0, 0, 1, 1], [], []>, precision = #tpu.contract_precision<fp32>} : vector<64x81xf32>, vector<81x256xf32>, vector<64x256xf32> -> vector<64x256xf32>
    %c0_4 = arith.constant 0 : index
    %c0_5 = arith.constant 0 : index
    %4 = vector.load %arg4[%c0_4, %c0_5] : memref<64x1xf32, #tpu.memory_space<vmem>>, vector<64x1xf32>
    %5 = vector.broadcast %4 : vector<64x1xf32> to vector<64x256xf32>
    %6 = arith.addf %3, %5 : vector<64x256xf32>
    %cst_6 = arith.constant 0.000000e+00 : f32
    %7 = vector.broadcast %cst_6 : f32 to vector<64x256xf32>
    %8 = arith.cmpf oge, %6, %7 : vector<64x256xf32>
    %c0_7 = arith.constant 0 : index
    %c0_8 = arith.constant 0 : index
    %9 = memref.load %arg5[%c0_7, %c0_8] : memref<1x1xf32, #tpu.memory_space<smem>>
    %10 = vector.broadcast %9 : f32 to vector<64x256xf32>
    %11 = arith.mulf %10, %6 : vector<64x256xf32>
    %12 = arith.select %8, %6, %11 : vector<64x256xi1>, vector<64x256xf32>
    %c0_9 = arith.constant 0 : index
    %c0_10 = arith.constant 0 : index
    %13 = vector.load %arg6[%c0_9, %c0_10] : memref<32x64xf32, #tpu.memory_space<vmem>>, vector<32x64xf32>
    %cst_11 = arith.constant dense<0.000000e+00> : vector<32x256xf32>
    %14 = tpu.matmul %13, %12, %cst_11 {dimension_numbers = #tpu.dot_dimension_numbers<[1], [0], [0], [1], [0, 0, 1, 1], [], []>, precision = #tpu.contract_precision<fp32>} : vector<32x64xf32>, vector<64x256xf32>, vector<32x256xf32> -> vector<32x256xf32>
    %c0_12 = arith.constant 0 : index
    %c0_13 = arith.constant 0 : index
    %15 = vector.load %arg7[%c0_12, %c0_13] : memref<32x1xf32, #tpu.memory_space<vmem>>, vector<32x1xf32>
    %16 = vector.broadcast %15 : vector<32x1xf32> to vector<32x256xf32>
    %17 = arith.addf %14, %16 : vector<32x256xf32>
    %cst_14 = arith.constant 0.000000e+00 : f32
    %18 = vector.broadcast %cst_14 : f32 to vector<32x256xf32>
    %19 = arith.cmpf oge, %17, %18 : vector<32x256xf32>
    %c0_15 = arith.constant 0 : index
    %c0_16 = arith.constant 0 : index
    %20 = memref.load %arg8[%c0_15, %c0_16] : memref<1x1xf32, #tpu.memory_space<smem>>
    %21 = vector.broadcast %20 : f32 to vector<32x256xf32>
    %22 = arith.mulf %21, %17 : vector<32x256xf32>
    %23 = arith.select %19, %17, %22 : vector<32x256xi1>, vector<32x256xf32>
    %c0_17 = arith.constant 0 : index
    %c0_18 = arith.constant 0 : index
    %24 = vector.load %arg9[%c0_17, %c0_18] : memref<100x32xf32, #tpu.memory_space<vmem>>, vector<100x32xf32>
    %cst_19 = arith.constant dense<0.000000e+00> : vector<100x256xf32>
    %25 = tpu.matmul %24, %23, %cst_19 {dimension_numbers = #tpu.dot_dimension_numbers<[1], [0], [0], [1], [0, 0, 1, 1], [], []>, precision = #tpu.contract_precision<fp32>} : vector<100x32xf32>, vector<32x256xf32>, vector<100x256xf32> -> vector<100x256xf32>
    %c0_20 = arith.constant 0 : index
    %c0_21 = arith.constant 0 : index
    %26 = vector.load %arg2[%c0_20, %c0_21] : memref<4x256xi32, #tpu.memory_space<vmem>>, vector<4x256xi32>
    %c-2_i32 = arith.constant -2 : i32
    %27 = vector.broadcast %c-2_i32 : i32 to vector<4x256xi32>
    %28 = arith.addi %26, %27 : vector<4x256xi32>
    %c0_i32 = arith.constant 0 : i32
    %29 = vector.broadcast %c0_i32 : i32 to vector<4x256xi32>
    %30 = arith.cmpi sge, %28, %29 : vector<4x256xi32>
    %c16_i32 = arith.constant 16 : i32
    %31 = vector.broadcast %c16_i32 : i32 to vector<4x256xi32>
    %32 = arith.cmpi slt, %28, %31 : vector<4x256xi32>
    %33 = arith.andi %30, %32 : vector<4x256xi1>
    %c-1_i32 = arith.constant -1 : i32
    %34 = vector.broadcast %c-1_i32 : i32 to vector<4x256xi32>
    %35 = arith.addi %26, %34 : vector<4x256xi32>
    %c0_i32_22 = arith.constant 0 : i32
    %36 = vector.broadcast %c0_i32_22 : i32 to vector<4x256xi32>
    %37 = arith.cmpi sge, %35, %36 : vector<4x256xi32>
    %c16_i32_23 = arith.constant 16 : i32
    %38 = vector.broadcast %c16_i32_23 : i32 to vector<4x256xi32>
    %39 = arith.cmpi slt, %35, %38 : vector<4x256xi32>
    %40 = arith.andi %37, %39 : vector<4x256xi1>
    %c1_i32 = arith.constant 1 : i32
    %41 = vector.broadcast %c1_i32 : i32 to vector<4x256xi32>
    %42 = arith.addi %26, %41 : vector<4x256xi32>
    %c0_i32_24 = arith.constant 0 : i32
    %43 = vector.broadcast %c0_i32_24 : i32 to vector<4x256xi32>
    %44 = arith.cmpi sge, %42, %43 : vector<4x256xi32>
    %c16_i32_25 = arith.constant 16 : i32
    %45 = vector.broadcast %c16_i32_25 : i32 to vector<4x256xi32>
    %46 = arith.cmpi slt, %42, %45 : vector<4x256xi32>
    %47 = arith.andi %44, %46 : vector<4x256xi1>
    %c2_i32 = arith.constant 2 : i32
    %48 = vector.broadcast %c2_i32 : i32 to vector<4x256xi32>
    %49 = arith.addi %26, %48 : vector<4x256xi32>
    %c0_i32_26 = arith.constant 0 : i32
    %50 = vector.broadcast %c0_i32_26 : i32 to vector<4x256xi32>
    %51 = arith.cmpi sge, %49, %50 : vector<4x256xi32>
    %c16_i32_27 = arith.constant 16 : i32
    %52 = vector.broadcast %c16_i32_27 : i32 to vector<4x256xi32>
    %53 = arith.cmpi slt, %49, %52 : vector<4x256xi32>
    %54 = arith.andi %51, %53 : vector<4x256xi1>
    %cst_28 = arith.constant 0.000000e+00 : f32
    %55 = vector.broadcast %cst_28 : f32 to vector<4x256xf32>
    %56 = vector.extract_strided_slice %25 {offsets = [0, 0], sizes = [4, 256], strides = [1, 1]} : vector<100x256xf32> to vector<4x256xf32>
    %cst_29 = arith.constant 0.000000e+00 : f32
    %57 = vector.broadcast %cst_29 : f32 to vector<4x34xf32>
    %58 = vector.extract_strided_slice %56 {offsets = [0, 0], sizes = [4, 222], strides = [1, 1]} : vector<4x256xf32> to vector<4x222xf32>
    %59 = tpu.concatenate %57, %58 in 1 : vector<4x34xf32>, vector<4x222xf32> -> vector<4x256xf32>
    %cst_30 = arith.constant 0.000000e+00 : f32
    %60 = vector.broadcast %cst_30 : f32 to vector<4x256xf32>
    %61 = arith.select %33, %59, %60 : vector<4x256xi1>, vector<4x256xf32>
    %62 = arith.addf %55, %61 : vector<4x256xf32>
    %63 = vector.extract_strided_slice %25 {offsets = [4, 0], sizes = [4, 256], strides = [1, 1]} : vector<100x256xf32> to vector<4x256xf32>
    %cst_31 = arith.constant 0.000000e+00 : f32
    %64 = vector.broadcast %cst_31 : f32 to vector<4x33xf32>
    %65 = vector.extract_strided_slice %63 {offsets = [0, 0], sizes = [4, 223], strides = [1, 1]} : vector<4x256xf32> to vector<4x223xf32>
    %66 = tpu.concatenate %64, %65 in 1 : vector<4x33xf32>, vector<4x223xf32> -> vector<4x256xf32>
    %cst_32 = arith.constant 0.000000e+00 : f32
    %67 = vector.broadcast %cst_32 : f32 to vector<4x256xf32>
    %68 = arith.select %40, %66, %67 : vector<4x256xi1>, vector<4x256xf32>
    %69 = arith.addf %62, %68 : vector<4x256xf32>
    %70 = vector.extract_strided_slice %25 {offsets = [8, 0], sizes = [4, 256], strides = [1, 1]} : vector<100x256xf32> to vector<4x256xf32>
    %cst_33 = arith.constant 0.000000e+00 : f32
    %71 = vector.broadcast %cst_33 : f32 to vector<4x32xf32>
    %72 = vector.extract_strided_slice %70 {offsets = [0, 0], sizes = [4, 224], strides = [1, 1]} : vector<4x256xf32> to vector<4x224xf32>
    %73 = tpu.concatenate %71, %72 in 1 : vector<4x32xf32>, vector<4x224xf32> -> vector<4x256xf32>
    %74 = arith.addf %69, %73 : vector<4x256xf32>
    %75 = vector.extract_strided_slice %25 {offsets = [12, 0], sizes = [4, 256], strides = [1, 1]} : vector<100x256xf32> to vector<4x256xf32>
    %cst_34 = arith.constant 0.000000e+00 : f32
    %76 = vector.broadcast %cst_34 : f32 to vector<4x31xf32>
    %77 = vector.extract_strided_slice %75 {offsets = [0, 0], sizes = [4, 225], strides = [1, 1]} : vector<4x256xf32> to vector<4x225xf32>
    %78 = tpu.concatenate %76, %77 in 1 : vector<4x31xf32>, vector<4x225xf32> -> vector<4x256xf32>
    %cst_35 = arith.constant 0.000000e+00 : f32
    %79 = vector.broadcast %cst_35 : f32 to vector<4x256xf32>
    %80 = arith.select %47, %78, %79 : vector<4x256xi1>, vector<4x256xf32>
    %81 = arith.addf %74, %80 : vector<4x256xf32>
    %82 = vector.extract_strided_slice %25 {offsets = [16, 0], sizes = [4, 256], strides = [1, 1]} : vector<100x256xf32> to vector<4x256xf32>
    %cst_36 = arith.constant 0.000000e+00 : f32
    %83 = vector.broadcast %cst_36 : f32 to vector<4x30xf32>
    %84 = vector.extract_strided_slice %82 {offsets = [0, 0], sizes = [4, 226], strides = [1, 1]} : vector<4x256xf32> to vector<4x226xf32>
    %85 = tpu.concatenate %83, %84 in 1 : vector<4x30xf32>, vector<4x226xf32> -> vector<4x256xf32>
    %cst_37 = arith.constant 0.000000e+00 : f32
    %86 = vector.broadcast %cst_37 : f32 to vector<4x256xf32>
    %87 = arith.select %54, %85, %86 : vector<4x256xi1>, vector<4x256xf32>
    %88 = arith.addf %81, %87 : vector<4x256xf32>
    %89 = vector.extract_strided_slice %25 {offsets = [20, 0], sizes = [4, 256], strides = [1, 1]} : vector<100x256xf32> to vector<4x256xf32>
    %cst_38 = arith.constant 0.000000e+00 : f32
    %90 = vector.broadcast %cst_38 : f32 to vector<4x18xf32>
    %91 = vector.extract_strided_slice %89 {offsets = [0, 0], sizes = [4, 238], strides = [1, 1]} : vector<4x256xf32> to vector<4x238xf32>
    %92 = tpu.concatenate %90, %91 in 1 : vector<4x18xf32>, vector<4x238xf32> -> vector<4x256xf32>
    %cst_39 = arith.constant 0.000000e+00 : f32
    %93 = vector.broadcast %cst_39 : f32 to vector<4x256xf32>
    %94 = arith.select %33, %92, %93 : vector<4x256xi1>, vector<4x256xf32>
    %95 = arith.addf %88, %94 : vector<4x256xf32>
    %96 = vector.extract_strided_slice %25 {offsets = [24, 0], sizes = [4, 256], strides = [1, 1]} : vector<100x256xf32> to vector<4x256xf32>
    %cst_40 = arith.constant 0.000000e+00 : f32
    %97 = vector.broadcast %cst_40 : f32 to vector<4x17xf32>
    %98 = vector.extract_strided_slice %96 {offsets = [0, 0], sizes = [4, 239], strides = [1, 1]} : vector<4x256xf32> to vector<4x239xf32>
    %99 = tpu.concatenate %97, %98 in 1 : vector<4x17xf32>, vector<4x239xf32> -> vector<4x256xf32>
    %cst_41 = arith.constant 0.000000e+00 : f32
    %100 = vector.broadcast %cst_41 : f32 to vector<4x256xf32>
    %101 = arith.select %40, %99, %100 : vector<4x256xi1>, vector<4x256xf32>
    %102 = arith.addf %95, %101 : vector<4x256xf32>
    %103 = vector.extract_strided_slice %25 {offsets = [28, 0], sizes = [4, 256], strides = [1, 1]} : vector<100x256xf32> to vector<4x256xf32>
    %cst_42 = arith.constant 0.000000e+00 : f32
    %104 = vector.broadcast %cst_42 : f32 to vector<4x16xf32>
    %105 = vector.extract_strided_slice %103 {offsets = [0, 0], sizes = [4, 240], strides = [1, 1]} : vector<4x256xf32> to vector<4x240xf32>
    %106 = tpu.concatenate %104, %105 in 1 : vector<4x16xf32>, vector<4x240xf32> -> vector<4x256xf32>
    %107 = arith.addf %102, %106 : vector<4x256xf32>
    %108 = vector.extract_strided_slice %25 {offsets = [32, 0], sizes = [4, 256], strides = [1, 1]} : vector<100x256xf32> to vector<4x256xf32>
    %cst_43 = arith.constant 0.000000e+00 : f32
    %109 = vector.broadcast %cst_43 : f32 to vector<4x15xf32>
    %110 = vector.extract_strided_slice %108 {offsets = [0, 0], sizes = [4, 241], strides = [1, 1]} : vector<4x256xf32> to vector<4x241xf32>
    %111 = tpu.concatenate %109, %110 in 1 : vector<4x15xf32>, vector<4x241xf32> -> vector<4x256xf32>
    %cst_44 = arith.constant 0.000000e+00 : f32
    %112 = vector.broadcast %cst_44 : f32 to vector<4x256xf32>
    %113 = arith.select %47, %111, %112 : vector<4x256xi1>, vector<4x256xf32>
    %114 = arith.addf %107, %113 : vector<4x256xf32>
    %115 = vector.extract_strided_slice %25 {offsets = [36, 0], sizes = [4, 256], strides = [1, 1]} : vector<100x256xf32> to vector<4x256xf32>
    %cst_45 = arith.constant 0.000000e+00 : f32
    %116 = vector.broadcast %cst_45 : f32 to vector<4x14xf32>
    %117 = vector.extract_strided_slice %115 {offsets = [0, 0], sizes = [4, 242], strides = [1, 1]} : vector<4x256xf32> to vector<4x242xf32>
    %118 = tpu.concatenate %116, %117 in 1 : vector<4x14xf32>, vector<4x242xf32> -> vector<4x256xf32>
    %cst_46 = arith.constant 0.000000e+00 : f32
    %119 = vector.broadcast %cst_46 : f32 to vector<4x256xf32>
    %120 = arith.select %54, %118, %119 : vector<4x256xi1>, vector<4x256xf32>
    %121 = arith.addf %114, %120 : vector<4x256xf32>
    %122 = vector.extract_strided_slice %25 {offsets = [40, 0], sizes = [4, 256], strides = [1, 1]} : vector<100x256xf32> to vector<4x256xf32>
    %cst_47 = arith.constant 0.000000e+00 : f32
    %123 = vector.broadcast %cst_47 : f32 to vector<4x2xf32>
    %124 = vector.extract_strided_slice %122 {offsets = [0, 0], sizes = [4, 254], strides = [1, 1]} : vector<4x256xf32> to vector<4x254xf32>
    %125 = tpu.concatenate %123, %124 in 1 : vector<4x2xf32>, vector<4x254xf32> -> vector<4x256xf32>
    %cst_48 = arith.constant 0.000000e+00 : f32
    %126 = vector.broadcast %cst_48 : f32 to vector<4x256xf32>
    %127 = arith.select %33, %125, %126 : vector<4x256xi1>, vector<4x256xf32>
    %128 = arith.addf %121, %127 : vector<4x256xf32>
    %129 = vector.extract_strided_slice %25 {offsets = [44, 0], sizes = [4, 256], strides = [1, 1]} : vector<100x256xf32> to vector<4x256xf32>
    %cst_49 = arith.constant 0.000000e+00 : f32
    %130 = vector.broadcast %cst_49 : f32 to vector<4x1xf32>
    %131 = vector.extract_strided_slice %129 {offsets = [0, 0], sizes = [4, 255], strides = [1, 1]} : vector<4x256xf32> to vector<4x255xf32>
    %132 = tpu.concatenate %130, %131 in 1 : vector<4x1xf32>, vector<4x255xf32> -> vector<4x256xf32>
    %cst_50 = arith.constant 0.000000e+00 : f32
    %133 = vector.broadcast %cst_50 : f32 to vector<4x256xf32>
    %134 = arith.select %40, %132, %133 : vector<4x256xi1>, vector<4x256xf32>
    %135 = arith.addf %128, %134 : vector<4x256xf32>
    %136 = vector.extract_strided_slice %25 {offsets = [48, 0], sizes = [4, 256], strides = [1, 1]} : vector<100x256xf32> to vector<4x256xf32>
    %137 = arith.addf %135, %136 : vector<4x256xf32>
    %138 = vector.extract_strided_slice %25 {offsets = [52, 0], sizes = [4, 256], strides = [1, 1]} : vector<100x256xf32> to vector<4x256xf32>
    %139 = vector.extract_strided_slice %138 {offsets = [0, 1], sizes = [4, 255], strides = [1, 1]} : vector<4x256xf32> to vector<4x255xf32>
    %cst_51 = arith.constant 0.000000e+00 : f32
    %140 = vector.broadcast %cst_51 : f32 to vector<4x1xf32>
    %141 = tpu.concatenate %139, %140 in 1 : vector<4x255xf32>, vector<4x1xf32> -> vector<4x256xf32>
    %cst_52 = arith.constant 0.000000e+00 : f32
    %142 = vector.broadcast %cst_52 : f32 to vector<4x256xf32>
    %143 = arith.select %47, %141, %142 : vector<4x256xi1>, vector<4x256xf32>
    %144 = arith.addf %137, %143 : vector<4x256xf32>
    %145 = vector.extract_strided_slice %25 {offsets = [56, 0], sizes = [4, 256], strides = [1, 1]} : vector<100x256xf32> to vector<4x256xf32>
    %146 = vector.extract_strided_slice %145 {offsets = [0, 2], sizes = [4, 254], strides = [1, 1]} : vector<4x256xf32> to vector<4x254xf32>
    %cst_53 = arith.constant 0.000000e+00 : f32
    %147 = vector.broadcast %cst_53 : f32 to vector<4x2xf32>
    %148 = tpu.concatenate %146, %147 in 1 : vector<4x254xf32>, vector<4x2xf32> -> vector<4x256xf32>
    %cst_54 = arith.constant 0.000000e+00 : f32
    %149 = vector.broadcast %cst_54 : f32 to vector<4x256xf32>
    %150 = arith.select %54, %148, %149 : vector<4x256xi1>, vector<4x256xf32>
    %151 = arith.addf %144, %150 : vector<4x256xf32>
    %152 = vector.extract_strided_slice %25 {offsets = [60, 0], sizes = [4, 256], strides = [1, 1]} : vector<100x256xf32> to vector<4x256xf32>
    %153 = vector.extract_strided_slice %152 {offsets = [0, 14], sizes = [4, 242], strides = [1, 1]} : vector<4x256xf32> to vector<4x242xf32>
    %cst_55 = arith.constant 0.000000e+00 : f32
    %154 = vector.broadcast %cst_55 : f32 to vector<4x14xf32>
    %155 = tpu.concatenate %153, %154 in 1 : vector<4x242xf32>, vector<4x14xf32> -> vector<4x256xf32>
    %cst_56 = arith.constant 0.000000e+00 : f32
    %156 = vector.broadcast %cst_56 : f32 to vector<4x256xf32>
    %157 = arith.select %33, %155, %156 : vector<4x256xi1>, vector<4x256xf32>
    %158 = arith.addf %151, %157 : vector<4x256xf32>
    %159 = vector.extract_strided_slice %25 {offsets = [64, 0], sizes = [4, 256], strides = [1, 1]} : vector<100x256xf32> to vector<4x256xf32>
    %160 = vector.extract_strided_slice %159 {offsets = [0, 15], sizes = [4, 241], strides = [1, 1]} : vector<4x256xf32> to vector<4x241xf32>
    %cst_57 = arith.constant 0.000000e+00 : f32
    %161 = vector.broadcast %cst_57 : f32 to vector<4x15xf32>
    %162 = tpu.concatenate %160, %161 in 1 : vector<4x241xf32>, vector<4x15xf32> -> vector<4x256xf32>
    %cst_58 = arith.constant 0.000000e+00 : f32
    %163 = vector.broadcast %cst_58 : f32 to vector<4x256xf32>
    %164 = arith.select %40, %162, %163 : vector<4x256xi1>, vector<4x256xf32>
    %165 = arith.addf %158, %164 : vector<4x256xf32>
    %166 = vector.extract_strided_slice %25 {offsets = [68, 0], sizes = [4, 256], strides = [1, 1]} : vector<100x256xf32> to vector<4x256xf32>
    %167 = vector.extract_strided_slice %166 {offsets = [0, 16], sizes = [4, 240], strides = [1, 1]} : vector<4x256xf32> to vector<4x240xf32>
    %cst_59 = arith.constant 0.000000e+00 : f32
    %168 = vector.broadcast %cst_59 : f32 to vector<4x16xf32>
    %169 = tpu.concatenate %167, %168 in 1 : vector<4x240xf32>, vector<4x16xf32> -> vector<4x256xf32>
    %170 = arith.addf %165, %169 : vector<4x256xf32>
    %171 = vector.extract_strided_slice %25 {offsets = [72, 0], sizes = [4, 256], strides = [1, 1]} : vector<100x256xf32> to vector<4x256xf32>
    %172 = vector.extract_strided_slice %171 {offsets = [0, 17], sizes = [4, 239], strides = [1, 1]} : vector<4x256xf32> to vector<4x239xf32>
    %cst_60 = arith.constant 0.000000e+00 : f32
    %173 = vector.broadcast %cst_60 : f32 to vector<4x17xf32>
    %174 = tpu.concatenate %172, %173 in 1 : vector<4x239xf32>, vector<4x17xf32> -> vector<4x256xf32>
    %cst_61 = arith.constant 0.000000e+00 : f32
    %175 = vector.broadcast %cst_61 : f32 to vector<4x256xf32>
    %176 = arith.select %47, %174, %175 : vector<4x256xi1>, vector<4x256xf32>
    %177 = arith.addf %170, %176 : vector<4x256xf32>
    %178 = vector.extract_strided_slice %25 {offsets = [76, 0], sizes = [4, 256], strides = [1, 1]} : vector<100x256xf32> to vector<4x256xf32>
    %179 = vector.extract_strided_slice %178 {offsets = [0, 18], sizes = [4, 238], strides = [1, 1]} : vector<4x256xf32> to vector<4x238xf32>
    %cst_62 = arith.constant 0.000000e+00 : f32
    %180 = vector.broadcast %cst_62 : f32 to vector<4x18xf32>
    %181 = tpu.concatenate %179, %180 in 1 : vector<4x238xf32>, vector<4x18xf32> -> vector<4x256xf32>
    %cst_63 = arith.constant 0.000000e+00 : f32
    %182 = vector.broadcast %cst_63 : f32 to vector<4x256xf32>
    %183 = arith.select %54, %181, %182 : vector<4x256xi1>, vector<4x256xf32>
    %184 = arith.addf %177, %183 : vector<4x256xf32>
    %185 = vector.extract_strided_slice %25 {offsets = [80, 0], sizes = [4, 256], strides = [1, 1]} : vector<100x256xf32> to vector<4x256xf32>
    %186 = vector.extract_strided_slice %185 {offsets = [0, 30], sizes = [4, 226], strides = [1, 1]} : vector<4x256xf32> to vector<4x226xf32>
    %cst_64 = arith.constant 0.000000e+00 : f32
    %187 = vector.broadcast %cst_64 : f32 to vector<4x30xf32>
    %188 = tpu.concatenate %186, %187 in 1 : vector<4x226xf32>, vector<4x30xf32> -> vector<4x256xf32>
    %cst_65 = arith.constant 0.000000e+00 : f32
    %189 = vector.broadcast %cst_65 : f32 to vector<4x256xf32>
    %190 = arith.select %33, %188, %189 : vector<4x256xi1>, vector<4x256xf32>
    %191 = arith.addf %184, %190 : vector<4x256xf32>
    %192 = vector.extract_strided_slice %25 {offsets = [84, 0], sizes = [4, 256], strides = [1, 1]} : vector<100x256xf32> to vector<4x256xf32>
    %193 = vector.extract_strided_slice %192 {offsets = [0, 31], sizes = [4, 225], strides = [1, 1]} : vector<4x256xf32> to vector<4x225xf32>
    %cst_66 = arith.constant 0.000000e+00 : f32
    %194 = vector.broadcast %cst_66 : f32 to vector<4x31xf32>
    %195 = tpu.concatenate %193, %194 in 1 : vector<4x225xf32>, vector<4x31xf32> -> vector<4x256xf32>
    %cst_67 = arith.constant 0.000000e+00 : f32
    %196 = vector.broadcast %cst_67 : f32 to vector<4x256xf32>
    %197 = arith.select %40, %195, %196 : vector<4x256xi1>, vector<4x256xf32>
    %198 = arith.addf %191, %197 : vector<4x256xf32>
    %199 = vector.extract_strided_slice %25 {offsets = [88, 0], sizes = [4, 256], strides = [1, 1]} : vector<100x256xf32> to vector<4x256xf32>
    %200 = vector.extract_strided_slice %199 {offsets = [0, 32], sizes = [4, 224], strides = [1, 1]} : vector<4x256xf32> to vector<4x224xf32>
    %cst_68 = arith.constant 0.000000e+00 : f32
    %201 = vector.broadcast %cst_68 : f32 to vector<4x32xf32>
    %202 = tpu.concatenate %200, %201 in 1 : vector<4x224xf32>, vector<4x32xf32> -> vector<4x256xf32>
    %203 = arith.addf %198, %202 : vector<4x256xf32>
    %204 = vector.extract_strided_slice %25 {offsets = [92, 0], sizes = [4, 256], strides = [1, 1]} : vector<100x256xf32> to vector<4x256xf32>
    %205 = vector.extract_strided_slice %204 {offsets = [0, 33], sizes = [4, 223], strides = [1, 1]} : vector<4x256xf32> to vector<4x223xf32>
    %cst_69 = arith.constant 0.000000e+00 : f32
    %206 = vector.broadcast %cst_69 : f32 to vector<4x33xf32>
    %207 = tpu.concatenate %205, %206 in 1 : vector<4x223xf32>, vector<4x33xf32> -> vector<4x256xf32>
    %cst_70 = arith.constant 0.000000e+00 : f32
    %208 = vector.broadcast %cst_70 : f32 to vector<4x256xf32>
    %209 = arith.select %47, %207, %208 : vector<4x256xi1>, vector<4x256xf32>
    %210 = arith.addf %203, %209 : vector<4x256xf32>
    %211 = vector.extract_strided_slice %25 {offsets = [96, 0], sizes = [4, 256], strides = [1, 1]} : vector<100x256xf32> to vector<4x256xf32>
    %212 = vector.extract_strided_slice %211 {offsets = [0, 34], sizes = [4, 222], strides = [1, 1]} : vector<4x256xf32> to vector<4x222xf32>
    %cst_71 = arith.constant 0.000000e+00 : f32
    %213 = vector.broadcast %cst_71 : f32 to vector<4x34xf32>
    %214 = tpu.concatenate %212, %213 in 1 : vector<4x222xf32>, vector<4x34xf32> -> vector<4x256xf32>
    %cst_72 = arith.constant 0.000000e+00 : f32
    %215 = vector.broadcast %cst_72 : f32 to vector<4x256xf32>
    %216 = arith.select %54, %214, %215 : vector<4x256xi1>, vector<4x256xf32>
    %217 = arith.addf %210, %216 : vector<4x256xf32>
    %c0_73 = arith.constant 0 : index
    %c0_74 = arith.constant 0 : index
    %218 = vector.load %arg10[%c0_73, %c0_74] : memref<4x1xf32, #tpu.memory_space<vmem>>, vector<4x1xf32>
    %219 = vector.broadcast %218 : vector<4x1xf32> to vector<4x256xf32>
    %220 = arith.addf %217, %219 : vector<4x256xf32>
    %c0_75 = arith.constant 0 : index
    %c0_76 = arith.constant 0 : index
    %c0_77 = arith.constant 0 : index
    %221 = vector.load %arg11[%c0_75, %c0_76, %c0_77] : memref<1x4x256xf32, #tpu.memory_space<vmem>>, vector<1x4x256xf32>
    %222 = vector.shape_cast %221 : vector<1x4x256xf32> to vector<4x256xf32>
    %223 = vector.shape_cast %220 : vector<4x256xf32> to vector<1x4x256xf32>
    tpu.vector_store %arg11[%c0_75, %c0_76, %c0_77], %223 {strides = array<i32>} : memref<1x4x256xf32, #tpu.memory_space<vmem>>, vector<1x4x256xf32>,
    return
  }
  func.func @transform_0(%arg0: i32) -> (i32, i32, i32) {
    %c0_i32 = arith.constant 0 : i32
    %c0_i32_0 = arith.constant 0 : i32
    %c0_i32_1 = arith.constant 0 : i32
    return %arg0, %c0_i32, %c0_i32_0 : i32, i32, i32
  }
  func.func @transform_1(%arg0: i32) -> (i32, i32) {
    %c0_i32 = arith.constant 0 : i32
    %c0_i32_0 = arith.constant 0 : i32
    %c0_i32_1 = arith.constant 0 : i32
    return %c0_i32, %c0_i32_0 : i32, i32
  }
  func.func @transform_2(%arg0: i32) -> (i32, i32) {
    %c0_i32 = arith.constant 0 : i32
    %c0_i32_0 = arith.constant 0 : i32
    %c0_i32_1 = arith.constant 0 : i32
    return %c0_i32, %c0_i32_0 : i32, i32
  }
  func.func @transform_3(%arg0: i32) -> (i32, i32) {
    %c0_i32 = arith.constant 0 : i32
    %c0_i32_0 = arith.constant 0 : i32
    %c0_i32_1 = arith.constant 0 : i32
    return %c0_i32, %c0_i32_0 : i32, i32
  }
  func.func @transform_4(%arg0: i32) -> (i32, i32) {
    %c0_i32 = arith.constant 0 : i32
    %c0_i32_0 = arith.constant 0 : i32
    %c0_i32_1 = arith.constant 0 : i32
    return %c0_i32, %c0_i32_0 : i32, i32
  }
  func.func @transform_5(%arg0: i32) -> (i32, i32) {
    %c0_i32 = arith.constant 0 : i32
    %c0_i32_0 = arith.constant 0 : i32
    %c0_i32_1 = arith.constant 0 : i32
    return %c0_i32, %c0_i32_0 : i32, i32
  }
  func.func @transform_6(%arg0: i32) -> (i32, i32) {
    %c0_i32 = arith.constant 0 : i32
    %c0_i32_0 = arith.constant 0 : i32
    %c0_i32_1 = arith.constant 0 : i32
    return %c0_i32, %c0_i32_0 : i32, i32
  }
  func.func @transform_7(%arg0: i32) -> (i32, i32) {
    %c0_i32 = arith.constant 0 : i32
    %c0_i32_0 = arith.constant 0 : i32
    %c0_i32_1 = arith.constant 0 : i32
    return %c0_i32, %c0_i32_0 : i32, i32
  }
  func.func @transform_8(%arg0: i32) -> (i32, i32) {
    %c0_i32 = arith.constant 0 : i32
    %c0_i32_0 = arith.constant 0 : i32
    %c0_i32_1 = arith.constant 0 : i32
    return %c0_i32, %c0_i32_0 : i32, i32
  }
  func.func @transform_9(%arg0: i32) -> (i32, i32) {
    %c0_i32 = arith.constant 0 : i32
    %c0_i32_0 = arith.constant 0 : i32
    %c0_i32_1 = arith.constant 0 : i32
    return %c0_i32, %c0_i32_0 : i32, i32
  }
  func.func @transform_10(%arg0: i32) -> (i32, i32, i32) {
    %c0_i32 = arith.constant 0 : i32
    %c0_i32_0 = arith.constant 0 : i32
    %c0_i32_1 = arith.constant 0 : i32
    return %arg0, %c0_i32, %c0_i32_0 : i32, i32, i32
  }
}

</mosaic_0001>

<llo_original>
// kernel: _lambda_.1
$region0: #{_lambda_.1}
  #allocation0 [shape = 'u32[]', space=smem, size = 0x4, offset = 0x4, fixed_abs, tag = 'smem constant byte address 0x4 - core index']
  #allocation1 [shape = 'u32[144,128]{1,0:T(1,128)}', space=vmem, size = 0x12000, scoped, tag = 'internal scratch']
  #allocation2 [shape = 'f32[1,1]{1,0:T(1,128)S(6)}', space=smem, size = 0x200, scoped, tag = 'scoped memory for _lambda_.1']
  #allocation3 [shape = 'f32[1,1]{1,0:T(1,128)S(6)}', space=smem, size = 0x200, scoped, tag = 'scoped memory for _lambda_.1']
  %s0 = inlined_call_operand.vmem [shape: f32[2,81,256], index: 0, kind: input, shape index: {}]
  %s1 = inlined_call_operand.vmem [shape: s32[4,256], index: 1, kind: input, shape index: {}]
  %s2 = inlined_call_operand.vmem [shape: f32[64,81], index: 2, kind: input, shape index: {}]
  %s3 = inlined_call_operand.vmem [shape: f32[64,1], index: 3, kind: input, shape index: {}]
  %s4 = inlined_call_operand.<no memory space> [shape: f32[1,1], index: 4, kind: input, shape index: {}]
  %s5 = inlined_call_operand.vmem [shape: f32[32,64], index: 5, kind: input, shape index: {}]
  %s6 = inlined_call_operand.vmem [shape: f32[32,1], index: 6, kind: input, shape index: {}]
  %s7 = inlined_call_operand.<no memory space> [shape: f32[1,1], index: 7, kind: input, shape index: {}]
  %s8 = inlined_call_operand.vmem [shape: f32[100,32], index: 8, kind: input, shape index: {}]
  %s9 = inlined_call_operand.vmem [shape: f32[4,1], index: 9, kind: input, shape index: {}]
  %s10 = inlined_call_operand.vmem [shape: f32[2,4,256], index: 10, kind: output, shape index: {}]
  %s11 = sld [smem:[#allocation0]]
  $region73: #{_lambda_.1} parent=0
    _
  %s13 = ssub.s32 1, %s11
  %s14 = scalar_select 0, %s13, %s11
  %15 = sst [smem:[#allocation2]] %s4
  %16 = sst [smem:[#allocation3]] %s7
  loop: start=0, step=1, limit=4
  $region2: #{_lambda_.1} parent=0 // loop_pre_header
    _
  $region3: #{_lambda_.1} parent=0 // loop_header
    %s18 = sphi 0, %s22
    %p19 = scmp.ge.s32.totalorder %s18, 4
    %s28 = sphi 0, %s30
    %s31 = sphi 0, %s28
    %s32 = sphi 0, %s31
    %s48 = sphi 0, %s32
    %s52 = sphi 0, %s52
    %s54 = sphi 0, %s52
    %s55 = sphi 0, %s54
    %s69 = sphi 0, %s55
    %s73 = sphi 0, %s73
    %s75 = sphi 0, %s73
    %s76 = sphi 0, %s75
    %s90 = sphi 0, %s76
    %s94 = sphi 0, %s94
    %s96 = sphi 0, %s94
    %s97 = sphi 0, %s96
    %s111 = sphi 0, %s97
    %s115 = sphi 0, %s115
    %s117 = sphi 0, %s115
    %s118 = sphi 0, %s117
    %s132 = sphi 0, %s118
    %s136 = sphi 0, %s136
    %s138 = sphi 0, %s136
    %s139 = sphi 0, %s138
    %s153 = sphi 0, %s139
    %s157 = sphi 0, %s157
    %s159 = sphi 0, %s157
    %s160 = sphi 0, %s159
    %s174 = sphi 0, %s160
    %s178 = sphi 0, %s178
    %s180 = sphi 0, %s178
    %s181 = sphi 0, %s180
    %s195 = sphi 0, %s181
    %s199 = sphi 0, %s199
    %s201 = sphi 0, %s199
    %s202 = sphi 0, %s201
    %s216 = sphi 0, %s202
    %s220 = sphi 0, %s220
    %s222 = sphi 0, %s220
    %s223 = sphi 0, %s222
    %s237 = sphi 0, %s223
    %s243 = sphi 0, %s245
    %s246 = sphi 0, %s243
    %s247 = sphi 0, %s246
    %s263 = sphi 0, %s247
  $region4: #{_lambda_.1} parent=0 // loop_header_branch
    %21 = sbr.rel (%p19) target = $region8
  $region5: #{_lambda_.1} parent=0 // loop_body
    %s23 = ssub.s32 %s18, 1
    %s24 = ssub.s32 %s18, 2
    %s25 = sadd.s32 %s18, 1
    %s26 = ssub.s32 %s18, %s25
    %p27 = scmp.eq.s32.totalorder %s26, 0
    %s29 = sadd.s32 %s28, 1
    %s30 = scalar_select %p27, %s28, %s29
    %p33 = pneg %p27
    %p34 = scmp.eq.s32.totalorder %s18, 1
    %p35 = por %p33, %p34
    %p36 = scmp.ne.s32.totalorder %s28, %s31
    %p37 = scmp.eq.s32.totalorder %s18, 0
    %p38 = por %p36, %p37
    %p39 = scmp.ne.s32.totalorder %s28, %s31
    %p40 = scmp.eq.s32.totalorder %s23, 1
    %p41 = por %p39, %p40
    %p42 = scmp.ne.s32.totalorder %s31, %s32
    %p43 = scmp.eq.s32.totalorder %s23, 0
    %p44 = por %p42, %p43
    %p45 = scmp.ne.s32.totalorder %s31, %s32
    %p46 = scmp.eq.s32.totalorder %s24, 1
    %p47 = por %p45, %p46
    %p49 = scmp.ne.s32.totalorder %s32, %s48
    %p50 = scmp.eq.s32.totalorder %s24, 0
    %p51 = por %p49, %p50
    %s53 = sadd.s32 %s52, 1
    %p56 = scmp.eq.s32.totalorder %s18, 1
    %p57 = scmp.ne.s32.totalorder %s52, %s54
    %p58 = scmp.eq.s32.totalorder %s18, 0
    %p59 = por %p57, %p58
    %p60 = scmp.ne.s32.totalorder %s52, %s54
    %p61 = scmp.eq.s32.totalorder %s23, 1
    %p62 = por %p60, %p61
    %p63 = scmp.ne.s32.totalorder %s54, %s55
    %p64 = scmp.eq.s32.totalorder %s23, 0
    %p65 = por %p63, %p64
    %p66 = scmp.ne.s32.totalorder %s54, %s55
    %p67 = scmp.eq.s32.totalorder %s24, 1
    %p68 = por %p66, %p67
    %p70 = scmp.ne.s32.totalorder %s55, %s69
    %p71 = scmp.eq.s32.totalorder %s24, 0
    %p72 = por %p70, %p71
    %s74 = sadd.s32 %s73, 1
    %p77 = scmp.eq.s32.totalorder %s18, 1
    %p78 = scmp.ne.s32.totalorder %s73, %s75
    %p79 = scmp.eq.s32.totalorder %s18, 0
    %p80 = por %p78, %p79
    %p81 = scmp.ne.s32.totalorder %s73, %s75
    %p82 = scmp.eq.s32.totalorder %s23, 1
    %p83 = por %p81, %p82
    %p84 = scmp.ne.s32.totalorder %s75, %s76
    %p85 = scmp.eq.s32.totalorder %s23, 0
    %p86 = por %p84, %p85
    %p87 = scmp.ne.s32.totalorder %s75, %s76
    %p88 = scmp.eq.s32.totalorder %s24, 1
    %p89 = por %p87, %p88
    %p91 = scmp.ne.s32.totalorder %s76, %s90
    %p92 = scmp.eq.s32.totalorder %s24, 0
    %p93 = por %p91, %p92
    %s95 = sadd.s32 %s94, 1
    %p98 = scmp.eq.s32.totalorder %s18, 1
    %p99 = scmp.ne.s32.totalorder %s94, %s96
    %p100 = scmp.eq.s32.totalorder %s18, 0
    %p101 = por %p99, %p100
    %p102 = scmp.ne.s32.totalorder %s94, %s96
    %p103 = scmp.eq.s32.totalorder %s23, 1
    %p104 = por %p102, %p103
    %p105 = scmp.ne.s32.totalorder %s96, %s97
    %p106 = scmp.eq.s32.totalorder %s23, 0
    %p107 = por %p105, %p106
    %p108 = scmp.ne.s32.totalorder %s96, %s97
    %p109 = scmp.eq.s32.totalorder %s24, 1
    %p110 = por %p108, %p109
    %p112 = scmp.ne.s32.totalorder %s97, %s111
    %p113 = scmp.eq.s32.totalorder %s24, 0
    %p114 = por %p112, %p113
    %s116 = sadd.s32 %s115, 1
    %p119 = scmp.eq.s32.totalorder %s18, 1
    %p120 = scmp.ne.s32.totalorder %s115, %s117
    %p121 = scmp.eq.s32.totalorder %s18, 0
    %p122 = por %p120, %p121
    %p123 = scmp.ne.s32.totalorder %s115, %s117
    %p124 = scmp.eq.s32.totalorder %s23, 1
    %p125 = por %p123, %p124
    %p126 = scmp.ne.s32.totalorder %s117, %s118
    %p127 = scmp.eq.s32.totalorder %s23, 0
    %p128 = por %p126, %p127
    %p129 = scmp.ne.s32.totalorder %s117, %s118
    %p130 = scmp.eq.s32.totalorder %s24, 1
    %p131 = por %p129, %p130
    %p133 = scmp.ne.s32.totalorder %s118, %s132
    %p134 = scmp.eq.s32.totalorder %s24, 0
    %p135 = por %p133, %p134
    %s137 = sadd.s32 %s136, 1
    %p140 = scmp.eq.s32.totalorder %s18, 1
    %p141 = scmp.ne.s32.totalorder %s136, %s138
    %p142 = scmp.eq.s32.totalorder %s18, 0
    %p143 = por %p141, %p142
    %p144 = scmp.ne.s32.totalorder %s136, %s138
    %p145 = scmp.eq.s32.totalorder %s23, 1
    %p146 = por %p144, %p145
    %p147 = scmp.ne.s32.totalorder %s138, %s139
    %p148 = scmp.eq.s32.totalorder %s23, 0
    %p149 = por %p147, %p148
    %p150 = scmp.ne.s32.totalorder %s138, %s139
    %p151 = scmp.eq.s32.totalorder %s24, 1
    %p152 = por %p150, %p151
    %p154 = scmp.ne.s32.totalorder %s139, %s153
    %p155 = scmp.eq.s32.totalorder %s24, 0
    %p156 = por %p154, %p155
    %s158 = sadd.s32 %s157, 1
    %p161 = scmp.eq.s32.totalorder %s18, 1
    %p162 = scmp.ne.s32.totalorder %s157, %s159
    %p163 = scmp.eq.s32.totalorder %s18, 0
    %p164 = por %p162, %p163
    %p165 = scmp.ne.s32.totalorder %s157, %s159
    %p166 = scmp.eq.s32.totalorder %s23, 1
    %p167 = por %p165, %p166
    %p168 = scmp.ne.s32.totalorder %s159, %s160
    %p169 = scmp.eq.s32.totalorder %s23, 0
    %p170 = por %p168, %p169
    %p171 = scmp.ne.s32.totalorder %s159, %s160
    %p172 = scmp.eq.s32.totalorder %s24, 1
    %p173 = por %p171, %p172
    %p175 = scmp.ne.s32.totalorder %s160, %s174
    %p176 = scmp.eq.s32.totalorder %s24, 0
    %p177 = por %p175, %p176
    %s179 = sadd.s32 %s178, 1
    %p182 = scmp.eq.s32.totalorder %s18, 1
    %p183 = scmp.ne.s32.totalorder %s178, %s180
    %p184 = scmp.eq.s32.totalorder %s18, 0
    %p185 = por %p183, %p184
    %p186 = scmp.ne.s32.totalorder %s178, %s180
    %p187 = scmp.eq.s32.totalorder %s23, 1
    %p188 = por %p186, %p187
    %p189 = scmp.ne.s32.totalorder %s180, %s181
    %p190 = scmp.eq.s32.totalorder %s23, 0
    %p191 = por %p189, %p190
    %p192 = scmp.ne.s32.totalorder %s180, %s181
    %p193 = scmp.eq.s32.totalorder %s24, 1
    %p194 = por %p192, %p193
    %p196 = scmp.ne.s32.totalorder %s181, %s195
    %p197 = scmp.eq.s32.totalorder %s24, 0
    %p198 = por %p196, %p197
    %s200 = sadd.s32 %s199, 1
    %p203 = scmp.eq.s32.totalorder %s18, 1
    %p204 = scmp.ne.s32.totalorder %s199, %s201
    %p205 = scmp.eq.s32.totalorder %s18, 0
    %p206 = por %p204, %p205
    %p207 = scmp.ne.s32.totalorder %s199, %s201
    %p208 = scmp.eq.s32.totalorder %s23, 1
    %p209 = por %p207, %p208
    %p210 = scmp.ne.s32.totalorder %s201, %s202
    %p211 = scmp.eq.s32.totalorder %s23, 0
    %p212 = por %p210, %p211
    %p213 = scmp.ne.s32.totalorder %s201, %s202
    %p214 = scmp.eq.s32.totalorder %s24, 1
    %p215 = por %p213, %p214
    %p217 = scmp.ne.s32.totalorder %s202, %s216
    %p218 = scmp.eq.s32.totalorder %s24, 0
    %p219 = por %p217, %p218
    %s221 = sadd.s32 %s220, 1
    %p224 = scmp.eq.s32.totalorder %s18, 1
    %p225 = scmp.ne.s32.totalorder %s220, %s222
    %p226 = scmp.eq.s32.totalorder %s18, 0
    %p227 = por %p225, %p226
    %p228 = scmp.ne.s32.totalorder %s220, %s222
    %p229 = scmp.eq.s32.totalorder %s23, 1
    %p230 = por %p228, %p229
    %p231 = scmp.ne.s32.totalorder %s222, %s223
    %p232 = scmp.eq.s32.totalorder %s23, 0
    %p233 = por %p231, %p232
    %p234 = scmp.ne.s32.totalorder %s222, %s223
    %p235 = scmp.eq.s32.totalorder %s24, 1
    %p236 = por %p234, %p235
    %p238 = scmp.ne.s32.totalorder %s223, %s237
    %p239 = scmp.eq.s32.totalorder %s24, 0
    %p240 = por %p238, %p239
    %s241 = ssub.s32 %s18, %s25
    %p242 = scmp.eq.s32.totalorder %s241, 0
    %s244 = sadd.s32 %s243, 1
    %s245 = scalar_select %p242, %s243, %s244
    %p248 = pneg %p242
    %p249 = scmp.eq.s32.totalorder %s18, 1
    %p250 = por %p248, %p249
    %p251 = scmp.ne.s32.totalorder %s243, %s246
    %p252 = scmp.eq.s32.totalorder %s18, 0
    %p253 = por %p251, %p252
    %p254 = scmp.ne.s32.totalorder %s243, %s246
    %p255 = scmp.eq.s32.totalorder %s23, 1
    %p256 = por %p254, %p255
    %p257 = scmp.ne.s32.totalorder %s246, %s247
    %p258 = scmp.eq.s32.totalorder %s23, 0
    %p259 = por %p257, %p258
    %p260 = scmp.ne.s32.totalorder %s246, %s247
    %p261 = scmp.eq.s32.totalorder %s24, 1
    %p262 = por %p260, %p261
    %p264 = scmp.ne.s32.totalorder %s247, %s263
    %p265 = scmp.eq.s32.totalorder %s24, 0
    %p266 = por %p264, %p265
    %p267 = scmp.le.s32.totalorder 1, %s18
    %p268 = scmp.lt.s32.totalorder %s18, 3
    %p269 = pnand %p267, %p268
    %p270 = pneg %p269
    // Predicated region
    $region9: #{_lambda_.1} parent=5 // pred_check
      _
    $region10: #{_lambda_.1} parent=5 // pred_check_branch
      %272 = sbr.rel (%p269) target = $region12
    $region11: #{_lambda_.1} parent=5 // pred_region
      %s273 = ssub.s32 %s18, 1
      // Predicated region
      $region13: #{_lambda_.1} parent=11 // pred_check
        %p274 = pneg %p65
      $region14: #{_lambda_.1} parent=11 // pred_check_branch
        %276 = sbr.rel (%p274) target = $region16
      $region15: #{_lambda_.1} parent=11 // pred_region
        _
      $region16: #{_lambda_.1} parent=11 // pred_fallthru
        _
      // Predicated region
      $region17: #{_lambda_.1} parent=11 // pred_check
        %p277 = pneg %p86
      $region18: #{_lambda_.1} parent=11 // pred_check_branch
        %279 = sbr.rel (%p277) target = $region20
      $region19: #{_lambda_.1} parent=11 // pred_region
        _
      $region20: #{_lambda_.1} parent=11 // pred_fallthru
        _
      // Predicated region
      $region21: #{_lambda_.1} parent=11 // pred_check
        %p280 = pneg %p107
      $region22: #{_lambda_.1} parent=11 // pred_check_branch
        %282 = sbr.rel (%p280) target = $region24
      $region23: #{_lambda_.1} parent=11 // pred_region
        _
      $region24: #{_lambda_.1} parent=11 // pred_fallthru
        _
      // Predicated region
      $region25: #{_lambda_.1} parent=11 // pred_check
        %p283 = pneg %p128
      $region26: #{_lambda_.1} parent=11 // pred_check_branch
        %285 = sbr.rel (%p283) target = $region28
      $region27: #{_lambda_.1} parent=11 // pred_region
        _
      $region28: #{_lambda_.1} parent=11 // pred_fallthru
        _
      // Predicated region
      $region29: #{_lambda_.1} parent=11 // pred_check
        %p286 = pneg %p149
      $region30: #{_lambda_.1} parent=11 // pred_check_branch
        %288 = sbr.rel (%p286) target = $region32
      $region31: #{_lambda_.1} parent=11 // pred_region
        _
      $region32: #{_lambda_.1} parent=11 // pred_fallthru
        _
      // Predicated region
      $region33: #{_lambda_.1} parent=11 // pred_check
        %p289 = pneg %p170
      $region34: #{_lambda_.1} parent=11 // pred_check_branch
        %291 = sbr.rel (%p289) target = $region36
      $region35: #{_lambda_.1} parent=11 // pred_region
        _
      $region36: #{_lambda_.1} parent=11 // pred_fallthru
        _
      // Predicated region
      $region37: #{_lambda_.1} parent=11 // pred_check
        %p292 = pneg %p191
      $region38: #{_lambda_.1} parent=11 // pred_check_branch
        %294 = sbr.rel (%p292) target = $region40
      $region39: #{_lambda_.1} parent=11 // pred_region
        _
      $region40: #{_lambda_.1} parent=11 // pred_fallthru
        _
      // Predicated region
      $region41: #{_lambda_.1} parent=11 // pred_check
        %p295 = pneg %p212
      $region42: #{_lambda_.1} parent=11 // pred_check_branch
        %297 = sbr.rel (%p295) target = $region44
      $region43: #{_lambda_.1} parent=11 // pred_region
        _
      $region44: #{_lambda_.1} parent=11 // pred_fallthru
        _
      // Predicated region
      $region45: #{_lambda_.1} parent=11 // pred_check
        %p298 = pneg %p233
      $region46: #{_lambda_.1} parent=11 // pred_check_branch
        %300 = sbr.rel (%p298) target = $region48
      $region47: #{_lambda_.1} parent=11 // pred_region
        _
      $region48: #{_lambda_.1} parent=11 // pred_fallthru
        _
    $region12: #{_lambda_.1} parent=5 // pred_fallthru
      _
    %p301 = scmp.lt.s32.totalorder %s18, 2
    // Predicated region
    $region49: #{_lambda_.1} parent=5 // pred_check
      %p302 = pneg %p301
    $region50: #{_lambda_.1} parent=5 // pred_check_branch
      %304 = sbr.rel (%p302) target = $region52
    $region51: #{_lambda_.1} parent=5 // pred_region
      // Predicated region
      $region53: #{_lambda_.1} parent=51 // pred_check
        %p305 = pneg %p38
      $region54: #{_lambda_.1} parent=51 // pred_check_branch
        %307 = sbr.rel (%p305) target = $region56
      $region55: #{_lambda_.1} parent=51 // pred_region
        %p308 = scmp.lt.s32.totalorder %s18, 1
        %s309 = scalar_select %p308, %s18, 1
        %s310 = smul.addr %s309, 22
        %s311 = smul.addr %s310, 8
        %s312 = scalar_lea.vmem %s0, %s311
      $region56: #{_lambda_.1} parent=51 // pred_fallthru
        _
    $region52: #{_lambda_.1} parent=5 // pred_fallthru
      _
    %p313 = scmp.le.s32.totalorder 1, %s18
    %p314 = scmp.lt.s32.totalorder %s18, 3
    %p315 = pnand %p313, %p314
    %p316 = pneg %p315
    // Predicated region
    $region57: #{_lambda_.1} parent=5 // pred_check
      _
    $region58: #{_lambda_.1} parent=5 // pred_check_branch
      %318 = sbr.rel (%p315) target = $region60
    $region59: #{_lambda_.1} parent=5 // pred_region
      %s319 = ssub.s32 %s18, 1
      %p320 = scmp.lt.s32.totalorder %s23, 1
      %s321 = scalar_select %p320, %s23, 1
      %s322 = smul.addr %s321, 22
      %s323 = smul.addr %s322, 8
      %s324 = scalar_lea.vmem %s0, %s323
      %p325 = pneg %p44
      %p326 = pneg %p41
      %p327 = pneg %p65
      %p328 = pneg %p62
      %p329 = pneg %p86
      %p330 = pneg %p83
      %p331 = pneg %p107
      %p332 = pneg %p104
      %p333 = pneg %p128
      %p334 = pneg %p125
      %p335 = pneg %p149
      %p336 = pneg %p146
      %p337 = pneg %p170
      %p338 = pneg %p167
      %p339 = pneg %p191
      %p340 = pneg %p188
      %p341 = pneg %p212
      %p342 = pneg %p209
      %p343 = pneg %p233
      %p344 = pneg %p230
      %p345 = pneg %p259
      %p346 = pneg %p256
      %p347 = scmp.lt.s32.totalorder %s23, 1
      %s348 = scalar_select %p347, %s23, 1
      %s349 = smul.addr %s348, 2
      %s350 = smul.addr %s349, 4
      %s351 = scalar_lea.vmem %s10, %s350
      %p352 = scmp.lt.s32.totalorder %s23, 1
      %s353 = scalar_select %p352, %s23, 1
      %s354 = smul.addr %s353, 22
      %s355 = smul.addr %s354, 8
      %s356 = scalar_lea.vmem %s0, %s355
      %p357 = scmp.lt.s32.totalorder %s23, 1
      %s358 = scalar_select %p357, %s23, 1
      %s359 = smul.addr %s358, 2
      %s360 = smul.addr %s359, 4
      %s361 = scalar_lea.vmem %s10, %s360
      %v362 = vld [vmem:[%s2] sm:$0xff]
      %v363 = vld [vmem:[%s2 + $0x8] sm:$0xff]
      %v364 = vld [vmem:[%s2 + $0x10] sm:$0xff]
      %v365 = vld [vmem:[%s2 + $0x18] sm:$0xff]
      %v366 = vld [vmem:[%s2 + $0x20] sm:$0xff]
      %v367 = vld [vmem:[%s2 + $0x28] sm:$0xff]
      %v368 = vld [vmem:[%s2 + $0x30] sm:$0xff]
      %v369 = vld [vmem:[%s2 + $0x38] sm:$0xff]
      %v370 = vld [vmem:[%s356] sm:$0xff]
      %v371 = vld [vmem:[%s356 + $0x8] sm:$0xff]
      %v372 = vld [vmem:[%s356 + $0x10] sm:$0xff]
      %v373 = vld [vmem:[%s356 + $0x18] sm:$0xff]
      %v374 = vld [vmem:[%s356 + $0x20] sm:$0xff]
      %v375 = vld [vmem:[%s356 + $0x28] sm:$0xff]
      %v376 = vld [vmem:[%s356 + $0x30] sm:$0xff]
      %v377 = vld [vmem:[%s356 + $0x38] sm:$0xff]
      %v378 = vld [vmem:[%s356 + $0x40] sm:$0xff]
      %v379 = vld [vmem:[%s356 + $0x48] sm:$0xff]
      %v380 = vld [vmem:[%s356 + $0x50] sm:$0xff]
      %v381 = vld [vmem:[%s356 + $0x58] sm:$0xff]
      %v382 = vld [vmem:[%s356 + $0x60] sm:$0xff]
      %v383 = vld [vmem:[%s356 + $0x68] sm:$0xff]
      %v384 = vld [vmem:[%s356 + $0x70] sm:$0xff]
      %v385 = vld [vmem:[%s356 + $0x78] sm:$0xff]
      %v386 = vld [vmem:[%s356 + $0x80] sm:$0xff]
      %v387 = vld [vmem:[%s356 + $0x88] sm:$0xff]
      %v388 = vld [vmem:[%s356 + $0x90] sm:$0xff]
      %v389 = vld [vmem:[%s356 + $0x98] sm:$0xff]
      %v390 = vld [vmem:[%s356 + $0xa0] sm:$0x1]
      %v391 = vld [vmem:[%s356 + $0xa8] sm:$0x1]
      %v392 = vld [vmem:[%s3] sm:$0xff]
      %v393 = vld [vmem:[%s3 + $0x8] sm:$0xff]
      %v394 = vld [vmem:[%s3 + $0x10] sm:$0xff]
      %v395 = vld [vmem:[%s3 + $0x18] sm:$0xff]
      %v396 = vld [vmem:[%s3 + $0x20] sm:$0xff]
      %v397 = vld [vmem:[%s3 + $0x28] sm:$0xff]
      %v398 = vld [vmem:[%s3 + $0x30] sm:$0xff]
      %v399 = vld [vmem:[%s3 + $0x38] sm:$0xff]
      %401 = vset.pattern.permute.xlu0 0
      %402 = vperm.xlu0 %401, %v392
      %v403 = vpop.permute.xlu0 %402
      %406 = vset.pattern.permute.xlu0 0
      %407 = vperm.xlu0 %406, %v393
      %v408 = vpop.permute.xlu0 %407
      %411 = vset.pattern.permute.xlu0 0
      %412 = vperm.xlu0 %411, %v394
      %v413 = vpop.permute.xlu0 %412
      %416 = vset.pattern.permute.xlu0 0
      %417 = vperm.xlu0 %416, %v395
      %v418 = vpop.permute.xlu0 %417
      %421 = vset.pattern.permute.xlu0 0
      %422 = vperm.xlu0 %421, %v396
      %v423 = vpop.permute.xlu0 %422
      %426 = vset.pattern.permute.xlu0 0
      %427 = vperm.xlu0 %426, %v397
      %v428 = vpop.permute.xlu0 %427
      %431 = vset.pattern.permute.xlu0 0
      %432 = vperm.xlu0 %431, %v398
      %v433 = vpop.permute.xlu0 %432
      %436 = vset.pattern.permute.xlu0 0
      %437 = vperm.xlu0 %436, %v399
      %v438 = vpop.permute.xlu0 %437
      %vm440 = vcmask 662528
      %v442 = vsel %vm440, %v362, 0
      %v445 = vsel %vm440, %v363, 0
      %v448 = vsel %vm440, %v364, 0
      %v451 = vsel %vm440, %v365, 0
      %v454 = vsel %vm440, %v366, 0
      %v457 = vsel %vm440, %v367, 0
      %v460 = vsel %vm440, %v368, 0
      %v463 = vsel %vm440, %v369, 0
      %vm465 = vcmask 1040384
      %v467 = vsel %vm465, %v390, 0
      %v470 = vsel %vm465, %v391, 0
      %v472 = vand.u32 %v371, 4294901760
      %473 = vmatprep.subr.mxu0 %v472
      %v474 = vand.u32 %v370, 4294901760
      %475 = vmatpush1.msra.mxu0 %v474
      %v476 = vand.u32 %v373, 4294901760
      %477 = vmatprep.subr.mxu0 %v476
      %v478 = vand.u32 %v372, 4294901760
      %479 = vmatpush1.msra.mxu0 %v478
      %v480 = vand.u32 %v375, 4294901760
      %481 = vmatprep.subr.mxu0 %v480
      %v482 = vand.u32 %v374, 4294901760
      %483 = vmatpush1.msra.mxu0 %v482
      %v484 = vand.u32 %v377, 4294901760
      %485 = vmatprep.subr.mxu0 %v484
      %v486 = vand.u32 %v376, 4294901760
      %487 = vmatpush1.msra.mxu0 %v486
      %v488 = vand.u32 %v379, 4294901760
      %489 = vmatprep.subr.mxu0 %v488
      %v490 = vand.u32 %v378, 4294901760
      %491 = vmatpush1.msra.mxu0 %v490
      %v492 = vand.u32 %v381, 4294901760
      %493 = vmatprep.subr.mxu0 %v492
      %v494 = vand.u32 %v380, 4294901760
      %495 = vmatpush1.msra.mxu0 %v494
      %v496 = vand.u32 %v383, 4294901760
      %497 = vmatprep.subr.mxu0 %v496
      %v498 = vand.u32 %v382, 4294901760
      %499 = vmatpush1.msra.mxu0 %v498
      %v500 = vand.u32 %v385, 4294901760
      %501 = vmatprep.subr.mxu0 %v500
      %v502 = vand.u32 %v384, 4294901760
      %503 = vmatpush1.msra.mxu0 %v502
      %v504 = vand.u32 %v387, 4294901760
      %505 = vmatprep.subr.mxu0 %v504
      %v506 = vand.u32 %v386, 4294901760
      %507 = vmatpush1.msra.mxu0 %v506
      %v508 = vand.u32 %v389, 4294901760
      %509 = vmatprep.subr.mxu0 %v508
      %v510 = vand.u32 %v388, 4294901760
      %511 = vmatpush1.msra.mxu0 %v510
      %v512 = vand.u32 %v470, 4294901760
      %513 = vmatprep.subr.mxu0 %v512
      %v514 = vand.u32 %v467, 4294901760
      %515 = vmatpush1.msra.mxu0 %v514
      %516 = vmatprep.subr.mxu0 0.0
      %517 = vmatpush1.msra.mxu0 0.0
      %518 = vmatprep.subr.mxu0 0.0
      %519 = vmatpush1.msra.mxu0 0.0
      %520 = vmatprep.subr.mxu0 0.0
      %521 = vmatpush1.msra.mxu0 0.0
      %522 = vmatprep.subr.mxu0 0.0
      %523 = vmatpush1.msra.mxu0 0.0
      %524 = vmatprep.subr.mxu0 0.0
      %525 = vmatpush1.msra.mxu0 0.0
      %526 = vmatprep.subr.mxu0 0.0
      %527 = vmatpush1.msra.mxu0 0.0
      %528 = vmatprep.subr.mxu0 0.0
      %529 = vmatpush1.msra.mxu0 0.0
      %530 = vmatprep.subr.mxu0 0.0
      %531 = vmatpush1.msra.mxu0 0.0
      %532 = vmatprep.subr.mxu0 0.0
      %533 = vmatpush1.msra.mxu0 0.0
      %534 = vmatprep.subr.mxu0 0.0
      %535 = vmatpush1.msra.mxu0 0.0
      %536 = vmatprep.subr.mxu0 0.0
      %537 = vmatpush1.msra.mxu0 0.0
      %538 = vmatprep.subr.mxu0 0.0
      %539 = vmatpush1.msra.mxu0 0.0
      %540 = vmatprep.subr.mxu0 0.0
      %541 = vmatpush1.msra.mxu0 0.0
      %542 = vmatprep.subr.mxu0 0.0
      %543 = vmatpush1.msra.mxu0 0.0
      %544 = vmatprep.subr.mxu0 0.0
      %545 = vmatpush1.msra.mxu0 0.0
      %546 = vmatprep.subr.mxu0 0.0
      %547 = vmatpush1.msra.mxu0 0.0
      %548 = vmatprep.subr.mxu0 0.0
      %549 = vmatpush1.msra.mxu0 0.0
      %550 = vmatprep.subr.mxu0 0.0
      %551 = vmatpush1.msra.mxu0 0.0
      %552 = vmatprep.subr.mxu0 0.0
      %553 = vmatpush1.msra.mxu0 0.0
      %554 = vmatprep.subr.mxu0 0.0
      %555 = vmatpush1.msra.mxu0 0.0
      %556 = vmatprep.subr.mxu0 0.0
      %557 = vmatpush1.msra.mxu0 0.0
      %558 = vmatprep.mubr.f32.mxu0 0.0
      %v559 = vand.u32 %v442, 4294901760
      %v560 = vsub.f32 %v442, %v559
      %v561 = vand.u32 %v560, 4294901760
      %v562 = vsub.f32 %v560, %v561
      %v563 = vand.u32 %v562, 4294901760
      %564 = vmatmul.mubr.f32.gmra.mrb[0].mxu0 %v563
      %v565 = vpop.f32.mrb[0].mxu0
      %v566 = vadd.f32 %v403, %v565
      %v567 = vpop.f32.mrb[0].mxu0
      %v568 = vadd.f32 %v403, %v567
      %569 = vmatprep.mubr.f32.mxu0 0.0
      %v570 = vand.u32 %v445, 4294901760
      %v571 = vsub.f32 %v445, %v570
      %v572 = vand.u32 %v571, 4294901760
      %v573 = vsub.f32 %v571, %v572
      %v574 = vand.u32 %v573, 4294901760
      %575 = vmatmul.mubr.f32.gmra.mrb[0].mxu0 %v574
      %v576 = vpop.f32.mrb[0].mxu0
      %v577 = vadd.f32 %v408, %v576
      %v578 = vpop.f32.mrb[0].mxu0
      %v579 = vadd.f32 %v408, %v578
      %580 = vmatprep.mubr.f32.mxu0 0.0
      %v581 = vand.u32 %v448, 4294901760
      %v582 = vsub.f32 %v448, %v581
      %v583 = vand.u32 %v582, 4294901760
      %v584 = vsub.f32 %v582, %v583
      %v585 = vand.u32 %v584, 4294901760
      %586 = vmatmul.mubr.f32.gmra.mrb[0].mxu0 %v585
      %v587 = vpop.f32.mrb[0].mxu0
      %v588 = vadd.f32 %v413, %v587
      %v589 = vpop.f32.mrb[0].mxu0
      %v590 = vadd.f32 %v413, %v589
      %591 = vmatprep.mubr.f32.mxu0 0.0
      %v592 = vand.u32 %v451, 4294901760
      %v593 = vsub.f32 %v451, %v592
      %v594 = vand.u32 %v593, 4294901760
      %v595 = vsub.f32 %v593, %v594
      %v596 = vand.u32 %v595, 4294901760
      %597 = vmatmul.mubr.f32.gmra.mrb[0].mxu0 %v596
      %v598 = vpop.f32.mrb[0].mxu0
      %v599 = vadd.f32 %v418, %v598
      %v600 = vpop.f32.mrb[0].mxu0
      %v601 = vadd.f32 %v418, %v600
      %602 = vmatprep.mubr.f32.mxu0 0.0
      %v603 = vand.u32 %v454, 4294901760
      %v604 = vsub.f32 %v454, %v603
      %v605 = vand.u32 %v604, 4294901760
      %v606 = vsub.f32 %v604, %v605
      %v607 = vand.u32 %v606, 4294901760
      %608 = vmatmul.mubr.f32.gmra.mrb[0].mxu0 %v607
      %v609 = vpop.f32.mrb[0].mxu0
      %v610 = vadd.f32 %v423, %v609
      %v611 = vpop.f32.mrb[0].mxu0
      %v612 = vadd.f32 %v423, %v611
      %613 = vmatprep.mubr.f32.mxu0 0.0
      %v614 = vand.u32 %v457, 4294901760
      %v615 = vsub.f32 %v457, %v614
      %v616 = vand.u32 %v615, 4294901760
      %v617 = vsub.f32 %v615, %v616
      %v618 = vand.u32 %v617, 4294901760
      %619 = vmatmul.mubr.f32.gmra.mrb[0].mxu0 %v618
      %v620 = vpop.f32.mrb[0].mxu0
      %v621 = vadd.f32 %v428, %v620
      %v622 = vpop.f32.mrb[0].mxu0
      %v623 = vadd.f32 %v428, %v622
      %624 = vmatprep.mubr.f32.mxu0 0.0
      %v625 = vand.u32 %v460, 4294901760
      %v626 = vsub.f32 %v460, %v625
      %v627 = vand.u32 %v626, 4294901760
      %v628 = vsub.f32 %v626, %v627
      %v629 = vand.u32 %v628, 4294901760
      %630 = vmatmul.mubr.f32.gmra.mrb[0].mxu0 %v629
      %v631 = vpop.f32.mrb[0].mxu0
      %v632 = vadd.f32 %v433, %v631
      %v633 = vpop.f32.mrb[0].mxu0
      %v634 = vadd.f32 %v433, %v633
      %635 = vmatprep.mubr.f32.mxu0 0.0
      %v636 = vand.u32 %v463, 4294901760
      %v637 = vsub.f32 %v463, %v636
      %v638 = vand.u32 %v637, 4294901760
      %v639 = vsub.f32 %v637, %v638
      %v640 = vand.u32 %v639, 4294901760
      %641 = vmatmul.mubr.f32.gmra.mrb[0].mxu0 %v640
      %v642 = vpop.f32.mrb[0].mxu0
      %v643 = vadd.f32 %v438, %v642
      %v644 = vpop.f32.mrb[0].mxu0
      %v645 = vadd.f32 %v438, %v644
      %646 = vdwg.mxu0
      %v647 = vand.u32 %v371, 4294901760
      %v648 = vsub.f32 %v371, %v647
      %v649 = vand.u32 %v648, 4294901760
      %v650 = vsub.f32 %v648, %v649
      %v651 = vand.u32 %v650, 4294901760
      %652 = vmatprep.subr.mxu0 %v651
      %v653 = vand.u32 %v370, 4294901760
      %v654 = vsub.f32 %v370, %v653
      %v655 = vand.u32 %v654, 4294901760
      %v656 = vsub.f32 %v654, %v655
      %v657 = vand.u32 %v656, 4294901760
      %658 = vmatpush1.msra.mxu0 %v657
      %v659 = vand.u32 %v373, 4294901760
      %v660 = vsub.f32 %v373, %v659
      %v661 = vand.u32 %v660, 4294901760
      %v662 = vsub.f32 %v660, %v661
      %v663 = vand.u32 %v662, 4294901760
      %664 = vmatprep.subr.mxu0 %v663
      %v665 = vand.u32 %v372, 4294901760
      %v666 = vsub.f32 %v372, %v665
      %v667 = vand.u32 %v666, 4294901760
      %v668 = vsub.f32 %v666, %v667
      %v669 = vand.u32 %v668, 4294901760
      %670 = vmatpush1.msra.mxu0 %v669
      %v671 = vand.u32 %v375, 4294901760
      %v672 = vsub.f32 %v375, %v671
      %v673 = vand.u32 %v672, 4294901760
      %v674 = vsub.f32 %v672, %v673
      %v675 = vand.u32 %v674, 4294901760
      %676 = vmatprep.subr.mxu0 %v675
      %v677 = vand.u32 %v374, 4294901760
      %v678 = vsub.f32 %v374, %v677
      %v679 = vand.u32 %v678, 4294901760
      %v680 = vsub.f32 %v678, %v679
      %v681 = vand.u32 %v680, 4294901760
      %682 = vmatpush1.msra.mxu0 %v681
      %v683 = vand.u32 %v377, 4294901760
      %v684 = vsub.f32 %v377, %v683
      %v685 = vand.u32 %v684, 4294901760
      %v686 = vsub.f32 %v684, %v685
      %v687 = vand.u32 %v686, 4294901760
      %688 = vmatprep.subr.mxu0 %v687
      %v689 = vand.u32 %v376, 4294901760
      %v690 = vsub.f32 %v376, %v689
      %v691 = vand.u32 %v690, 4294901760
      %v692 = vsub.f32 %v690, %v691
      %v693 = vand.u32 %v692, 4294901760
      %694 = vmatpush1.msra.mxu0 %v693
      %v695 = vand.u32 %v379, 4294901760
      %v696 = vsub.f32 %v379, %v695
      %v697 = vand.u32 %v696, 4294901760
      %v698 = vsub.f32 %v696, %v697
      %v699 = vand.u32 %v698, 4294901760
      %700 = vmatprep.subr.mxu0 %v699
      %v701 = vand.u32 %v378, 4294901760
      %v702 = vsub.f32 %v378, %v701
      %v703 = vand.u32 %v702, 4294901760
      %v704 = vsub.f32 %v702, %v703
      %v705 = vand.u32 %v704, 4294901760
      %706 = vmatpush1.msra.mxu0 %v705
      %v707 = vand.u32 %v381, 4294901760
      %v708 = vsub.f32 %v381, %v707
      %v709 = vand.u32 %v708, 4294901760
      %v710 = vsub.f32 %v708, %v709
      %v711 = vand.u32 %v710, 4294901760
      %712 = vmatprep.subr.mxu0 %v711
      %v713 = vand.u32 %v380, 4294901760
      %v714 = vsub.f32 %v380, %v713
      %v715 = vand.u32 %v714, 4294901760
      %v716 = vsub.f32 %v714, %v715
      %v717 = vand.u32 %v716, 4294901760
      %718 = vmatpush1.msra.mxu0 %v717
      %v719 = vand.u32 %v383, 4294901760
      %v720 = vsub.f32 %v383, %v719
      %v721 = vand.u32 %v720, 4294901760
      %v722 = vsub.f32 %v720, %v721
      %v723 = vand.u32 %v722, 4294901760
      %724 = vmatprep.subr.mxu0 %v723
      %v725 = vand.u32 %v382, 4294901760
      %v726 = vsub.f32 %v382, %v725
      %v727 = vand.u32 %v726, 4294901760
      %v728 = vsub.f32 %v726, %v727
      %v729 = vand.u32 %v728, 4294901760
      %730 = vmatpush1.msra.mxu0 %v729
      %v731 = vand.u32 %v385, 4294901760
      %v732 = vsub.f32 %v385, %v731
      %v733 = vand.u32 %v732, 4294901760
      %v734 = vsub.f32 %v732, %v733
      %v735 = vand.u32 %v734, 4294901760
      %736 = vmatprep.subr.mxu0 %v735
      %v737 = vand.u32 %v384, 4294901760
      %v738 = vsub.f32 %v384, %v737
      %v739 = vand.u32 %v738, 4294901760
      %v740 = vsub.f32 %v738, %v739
      %v741 = vand.u32 %v740, 4294901760
      %742 = vmatpush1.msra.mxu0 %v741
      %v743 = vand.u32 %v387, 4294901760
      %v744 = vsub.f32 %v387, %v743
      %v745 = vand.u32 %v744, 4294901760
      %v746 = vsub.f32 %v744, %v745
      %v747 = vand.u32 %v746, 4294901760
      %748 = vmatprep.subr.mxu0 %v747
      %v749 = vand.u32 %v386, 4294901760
      %v750 = vsub.f32 %v386, %v749
      %v751 = vand.u32 %v750, 4294901760
      %v752 = vsub.f32 %v750, %v751
      %v753 = vand.u32 %v752, 4294901760
      %754 = vmatpush1.msra.mxu0 %v753
      %v755 = vand.u32 %v389, 4294901760
      %v756 = vsub.f32 %v389, %v755
      %v757 = vand.u32 %v756, 4294901760
      %v758 = vsub.f32 %v756, %v757
      %v759 = vand.u32 %v758, 4294901760
      %760 = vmatprep.subr.mxu0 %v759
      %v761 = vand.u32 %v388, 4294901760
      %v762 = vsub.f32 %v388, %v761
      %v763 = vand.u32 %v762, 4294901760
      %v764 = vsub.f32 %v762, %v763
      %v765 = vand.u32 %v764, 4294901760
      %766 = vmatpush1.msra.mxu0 %v765
      %v767 = vand.u32 %v470, 4294901760
      %v768 = vsub.f32 %v470, %v767
      %v769 = vand.u32 %v768, 4294901760
      %v770 = vsub.f32 %v768, %v769
      %v771 = vand.u32 %v770, 4294901760
      %772 = vmatprep.subr.mxu0 %v771
      %v773 = vand.u32 %v467, 4294901760
      %v774 = vsub.f32 %v467, %v773
      %v775 = vand.u32 %v774, 4294901760
      %v776 = vsub.f32 %v774, %v775
      %v777 = vand.u32 %v776, 4294901760
      %778 = vmatpush1.msra.mxu0 %v777
      %779 = vmatprep.subr.mxu0 0.0
      %780 = vmatpush1.msra.mxu0 0.0
      %781 = vmatprep.subr.mxu0 0.0
      %782 = vmatpush1.msra.mxu0 0.0
      %783 = vmatprep.subr.mxu0 0.0
      %784 = vmatpush1.msra.mxu0 0.0
      %785 = vmatprep.subr.mxu0 0.0
      %786 = vmatpush1.msra.mxu0 0.0
      %787 = vmatprep.subr.mxu0 0.0
      %788 = vmatpush1.msra.mxu0 0.0
      %789 = vmatprep.subr.mxu0 0.0
      %790 = vmatpush1.msra.mxu0 0.0
      %791 = vmatprep.subr.mxu0 0.0
      %792 = vmatpush1.msra.mxu0 0.0
      %793 = vmatprep.subr.mxu0 0.0
      %794 = vmatpush1.msra.mxu0 0.0
      %795 = vmatprep.subr.mxu0 0.0
      %796 = vmatpush1.msra.mxu0 0.0
      %797 = vmatprep.subr.mxu0 0.0
      %798 = vmatpush1.msra.mxu0 0.0
      %799 = vmatprep.subr.mxu0 0.0
      %800 = vmatpush1.msra.mxu0 0.0
      %801 = vmatprep.subr.mxu0 0.0
      %802 = vmatpush1.msra.mxu0 0.0
      %803 = vmatprep.subr.mxu0 0.0
      %804 = vmatpush1.msra.mxu0 0.0
      %805 = vmatprep.subr.mxu0 0.0
      %806 = vmatpush1.msra.mxu0 0.0
      %807 = vmatprep.subr.mxu0 0.0
      %808 = vmatpush1.msra.mxu0 0.0
      %809 = vmatprep.subr.mxu0 0.0
      %810 = vmatpush1.msra.mxu0 0.0
      %811 = vmatprep.subr.mxu0 0.0
      %812 = vmatpush1.msra.mxu0 0.0
      %813 = vmatprep.subr.mxu0 0.0
      %814 = vmatpush1.msra.mxu0 0.0
      %815 = vmatprep.subr.mxu0 0.0
      %816 = vmatpush1.msra.mxu0 0.0
      %817 = vmatprep.subr.mxu0 0.0
      %818 = vmatpush1.msra.mxu0 0.0
      %819 = vmatprep.subr.mxu0 0.0
      %820 = vmatpush1.msra.mxu0 0.0
      %821 = vmatprep.mubr.f32.mxu0 0.0
      %v822 = vand.u32 %v442, 4294901760
      %823 = vmatmul.mubr.f32.gmra.mrb[0].mxu0 %v822
      %v824 = vpop.f32.mrb[0].mxu0
      %v825 = vadd.f32 %v566, %v824
      %v826 = vpop.f32.mrb[0].mxu0
      %v827 = vadd.f32 %v568, %v826
      %828 = vmatprep.mubr.f32.mxu0 0.0
      %v829 = vand.u32 %v445, 4294901760
      %830 = vmatmul.mubr.f32.gmra.mrb[0].mxu0 %v829
      %v831 = vpop.f32.mrb[0].mxu0
      %v832 = vadd.f32 %v577, %v831
      %v833 = vpop.f32.mrb[0].mxu0
      %v834 = vadd.f32 %v579, %v833
      %835 = vmatprep.mubr.f32.mxu0 0.0
      %v836 = vand.u32 %v448, 4294901760
      %837 = vmatmul.mubr.f32.gmra.mrb[0].mxu0 %v836
      %v838 = vpop.f32.mrb[0].mxu0
      %v839 = vadd.f32 %v588, %v838
      %v840 = vpop.f32.mrb[0].mxu0
      %v841 = vadd.f32 %v590, %v840
      %842 = vmatprep.mubr.f32.mxu0 0.0
      %v843 = vand.u32 %v451, 4294901760
      %844 = vmatmul.mubr.f32.gmra.mrb[0].mxu0 %v843
      %v845 = vpop.f32.mrb[0].mxu0
      %v846 = vadd.f32 %v599, %v845
      %v847 = vpop.f32.mrb[0].mxu0
      %v848 = vadd.f32 %v601, %v847
      %849 = vmatprep.mubr.f32.mxu0 0.0
      %v850 = vand.u32 %v454, 4294901760
      %851 = vmatmul.mubr.f32.gmra.mrb[0].mxu0 %v850
      %v852 = vpop.f32.mrb[0].mxu0
      %v853 = vadd.f32 %v610, %v852
      %v854 = vpop.f32.mrb[0].mxu0
      %v855 = vadd.f32 %v612, %v854
      %856 = vmatprep.mubr.f32.mxu0 0.0
      %v857 = vand.u32 %v457, 4294901760
      %858 = vmatmul.mubr.f32.gmra.mrb[0].mxu0 %v857
      %v859 = vpop.f32.mrb[0].mxu0
      %v860 = vadd.f32 %v621, %v859
      %v861 = vpop.f32.mrb[0].mxu0
      %v862 = vadd.f32 %v623, %v861
      %863 = vmatprep.mubr.f32.mxu0 0.0
      %v864 = vand.u32 %v460, 4294901760
      %865 = vmatmul.mubr.f32.gmra.mrb[0].mxu0 %v864
      %v866 = vpop.f32.mrb[0].mxu0
      %v867 = vadd.f32 %v632, %v866
      %v868 = vpop.f32.mrb[0].mxu0
      %v869 = vadd.f32 %v634, %v868
      %870 = vmatprep.mubr.f32.mxu0 0.0
      %v871 = vand.u32 %v463, 4294901760
      %872 = vmatmul.mubr.f32.gmra.mrb[0].mxu0 %v871
      %v873 = vpop.f32.mrb[0].mxu0
      %v874 = vadd.f32 %v643, %v873
      %v875 = vpop.f32.mrb[0].mxu0
      %v876 = vadd.f32 %v645, %v875
      %877 = vdwg.mxu0
      %v878 = vand.u32 %v371, 4294901760
      %v879 = vsub.f32 %v371, %v878
      %880 = vmatprep.subr.mxu0 %v879
      %v881 = vand.u32 %v370, 4294901760
      %v882 = vsub.f32 %v370, %v881
      %883 = vmatpush1.msra.mxu0 %v882
      %v884 = vand.u32 %v373, 4294901760
      %v885 = vsub.f32 %v373, %v884
      %886 = vmatprep.subr.mxu0 %v885
      %v887 = vand.u32 %v372, 4294901760
      %v888 = vsub.f32 %v372, %v887
      %889 = vmatpush1.msra.mxu0 %v888
      %v890 = vand.u32 %v375, 4294901760
      %v891 = vsub.f32 %v375, %v890
      %892 = vmatprep.subr.mxu0 %v891
      %v893 = vand.u32 %v374, 4294901760
      %v894 = vsub.f32 %v374, %v893
      %895 = vmatpush1.msra.mxu0 %v894
      %v896 = vand.u32 %v377, 4294901760
      %v897 = vsub.f32 %v377, %v896
      %898 = vmatprep.subr.mxu0 %v897
      %v899 = vand.u32 %v376, 4294901760
      %v900 = vsub.f32 %v376, %v899
      %901 = vmatpush1.msra.mxu0 %v900
      %v902 = vand.u32 %v379, 4294901760
      %v903 = vsub.f32 %v379, %v902
      %904 = vmatprep.subr.mxu0 %v903
      %v905 = vand.u32 %v378, 4294901760
      %v906 = vsub.f32 %v378, %v905
      %907 = vmatpush1.msra.mxu0 %v906
      %v908 = vand.u32 %v381, 4294901760
      %v909 = vsub.f32 %v381, %v908
      %910 = vmatprep.subr.mxu0 %v909
      %v911 = vand.u32 %v380, 4294901760
      %v912 = vsub.f32 %v380, %v911
      %913 = vmatpush1.msra.mxu0 %v912
      %v914 = vand.u32 %v383, 4294901760
      %v915 = vsub.f32 %v383, %v914
      %916 = vmatprep.subr.mxu0 %v915
      %v917 = vand.u32 %v382, 4294901760
      %v918 = vsub.f32 %v382, %v917
      %919 = vmatpush1.msra.mxu0 %v918
      %v920 = vand.u32 %v385, 4294901760
      %v921 = vsub.f32 %v385, %v920
      %922 = vmatprep.subr.mxu0 %v921
      %v923 = vand.u32 %v384, 4294901760
      %v924 = vsub.f32 %v384, %v923
      %925 = vmatpush1.msra.mxu0 %v924
      %v926 = vand.u32 %v387, 4294901760
      %v927 = vsub.f32 %v387, %v926
      %928 = vmatprep.subr.mxu0 %v927
      %v929 = vand.u32 %v386, 4294901760
      %v930 = vsub.f32 %v386, %v929
      %931 = vmatpush1.msra.mxu0 %v930
      %v932 = vand.u32 %v389, 4294901760
      %v933 = vsub.f32 %v389, %v932
      %934 = vmatprep.subr.mxu0 %v933
      %v935 = vand.u32 %v388, 4294901760
      %v936 = vsub.f32 %v388, %v935
      %937 = vmatpush1.msra.mxu0 %v936
      %v938 = vand.u32 %v470, 4294901760
      %v939 = vsub.f32 %v470, %v938
      %940 = vmatprep.subr.mxu0 %v939
      %v941 = vand.u32 %v467, 4294901760
      %v942 = vsub.f32 %v467, %v941
      %943 = vmatpush1.msra.mxu0 %v942
      %944 = vmatprep.subr.mxu0 0.0
      %945 = vmatpush1.msra.mxu0 0.0
      %946 = vmatprep.subr.mxu0 0.0
      %947 = vmatpush1.msra.mxu0 0.0
      %948 = vmatprep.subr.mxu0 0.0
      %949 = vmatpush1.msra.mxu0 0.0
      %950 = vmatprep.subr.mxu0 0.0
      %951 = vmatpush1.msra.mxu0 0.0
      %952 = vmatprep.subr.mxu0 0.0
      %953 = vmatpush1.msra.mxu0 0.0
      %954 = vmatprep.subr.mxu0 0.0
      %955 = vmatpush1.msra.mxu0 0.0
      %956 = vmatprep.subr.mxu0 0.0
      %957 = vmatpush1.msra.mxu0 0.0
      %958 = vmatprep.subr.mxu0 0.0
      %959 = vmatpush1.msra.mxu0 0.0
      %960 = vmatprep.subr.mxu0 0.0
      %961 = vmatpush1.msra.mxu0 0.0
      %962 = vmatprep.subr.mxu0 0.0
      %963 = vmatpush1.msra.mxu0 0.0
      %964 = vmatprep.subr.mxu0 0.0
      %965 = vmatpush1.msra.mxu0 0.0
      %966 = vmatprep.subr.mxu0 0.0
      %967 = vmatpush1.msra.mxu0 0.0
      %968 = vmatprep.subr.mxu0 0.0
      %969 = vmatpush1.msra.mxu0 0.0
      %970 = vmatprep.subr.mxu0 0.0
      %971 = vmatpush1.msra.mxu0 0.0
      %972 = vmatprep.subr.mxu0 0.0
      %973 = vmatpush1.msra.mxu0 0.0
      %974 = vmatprep.subr.mxu0 0.0
      %975 = vmatpush1.msra.mxu0 0.0
      %976 = vmatprep.subr.mxu0 0.0
      %977 = vmatpush1.msra.mxu0 0.0
      %978 = vmatprep.subr.mxu0 0.0
      %979 = vmatpush1.msra.mxu0 0.0
      %980 = vmatprep.subr.mxu0 0.0
      %981 = vmatpush1.msra.mxu0 0.0
      %982 = vmatprep.subr.mxu0 0.0
      %983 = vmatpush1.msra.mxu0 0.0
      %984 = vmatprep.subr.mxu0 0.0
      %985 = vmatpush1.msra.mxu0 0.0
      %986 = vmatprep.mubr.f32.mxu0 0.0
      %v987 = vand.u32 %v442, 4294901760
      %v988 = vsub.f32 %v442, %v987
      %989 = vmatmul.mubr.f32.gmra.mrb[0].mxu0 %v988
      %v990 = vpop.f32.mrb[0].mxu0
      %v991 = vadd.f32 %v825, %v990
      %v992 = vpop.f32.mrb[0].mxu0
      %v993 = vadd.f32 %v827, %v992
      %994 = vmatprep.mubr.f32.mxu0 0.0
      %v995 = vand.u32 %v445, 4294901760
      %v996 = vsub.f32 %v445, %v995
      %997 = vmatmul.mubr.f32.gmra.mrb[0].mxu0 %v996
      %v998 = vpop.f32.mrb[0].mxu0
      %v999 = vadd.f32 %v832, %v998
      %v1000 = vpop.f32.mrb[0].mxu0
      %v1001 = vadd.f32 %v834, %v1000
      %1002 = vmatprep.mubr.f32.mxu0 0.0
      %v1003 = vand.u32 %v448, 4294901760
      %v1004 = vsub.f32 %v448, %v1003
      %1005 = vmatmul.mubr.f32.gmra.mrb[0].mxu0 %v1004
      %v1006 = vpop.f32.mrb[0].mxu0
      %v1007 = vadd.f32 %v839, %v1006
      %v1008 = vpop.f32.mrb[0].mxu0
      %v1009 = vadd.f32 %v841, %v1008
      %1010 = vmatprep.mubr.f32.mxu0 0.0
      %v1011 = vand.u32 %v451, 4294901760
      %v1012 = vsub.f32 %v451, %v1011
      %1013 = vmatmul.mubr.f32.gmra.mrb[0].mxu0 %v1012
      %v1014 = vpop.f32.mrb[0].mxu0
      %v1015 = vadd.f32 %v846, %v1014
      %v1016 = vpop.f32.mrb[0].mxu0
      %v1017 = vadd.f32 %v848, %v1016
      %1018 = vmatprep.mubr.f32.mxu0 0.0
      %v1019 = vand.u32 %v454, 4294901760
      %v1020 = vsub.f32 %v454, %v1019
      %1021 = vmatmul.mubr.f32.gmra.mrb[0].mxu0 %v1020
      %v1022 = vpop.f32.mrb[0].mxu0
      %v1023 = vadd.f32 %v853, %v1022
      %v1024 = vpop.f32.mrb[0].mxu0
      %v1025 = vadd.f32 %v855, %v1024
      %1026 = vmatprep.mubr.f32.mxu0 0.0
      %v1027 = vand.u32 %v457, 4294901760
      %v1028 = vsub.f32 %v457, %v1027
      %1029 = vmatmul.mubr.f32.gmra.mrb[0].mxu0 %v1028
      %v1030 = vpop.f32.mrb[0].mxu0
      %v1031 = vadd.f32 %v860, %v1030
      %v1032 = vpop.f32.mrb[0].mxu0
      %v1033 = vadd.f32 %v862, %v1032
      %1034 = vmatprep.mubr.f32.mxu0 0.0
      %v1035 = vand.u32 %v460, 4294901760
      %v1036 = vsub.f32 %v460, %v1035
      %1037 = vmatmul.mubr.f32.gmra.mrb[0].mxu0 %v1036
      %v1038 = vpop.f32.mrb[0].mxu0
      %v1039 = vadd.f32 %v867, %v1038
      %v1040 = vpop.f32.mrb[0].mxu0
      %v1041 = vadd.f32 %v869, %v1040
      %1042 = vmatprep.mubr.f32.mxu0 0.0
      %v1043 = vand.u32 %v463, 4294901760
      %v1044 = vsub.f32 %v463, %v1043
      %1045 = vmatmul.mubr.f32.gmra.mrb[0].mxu0 %v1044
      %v1046 = vpop.f32.mrb[0].mxu0
      %v1047 = vadd.f32 %v874, %v1046
      %v1048 = vpop.f32.mrb[0].mxu0
      %v1049 = vadd.f32 %v876, %v1048
      %1050 = vdwg.mxu0
      %v1051 = vand.u32 %v371, 4294901760
      %1052 = vmatprep.subr.mxu0 %v1051
      %v1053 = vand.u32 %v370, 4294901760
      %1054 = vmatpush1.msra.mxu0 %v1053
      %v1055 = vand.u32 %v373, 4294901760
      %1056 = vmatprep.subr.mxu0 %v1055
      %v1057 = vand.u32 %v372, 4294901760
      %1058 = vmatpush1.msra.mxu0 %v1057
      %v1059 = vand.u32 %v375, 4294901760
      %1060 = vmatprep.subr.mxu0 %v1059
      %v1061 = vand.u32 %v374, 4294901760
      %1062 = vmatpush1.msra.mxu0 %v1061
      %v1063 = vand.u32 %v377, 4294901760
      %1064 = vmatprep.subr.mxu0 %v1063
      %v1065 = vand.u32 %v376, 4294901760
      %1066 = vmatpush1.msra.mxu0 %v1065
      %v1067 = vand.u32 %v379, 4294901760
      %1068 = vmatprep.subr.mxu0 %v1067
      %v1069 = vand.u32 %v378, 4294901760
      %1070 = vmatpush1.msra.mxu0 %v1069
      %v1071 = vand.u32 %v381, 4294901760
      %1072 = vmatprep.subr.mxu0 %v1071
      %v1073 = vand.u32 %v380, 4294901760
      %1074 = vmatpush1.msra.mxu0 %v1073
      %v1075 = vand.u32 %v383, 4294901760
      %1076 = vmatprep.subr.mxu0 %v1075
      %v1077 = vand.u32 %v382, 4294901760
      %1078 = vmatpush1.msra.mxu0 %v1077
      %v1079 = vand.u32 %v385, 4294901760
      %1080 = vmatprep.subr.mxu0 %v1079
      %v1081 = vand.u32 %v384, 4294901760
      %1082 = vmatpush1.msra.mxu0 %v1081
      %v1083 = vand.u32 %v387, 4294901760
      %1084 = vmatprep.subr.mxu0 %v1083
      %v1085 = vand.u32 %v386, 4294901760
      %1086 = vmatpush1.msra.mxu0 %v1085
      %v1087 = vand.u32 %v389, 4294901760
      %1088 = vmatprep.subr.mxu0 %v1087
      %v1089 = vand.u32 %v388, 4294901760
      %1090 = vmatpush1.msra.mxu0 %v1089
      %v1091 = vand.u32 %v470, 4294901760
      %1092 = vmatprep.subr.mxu0 %v1091
      %v1093 = vand.u32 %v467, 4294901760
      %1094 = vmatpush1.msra.mxu0 %v1093
      %1095 = vmatprep.subr.mxu0 0.0
      %1096 = vmatpush1.msra.mxu0 0.0
      %1097 = vmatprep.subr.mxu0 0.0
      %1098 = vmatpush1.msra.mxu0 0.0
      %1099 = vmatprep.subr.mxu0 0.0
      %1100 = vmatpush1.msra.mxu0 0.0
      %1101 = vmatprep.subr.mxu0 0.0
      %1102 = vmatpush1.msra.mxu0 0.0
      %1103 = vmatprep.subr.mxu0 0.0
      %1104 = vmatpush1.msra.mxu0 0.0
      %1105 = vmatprep.subr.mxu0 0.0
      %1106 = vmatpush1.msra.mxu0 0.0
      %1107 = vmatprep.subr.mxu0 0.0
      %1108 = vmatpush1.msra.mxu0 0.0
      %1109 = vmatprep.subr.mxu0 0.0
      %1110 = vmatpush1.msra.mxu0 0.0
      %1111 = vmatprep.subr.mxu0 0.0
      %1112 = vmatpush1.msra.mxu0 0.0
      %1113 = vmatprep.subr.mxu0 0.0
      %1114 = vmatpush1.msra.mxu0 0.0
      %1115 = vmatprep.subr.mxu0 0.0
      %1116 = vmatpush1.msra.mxu0 0.0
      %1117 = vmatprep.subr.mxu0 0.0
      %1118 = vmatpush1.msra.mxu0 0.0
      %1119 = vmatprep.subr.mxu0 0.0
      %1120 = vmatpush1.msra.mxu0 0.0
      %1121 = vmatprep.subr.mxu0 0.0
      %1122 = vmatpush1.msra.mxu0 0.0
      %1123 = vmatprep.subr.mxu0 0.0
      %1124 = vmatpush1.msra.mxu0 0.0
      %1125 = vmatprep.subr.mxu0 0.0
      %1126 = vmatpush1.msra.mxu0 0.0
      %1127 = vmatprep.subr.mxu0 0.0
      %1128 = vmatpush1.msra.mxu0 0.0
      %1129 = vmatprep.subr.mxu0 0.0
      %1130 = vmatpush1.msra.mxu0 0.0
      %1131 = vmatprep.subr.mxu0 0.0
      %1132 = vmatpush1.msra.mxu0 0.0
      %1133 = vmatprep.subr.mxu0 0.0
      %1134 = vmatpush1.msra.mxu0 0.0
      %1135 = vmatprep.subr.mxu0 0.0
      %1136 = vmatpush1.msra.mxu0 0.0
      %1137 = vmatprep.mubr.f32.mxu0 0.0
      %v1138 = vand.u32 %v442, 4294901760
      %v1139 = vsub.f32 %v442, %v1138
      %v1140 = vand.u32 %v1139, 4294901760
      %1141 = vmatmul.mubr.f32.gmra.mrb[0].mxu0 %v1140
      %v1142 = vpop.f32.mrb[0].mxu0
      %v1143 = vadd.f32 %v991, %v1142
      %v1144 = vpop.f32.mrb[0].mxu0
      %v1145 = vadd.f32 %v993, %v1144
      %1146 = vmatprep.mubr.f32.mxu0 0.0
      %v1147 = vand.u32 %v445, 4294901760
      %v1148 = vsub.f32 %v445, %v1147
      %v1149 = vand.u32 %v1148, 4294901760
      %1150 = vmatmul.mubr.f32.gmra.mrb[0].mxu0 %v1149
      %v1151 = vpop.f32.mrb[0].mxu0
      %v1152 = vadd.f32 %v999, %v1151
      %v1153 = vpop.f32.mrb[0].mxu0
      %v1154 = vadd.f32 %v1001, %v1153
      %1155 = vmatprep.mubr.f32.mxu0 0.0
      %v1156 = vand.u32 %v448, 4294901760
      %v1157 = vsub.f32 %v448, %v1156
      %v1158 = vand.u32 %v1157, 4294901760
      %1159 = vmatmul.mubr.f32.gmra.mrb[0].mxu0 %v1158
      %v1160 = vpop.f32.mrb[0].mxu0
      %v1161 = vadd.f32 %v1007, %v1160
      %v1162 = vpop.f32.mrb[0].mxu0
      %v1163 = vadd.f32 %v1009, %v1162
      %1164 = vmatprep.mubr.f32.mxu0 0.0
      %v1165 = vand.u32 %v451, 4294901760
      %v1166 = vsub.f32 %v451, %v1165
      %v1167 = vand.u32 %v1166, 4294901760
      %1168 = vmatmul.mubr.f32.gmra.mrb[0].mxu0 %v1167
      %v1169 = vpop.f32.mrb[0].mxu0
      %v1170 = vadd.f32 %v1015, %v1169
      %v1171 = vpop.f32.mrb[0].mxu0
      %v1172 = vadd.f32 %v1017, %v1171
      %1173 = vmatprep.mubr.f32.mxu0 0.0
      %v1174 = vand.u32 %v454, 4294901760
      %v1175 = vsub.f32 %v454, %v1174
      %v1176 = vand.u32 %v1175, 4294901760
      %1177 = vmatmul.mubr.f32.gmra.mrb[0].mxu0 %v1176
      %v1178 = vpop.f32.mrb[0].mxu0
      %v1179 = vadd.f32 %v1023, %v1178
      %v1180 = vpop.f32.mrb[0].mxu0
      %v1181 = vadd.f32 %v1025, %v1180
      %1182 = vmatprep.mubr.f32.mxu0 0.0
      %v1183 = vand.u32 %v457, 4294901760
      %v1184 = vsub.f32 %v457, %v1183
      %v1185 = vand.u32 %v1184, 4294901760
      %1186 = vmatmul.mubr.f32.gmra.mrb[0].mxu0 %v1185
      %v1187 = vpop.f32.mrb[0].mxu0
      %v1188 = vadd.f32 %v1031, %v1187
      %v1189 = vpop.f32.mrb[0].mxu0
      %v1190 = vadd.f32 %v1033, %v1189
      %1191 = vmatprep.mubr.f32.mxu0 0.0
      %v1192 = vand.u32 %v460, 4294901760
      %v1193 = vsub.f32 %v460, %v1192
      %v1194 = vand.u32 %v1193, 4294901760
      %1195 = vmatmul.mubr.f32.gmra.mrb[0].mxu0 %v1194
      %v1196 = vpop.f32.mrb[0].mxu0
      %v1197 = vadd.f32 %v1039, %v1196
      %v1198 = vpop.f32.mrb[0].mxu0
      %v1199 = vadd.f32 %v1041, %v1198
      %1200 = vmatprep.mubr.f32.mxu0 0.0
      %v1201 = vand.u32 %v463, 4294901760
      %v1202 = vsub.f32 %v463, %v1201
      %v1203 = vand.u32 %v1202, 4294901760
      %1204 = vmatmul.mubr.f32.gmra.mrb[0].mxu0 %v1203
      %v1205 = vpop.f32.mrb[0].mxu0
      %v1206 = vadd.f32 %v1047, %v1205
      %v1207 = vpop.f32.mrb[0].mxu0
      %v1208 = vadd.f32 %v1049, %v1207
      %1209 = vdwg.mxu0
      %v1210 = vand.u32 %v371, 4294901760
      %v1211 = vsub.f32 %v371, %v1210
      %v1212 = vand.u32 %v1211, 4294901760
      %1213 = vmatprep.subr.mxu0 %v1212
      %v1214 = vand.u32 %v370, 4294901760
      %v1215 = vsub.f32 %v370, %v1214
      %v1216 = vand.u32 %v1215, 4294901760
      %1217 = vmatpush1.msra.mxu0 %v1216
      %v1218 = vand.u32 %v373, 4294901760
      %v1219 = vsub.f32 %v373, %v1218
      %v1220 = vand.u32 %v1219, 4294901760
      %1221 = vmatprep.subr.mxu0 %v1220
      %v1222 = vand.u32 %v372, 4294901760
      %v1223 = vsub.f32 %v372, %v1222
      %v1224 = vand.u32 %v1223, 4294901760
      %1225 = vmatpush1.msra.mxu0 %v1224
      %v1226 = vand.u32 %v375, 4294901760
      %v1227 = vsub.f32 %v375, %v1226
      %v1228 = vand.u32 %v1227, 4294901760
      %1229 = vmatprep.subr.mxu0 %v1228
      %v1230 = vand.u32 %v374, 4294901760
      %v1231 = vsub.f32 %v374, %v1230
      %v1232 = vand.u32 %v1231, 4294901760
      %1233 = vmatpush1.msra.mxu0 %v1232
      %v1234 = vand.u32 %v377, 4294901760
      %v1235 = vsub.f32 %v377, %v1234
      %v1236 = vand.u32 %v1235, 4294901760
      %1237 = vmatprep.subr.mxu0 %v1236
      %v1238 = vand.u32 %v376, 4294901760
      %v1239 = vsub.f32 %v376, %v1238
      %v1240 = vand.u32 %v1239, 4294901760
      %1241 = vmatpush1.msra.mxu0 %v1240
      %v1242 = vand.u32 %v379, 4294901760
      %v1243 = vsub.f32 %v379, %v1242
      %v1244 = vand.u32 %v1243, 4294901760
      %1245 = vmatprep.subr.mxu0 %v1244
      %v1246 = vand.u32 %v378, 4294901760
      %v1247 = vsub.f32 %v378, %v1246
      %v1248 = vand.u32 %v1247, 4294901760
      %1249 = vmatpush1.msra.mxu0 %v1248
      %v1250 = vand.u32 %v381, 4294901760
      %v1251 = vsub.f32 %v381, %v1250
      %v1252 = vand.u32 %v1251, 4294901760
      %1253 = vmatprep.subr.mxu0 %v1252
      %v1254 = vand.u32 %v380, 4294901760
      %v1255 = vsub.f32 %v380, %v1254
      %v1256 = vand.u32 %v1255, 4294901760
      %1257 = vmatpush1.msra.mxu0 %v1256
      %v1258 = vand.u32 %v383, 4294901760
      %v1259 = vsub.f32 %v383, %v1258
      %v1260 = vand.u32 %v1259, 4294901760
      %1261 = vmatprep.subr.mxu0 %v1260
      %v1262 = vand.u32 %v382, 4294901760
      %v1263 = vsub.f32 %v382, %v1262
      %v1264 = vand.u32 %v1263, 4294901760
      %1265 = vmatpush1.msra.mxu0 %v1264
      %v1266 = vand.u32 %v385, 4294901760
      %v1267 = vsub.f32 %v385, %v1266
      %v1268 = vand.u32 %v1267, 4294901760
      %1269 = vmatprep.subr.mxu0 %v1268
      %v1270 = vand.u32 %v384, 4294901760
      %v1271 = vsub.f32 %v384, %v1270
      %v1272 = vand.u32 %v1271, 4294901760
      %1273 = vmatpush1.msra.mxu0 %v1272
      %v1274 = vand.u32 %v387, 4294901760
      %v1275 = vsub.f32 %v387, %v1274
      %v1276 = vand.u32 %v1275, 4294901760
      %1277 = vmatprep.subr.mxu0 %v1276
      %v1278 = vand.u32 %v386, 4294901760
      %v1279 = vsub.f32 %v386, %v1278
      %v1280 = vand.u32 %v1279, 4294901760
      %1281 = vmatpush1.msra.mxu0 %v1280
      %v1282 = vand.u32 %v389, 4294901760
      %v1283 = vsub.f32 %v389, %v1282
      %v1284 = vand.u32 %v1283, 4294901760
      %1285 = vmatprep.subr.mxu0 %v1284
      %v1286 = vand.u32 %v388, 4294901760
      %v1287 = vsub.f32 %v388, %v1286
      %v1288 = vand.u32 %v1287, 4294901760
      %1289 = vmatpush1.msra.mxu0 %v1288
      %v1290 = vand.u32 %v470, 4294901760
      %v1291 = vsub.f32 %v470, %v1290
      %v1292 = vand.u32 %v1291, 4294901760
      %1293 = vmatprep.subr.mxu0 %v1292
      %v1294 = vand.u32 %v467, 4294901760
      %v1295 = vsub.f32 %v467, %v1294
      %v1296 = vand.u32 %v1295, 4294901760
      %1297 = vmatpush1.msra.mxu0 %v1296
      %1298 = vmatprep.subr.mxu0 0.0
      %1299 = vmatpush1.msra.mxu0 0.0
      %1300 = vmatprep.subr.mxu0 0.0
      %1301 = vmatpush1.msra.mxu0 0.0
      %1302 = vmatprep.subr.mxu0 0.0
      %1303 = vmatpush1.msra.mxu0 0.0
      %1304 = vmatprep.subr.mxu0 0.0
      %1305 = vmatpush1.msra.mxu0 0.0
      %1306 = vmatprep.subr.mxu0 0.0
      %1307 = vmatpush1.msra.mxu0 0.0
      %1308 = vmatprep.subr.mxu0 0.0
      %1309 = vmatpush1.msra.mxu0 0.0
      %1310 = vmatprep.subr.mxu0 0.0
      %1311 = vmatpush1.msra.mxu0 0.0
      %1312 = vmatprep.subr.mxu0 0.0
      %1313 = vmatpush1.msra.mxu0 0.0
      %1314 = vmatprep.subr.mxu0 0.0
      %1315 = vmatpush1.msra.mxu0 0.0
      %1316 = vmatprep.subr.mxu0 0.0
      %1317 = vmatpush1.msra.mxu0 0.0
      %1318 = vmatprep.subr.mxu0 0.0
      %1319 = vmatpush1.msra.mxu0 0.0
      %1320 = vmatprep.subr.mxu0 0.0
      %1321 = vmatpush1.msra.mxu0 0.0
      %1322 = vmatprep.subr.mxu0 0.0
      %1323 = vmatpush1.msra.mxu0 0.0
      %1324 = vmatprep.subr.mxu0 0.0
      %1325 = vmatpush1.msra.mxu0 0.0
      %1326 = vmatprep.subr.mxu0 0.0
      %1327 = vmatpush1.msra.mxu0 0.0
      %1328 = vmatprep.subr.mxu0 0.0
      %1329 = vmatpush1.msra.mxu0 0.0
      %1330 = vmatprep.subr.mxu0 0.0
      %1331 = vmatpush1.msra.mxu0 0.0
      %1332 = vmatprep.subr.mxu0 0.0
      %1333 = vmatpush1.msra.mxu0 0.0
      %1334 = vmatprep.subr.mxu0 0.0
      %1335 = vmatpush1.msra.mxu0 0.0
      %1336 = vmatprep.subr.mxu0 0.0
      %1337 = vmatpush1.msra.mxu0 0.0
      %1338 = vmatprep.subr.mxu0 0.0
      %1339 = vmatpush1.msra.mxu0 0.0
      %1340 = vmatprep.mubr.f32.mxu0 0.0
      %v1341 = vand.u32 %v442, 4294901760
      %1342 = vmatmul.mubr.f32.gmra.mrb[0].mxu0 %v1341
      %v1343 = vpop.f32.mrb[0].mxu0
      %v1344 = vadd.f32 %v1143, %v1343
      %v1345 = vpop.f32.mrb[0].mxu0
      %v1346 = vadd.f32 %v1145, %v1345
      %1347 = vmatprep.mubr.f32.mxu0 0.0
      %v1348 = vand.u32 %v445, 4294901760
      %1349 = vmatmul.mubr.f32.gmra.mrb[0].mxu0 %v1348
      %v1350 = vpop.f32.mrb[0].mxu0
      %v1351 = vadd.f32 %v1152, %v1350
      %v1352 = vpop.f32.mrb[0].mxu0
      %v1353 = vadd.f32 %v1154, %v1352
      %1354 = vmatprep.mubr.f32.mxu0 0.0
      %v1355 = vand.u32 %v448, 4294901760
      %1356 = vmatmul.mubr.f32.gmra.mrb[0].mxu0 %v1355
      %v1357 = vpop.f32.mrb[0].mxu0
      %v1358 = vadd.f32 %v1161, %v1357
      %v1359 = vpop.f32.mrb[0].mxu0
      %v1360 = vadd.f32 %v1163, %v1359
      %1361 = vmatprep.mubr.f32.mxu0 0.0
      %v1362 = vand.u32 %v451, 4294901760
      %1363 = vmatmul.mubr.f32.gmra.mrb[0].mxu0 %v1362
      %v1364 = vpop.f32.mrb[0].mxu0
      %v1365 = vadd.f32 %v1170, %v1364
      %v1366 = vpop.f32.mrb[0].mxu0
      %v1367 = vadd.f32 %v1172, %v1366
      %1368 = vmatprep.mubr.f32.mxu0 0.0
      %v1369 = vand.u32 %v454, 4294901760
      %1370 = vmatmul.mubr.f32.gmra.mrb[0].mxu0 %v1369
      %v1371 = vpop.f32.mrb[0].mxu0
      %v1372 = vadd.f32 %v1179, %v1371
      %v1373 = vpop.f32.mrb[0].mxu0
      %v1374 = vadd.f32 %v1181, %v1373
      %1375 = vmatprep.mubr.f32.mxu0 0.0
      %v1376 = vand.u32 %v457, 4294901760
      %1377 = vmatmul.mubr.f32.gmra.mrb[0].mxu0 %v1376
      %v1378 = vpop.f32.mrb[0].mxu0
      %v1379 = vadd.f32 %v1188, %v1378
      %v1380 = vpop.f32.mrb[0].mxu0
      %v1381 = vadd.f32 %v1190, %v1380
      %1382 = vmatprep.mubr.f32.mxu0 0.0
      %v1383 = vand.u32 %v460, 4294901760
      %1384 = vmatmul.mubr.f32.gmra.mrb[0].mxu0 %v1383
      %v1385 = vpop.f32.mrb[0].mxu0
      %v1386 = vadd.f32 %v1197, %v1385
      %v1387 = vpop.f32.mrb[0].mxu0
      %v1388 = vadd.f32 %v1199, %v1387
      %1389 = vmatprep.mubr.f32.mxu0 0.0
      %v1390 = vand.u32 %v463, 4294901760
      %1391 = vmatmul.mubr.f32.gmra.mrb[0].mxu0 %v1390
      %v1392 = vpop.f32.mrb[0].mxu0
      %v1393 = vadd.f32 %v1206, %v1392
      %v1394 = vpop.f32.mrb[0].mxu0
      %v1395 = vadd.f32 %v1208, %v1394
      %1396 = vdwg.mxu0
      %v1397 = vand.u32 %v371, 4294901760
      %1398 = vmatprep.subr.mxu0 %v1397
      %v1399 = vand.u32 %v370, 4294901760
      %1400 = vmatpush1.msra.mxu0 %v1399
      %v1401 = vand.u32 %v373, 4294901760
      %1402 = vmatprep.subr.mxu0 %v1401
      %v1403 = vand.u32 %v372, 4294901760
      %1404 = vmatpush1.msra.mxu0 %v1403
      %v1405 = vand.u32 %v375, 4294901760
      %1406 = vmatprep.subr.mxu0 %v1405
      %v1407 = vand.u32 %v374, 4294901760
      %1408 = vmatpush1.msra.mxu0 %v1407
      %v1409 = vand.u32 %v377, 4294901760
      %1410 = vmatprep.subr.mxu0 %v1409
      %v1411 = vand.u32 %v376, 4294901760
      %1412 = vmatpush1.msra.mxu0 %v1411
      %v1413 = vand.u32 %v379, 4294901760
      %1414 = vmatprep.subr.mxu0 %v1413
      %v1415 = vand.u32 %v378, 4294901760
      %1416 = vmatpush1.msra.mxu0 %v1415
      %v1417 = vand.u32 %v381, 4294901760
      %1418 = vmatprep.subr.mxu0 %v1417
      %v1419 = vand.u32 %v380, 4294901760
      %1420 = vmatpush1.msra.mxu0 %v1419
      %v1421 = vand.u32 %v383, 4294901760
      %1422 = vmatprep.subr.mxu0 %v1421
      %v1423 = vand.u32 %v382, 4294901760
      %1424 = vmatpush1.msra.mxu0 %v1423
      %v1425 = vand.u32 %v385, 4294901760
      %1426 = vmatprep.subr.mxu0 %v1425
      %v1427 = vand.u32 %v384, 4294901760
      %1428 = vmatpush1.msra.mxu0 %v1427
      %v1429 = vand.u32 %v387, 4294901760
      %1430 = vmatprep.subr.mxu0 %v1429
      %v1431 = vand.u32 %v386, 4294901760
      %1432 = vmatpush1.msra.mxu0 %v1431
      %v1433 = vand.u32 %v389, 4294901760
      %1434 = vmatprep.subr.mxu0 %v1433
      %v1435 = vand.u32 %v388, 4294901760
      %1436 = vmatpush1.msra.mxu0 %v1435
      %v1437 = vand.u32 %v470, 4294901760
      %1438 = vmatprep.subr.mxu0 %v1437
      %v1439 = vand.u32 %v467, 4294901760
      %1440 = vmatpush1.msra.mxu0 %v1439
      %1441 = vmatprep.subr.mxu0 0.0
      %1442 = vmatpush1.msra.mxu0 0.0
      %1443 = vmatprep.subr.mxu0 0.0
      %1444 = vmatpush1.msra.mxu0 0.0
      %1445 = vmatprep.subr.mxu0 0.0
      %1446 = vmatpush1.msra.mxu0 0.0
      %1447 = vmatprep.subr.mxu0 0.0
      %1448 = vmatpush1.msra.mxu0 0.0
      %1449 = vmatprep.subr.mxu0 0.0
      %1450 = vmatpush1.msra.mxu0 0.0
      %1451 = vmatprep.subr.mxu0 0.0
      %1452 = vmatpush1.msra.mxu0 0.0
      %1453 = vmatprep.subr.mxu0 0.0
      %1454 = vmatpush1.msra.mxu0 0.0
      %1455 = vmatprep.subr.mxu0 0.0
      %1456 = vmatpush1.msra.mxu0 0.0
      %1457 = vmatprep.subr.mxu0 0.0
      %1458 = vmatpush1.msra.mxu0 0.0
      %1459 = vmatprep.subr.mxu0 0.0
      %1460 = vmatpush1.msra.mxu0 0.0
      %1461 = vmatprep.subr.mxu0 0.0
      %1462 = vmatpush1.msra.mxu0 0.0
      %1463 = vmatprep.subr.mxu0 0.0
      %1464 = vmatpush1.msra.mxu0 0.0
      %1465 = vmatprep.subr.mxu0 0.0
      %1466 = vmatpush1.msra.mxu0 0.0
      %1467 = vmatprep.subr.mxu0 0.0
      %1468 = vmatpush1.msra.mxu0 0.0
      %1469 = vmatprep.subr.mxu0 0.0
      %1470 = vmatpush1.msra.mxu0 0.0
      %1471 = vmatprep.subr.mxu0 0.0
      %1472 = vmatpush1.msra.mxu0 0.0
      %1473 = vmatprep.subr.mxu0 0.0
      %1474 = vmatpush1.msra.mxu0 0.0
      %1475 = vmatprep.subr.mxu0 0.0
      %1476 = vmatpush1.msra.mxu0 0.0
      %1477 = vmatprep.subr.mxu0 0.0
      %1478 = vmatpush1.msra.mxu0 0.0
      %1479 = vmatprep.subr.mxu0 0.0
      %1480 = vmatpush1.msra.mxu0 0.0
      %1481 = vmatprep.subr.mxu0 0.0
      %1482 = vmatpush1.msra.mxu0 0.0
      %1483 = vmatprep.mubr.f32.mxu0 0.0
      %v1484 = vand.u32 %v442, 4294901760
      %1485 = vmatmul.mubr.f32.gmra.mrb[0].mxu0 %v1484
      %v1486 = vpop.f32.mrb[0].mxu0
      %v1487 = vadd.f32 %v1344, %v1486
      %v1488 = vpop.f32.mrb[0].mxu0
      %v1489 = vadd.f32 %v1346, %v1488
      %1490 = vmatprep.mubr.f32.mxu0 0.0
      %v1491 = vand.u32 %v445, 4294901760
      %1492 = vmatmul.mubr.f32.gmra.mrb[0].mxu0 %v1491
      %v1493 = vpop.f32.mrb[0].mxu0
      %v1494 = vadd.f32 %v1351, %v1493
      %v1495 = vpop.f32.mrb[0].mxu0
      %v1496 = vadd.f32 %v1353, %v1495
      %1497 = vmatprep.mubr.f32.mxu0 0.0
      %v1498 = vand.u32 %v448, 4294901760
      %1499 = vmatmul.mubr.f32.gmra.mrb[0].mxu0 %v1498
      %v1500 = vpop.f32.mrb[0].mxu0
      %v1501 = vadd.f32 %v1358, %v1500
      %v1502 = vpop.f32.mrb[0].mxu0
      %v1503 = vadd.f32 %v1360, %v1502
      %1504 = vmatprep.mubr.f32.mxu0 0.0
      %v1505 = vand.u32 %v451, 4294901760
      %1506 = vmatmul.mubr.f32.gmra.mrb[0].mxu0 %v1505
      %v1507 = vpop.f32.mrb[0].mxu0
      %v1508 = vadd.f32 %v1365, %v1507
      %v1509 = vpop.f32.mrb[0].mxu0
      %v1510 = vadd.f32 %v1367, %v1509
      %1511 = vmatprep.mubr.f32.mxu0 0.0
      %v1512 = vand.u32 %v454, 4294901760
      %1513 = vmatmul.mubr.f32.gmra.mrb[0].mxu0 %v1512
      %v1514 = vpop.f32.mrb[0].mxu0
      %v1515 = vadd.f32 %v1372, %v1514
      %v1516 = vpop.f32.mrb[0].mxu0
      %v1517 = vadd.f32 %v1374, %v1516
      %1518 = vmatprep.mubr.f32.mxu0 0.0
      %v1519 = vand.u32 %v457, 4294901760
      %1520 = vmatmul.mubr.f32.gmra.mrb[0].mxu0 %v1519
      %v1521 = vpop.f32.mrb[0].mxu0
      %v1522 = vadd.f32 %v1379, %v1521
      %v1523 = vpop.f32.mrb[0].mxu0
      %v1524 = vadd.f32 %v1381, %v1523
      %1525 = vmatprep.mubr.f32.mxu0 0.0
      %v1526 = vand.u32 %v460, 4294901760
      %1527 = vmatmul.mubr.f32.gmra.mrb[0].mxu0 %v1526
      %v1528 = vpop.f32.mrb[0].mxu0
      %v1529 = vadd.f32 %v1386, %v1528
      %v1530 = vpop.f32.mrb[0].mxu0
      %v1531 = vadd.f32 %v1388, %v1530
      %1532 = vmatprep.mubr.f32.mxu0 0.0
      %v1533 = vand.u32 %v463, 4294901760
      %1534 = vmatmul.mubr.f32.gmra.mrb[0].mxu0 %v1533
      %v1535 = vpop.f32.mrb[0].mxu0
      %v1536 = vadd.f32 %v1393, %v1535
      %v1537 = vpop.f32.mrb[0].mxu0
      %v1538 = vadd.f32 %v1395, %v1537
      %1539 = vdwg.mxu0
      %vm1540 = vcmp.ge.f32.partialorder %v1487, 0.0
      %vm1541 = vcmp.ge.f32.partialorder %v1489, 0.0
      %vm1542 = vcmp.ge.f32.partialorder %v1494, 0.0
      %vm1543 = vcmp.ge.f32.partialorder %v1496, 0.0
      %vm1544 = vcmp.ge.f32.partialorder %v1501, 0.0
      %vm1545 = vcmp.ge.f32.partialorder %v1503, 0.0
      %vm1546 = vcmp.ge.f32.partialorder %v1508, 0.0
      %vm1547 = vcmp.ge.f32.partialorder %v1510, 0.0
      %vm1548 = vcmp.ge.f32.partialorder %v1515, 0.0
      %vm1549 = vcmp.ge.f32.partialorder %v1517, 0.0
      %vm1550 = vcmp.ge.f32.partialorder %v1522, 0.0
      %vm1551 = vcmp.ge.f32.partialorder %v1524, 0.0
      %vm1552 = vcmp.ge.f32.partialorder %v1529, 0.0
      %vm1553 = vcmp.ge.f32.partialorder %v1531, 0.0
      %vm1554 = vcmp.ge.f32.partialorder %v1536, 0.0
      %vm1555 = vcmp.ge.f32.partialorder %v1538, 0.0
      %s1556 = sld [smem:[#allocation2]]
      %v1557 = vstv %s1556
      %v1558 = vmul.f32 %v1557, %v1487
      %v1559 = vmul.f32 %v1557, %v1489
      %v1560 = vmul.f32 %v1557, %v1494
      %v1561 = vmul.f32 %v1557, %v1496
      %v1562 = vmul.f32 %v1557, %v1501
      %v1563 = vmul.f32 %v1557, %v1503
      %v1564 = vmul.f32 %v1557, %v1508
      %v1565 = vmul.f32 %v1557, %v1510
      %v1566 = vmul.f32 %v1557, %v1515
      %v1567 = vmul.f32 %v1557, %v1517
      %v1568 = vmul.f32 %v1557, %v1522
      %v1569 = vmul.f32 %v1557, %v1524
      %v1570 = vmul.f32 %v1557, %v1529
      %v1571 = vmul.f32 %v1557, %v1531
      %v1572 = vmul.f32 %v1557, %v1536
      %v1573 = vmul.f32 %v1557, %v1538
      %v1574 = vsel %vm1540, %v1487, %v1558
      %v1575 = vsel %vm1541, %v1489, %v1559
      %v1576 = vsel %vm1542, %v1494, %v1560
      %v1577 = vsel %vm1543, %v1496, %v1561
      %v1578 = vsel %vm1544, %v1501, %v1562
      %v1579 = vsel %vm1545, %v1503, %v1563
      %v1580 = vsel %vm1546, %v1508, %v1564
      %v1581 = vsel %vm1547, %v1510, %v1565
      %v1582 = vsel %vm1548, %v1515, %v1566
      %v1583 = vsel %vm1549, %v1517, %v1567
      %v1584 = vsel %vm1550, %v1522, %v1568
      %v1585 = vsel %vm1551, %v1524, %v1569
      %v1586 = vsel %vm1552, %v1529, %v1570
      %v1587 = vsel %vm1553, %v1531, %v1571
      %v1588 = vsel %vm1554, %v1536, %v1572
      %v1589 = vsel %vm1555, %v1538, %v1573
      %v1590 = vld [vmem:[%s5] sm:$0xff]
      %v1591 = vld [vmem:[%s5 + $0x8] sm:$0xff]
      %v1592 = vld [vmem:[%s5 + $0x10] sm:$0xff]
      %v1593 = vld [vmem:[%s5 + $0x18] sm:$0xff]
      %v1594 = vld [vmem:[%s6] sm:$0xff]
      %v1595 = vld [vmem:[%s6 + $0x8] sm:$0xff]
      %v1596 = vld [vmem:[%s6 + $0x10] sm:$0xff]
      %v1597 = vld [vmem:[%s6 + $0x18] sm:$0xff]
      %1599 = vset.pattern.permute.xlu0 0
      %1600 = vperm.xlu0 %1599, %v1594
      %v1601 = vpop.permute.xlu0 %1600
      %1604 = vset.pattern.permute.xlu0 0
      %1605 = vperm.xlu0 %1604, %v1595
      %v1606 = vpop.permute.xlu0 %1605
      %1609 = vset.pattern.permute.xlu0 0
      %1610 = vperm.xlu0 %1609, %v1596
      %v1611 = vpop.permute.xlu0 %1610
      %1614 = vset.pattern.permute.xlu0 0
      %1615 = vperm.xlu0 %1614, %v1597
      %v1616 = vpop.permute.xlu0 %1615
      %vm1618 = vcmask 523264
      %v1620 = vsel %vm1618, %v1590, 0
      %v1623 = vsel %vm1618, %v1591, 0
      %v1626 = vsel %vm1618, %v1592, 0
      %v1629 = vsel %vm1618, %v1593, 0
      %v1631 = vand.u32 %v1575, 4294901760
      %1632 = vmatprep.subr.mxu0 %v1631
      %v1633 = vand.u32 %v1574, 4294901760
      %1634 = vmatpush1.msra.mxu0 %v1633
      %v1635 = vand.u32 %v1577, 4294901760
      %1636 = vmatprep.subr.mxu0 %v1635
      %v1637 = vand.u32 %v1576, 4294901760
      %1638 = vmatpush1.msra.mxu0 %v1637
      %v1639 = vand.u32 %v1579, 4294901760
      %1640 = vmatprep.subr.mxu0 %v1639
      %v1641 = vand.u32 %v1578, 4294901760
      %1642 = vmatpush1.msra.mxu0 %v1641
      %v1643 = vand.u32 %v1581, 4294901760
      %1644 = vmatprep.subr.mxu0 %v1643
      %v1645 = vand.u32 %v1580, 4294901760
      %1646 = vmatpush1.msra.mxu0 %v1645
      %v1647 = vand.u32 %v1583, 4294901760
      %1648 = vmatprep.subr.mxu0 %v1647
      %v1649 = vand.u32 %v1582, 4294901760
      %1650 = vmatpush1.msra.mxu0 %v1649
      %v1651 = vand.u32 %v1585, 4294901760
      %1652 = vmatprep.subr.mxu0 %v1651
      %v1653 = vand.u32 %v1584, 4294901760
      %1654 = vmatpush1.msra.mxu0 %v1653
      %v1655 = vand.u32 %v1587, 4294901760
      %1656 = vmatprep.subr.mxu0 %v1655
      %v1657 = vand.u32 %v1586, 4294901760
      %1658 = vmatpush1.msra.mxu0 %v1657
      %v1659 = vand.u32 %v1589, 4294901760
      %1660 = vmatprep.subr.mxu0 %v1659
      %v1661 = vand.u32 %v1588, 4294901760
      %1662 = vmatpush1.msra.mxu0 %v1661
      %1663 = vmatprep.subr.mxu0 0.0
      %1664 = vmatpush1.msra.mxu0 0.0
      %1665 = vmatprep.subr.mxu0 0.0
      %1666 = vmatpush1.msra.mxu0 0.0
      %1667 = vmatprep.subr.mxu0 0.0
      %1668 = vmatpush1.msra.mxu0 0.0
      %1669 = vmatprep.subr.mxu0 0.0
      %1670 = vmatpush1.msra.mxu0 0.0
      %1671 = vmatprep.subr.mxu0 0.0
      %1672 = vmatpush1.msra.mxu0 0.0
      %1673 = vmatprep.subr.mxu0 0.0
      %1674 = vmatpush1.msra.mxu0 0.0
      %1675 = vmatprep.subr.mxu0 0.0
      %1676 = vmatpush1.msra.mxu0 0.0
      %1677 = vmatprep.subr.mxu0 0.0
      %1678 = vmatpush1.msra.mxu0 0.0
      %1679 = vmatprep.subr.mxu0 0.0
      %1680 = vmatpush1.msra.mxu0 0.0
      %1681 = vmatprep.subr.mxu0 0.0
      %1682 = vmatpush1.msra.mxu0 0.0
      %1683 = vmatprep.subr.mxu0 0.0
      %1684 = vmatpush1.msra.mxu0 0.0
      %1685 = vmatprep.subr.mxu0 0.0
      %1686 = vmatpush1.msra.mxu0 0.0
      %1687 = vmatprep.subr.mxu0 0.0
      %1688 = vmatpush1.msra.mxu0 0.0
      %1689 = vmatprep.subr.mxu0 0.0
      %1690 = vmatpush1.msra.mxu0 0.0
      %1691 = vmatprep.subr.mxu0 0.0
      %1692 = vmatpush1.msra.mxu0 0.0
      %1693 = vmatprep.subr.mxu0 0.0
      %1694 = vmatpush1.msra.mxu0 0.0
      %1695 = vmatprep.subr.mxu0 0.0
      %1696 = vmatpush1.msra.mxu0 0.0
      %1697 = vmatprep.subr.mxu0 0.0
      %1698 = vmatpush1.msra.mxu0 0.0
      %1699 = vmatprep.subr.mxu0 0.0
      %1700 = vmatpush1.msra.mxu0 0.0
      %1701 = vmatprep.subr.mxu0 0.0
      %1702 = vmatpush1.msra.mxu0 0.0
      %1703 = vmatprep.subr.mxu0 0.0
      %1704 = vmatpush1.msra.mxu0 0.0
      %1705 = vmatprep.subr.mxu0 0.0
      %1706 = vmatpush1.msra.mxu0 0.0
      %1707 = vmatprep.subr.mxu0 0.0
      %1708 = vmatpush1.msra.mxu0 0.0
      %1709 = vmatprep.subr.mxu0 0.0
      %1710 = vmatpush1.msra.mxu0 0.0
      %1711 = vmatprep.mubr.f32.mxu0 0.0
      %v1712 = vand.u32 %v1620, 4294901760
      %v1713 = vsub.f32 %v1620, %v1712
      %v1714 = vand.u32 %v1713, 4294901760
      %v1715 = vsub.f32 %v1713, %v1714
      %v1716 = vand.u32 %v1715, 4294901760
      %1717 = vmatmul.mubr.f32.gmra.mrb[0].mxu0 %v1716
      %v1718 = vpop.f32.mrb[0].mxu0
      %v1719 = vadd.f32 %v1601, %v1718
      %v1720 = vpop.f32.mrb[0].mxu0
      %v1721 = vadd.f32 %v1601, %v1720
      %1722 = vmatprep.mubr.f32.mxu0 0.0
      %v1723 = vand.u32 %v1623, 4294901760
      %v1724 = vsub.f32 %v1623, %v1723
      %v1725 = vand.u32 %v1724, 4294901760
      %v1726 = vsub.f32 %v1724, %v1725
      %v1727 = vand.u32 %v1726, 4294901760
      %1728 = vmatmul.mubr.f32.gmra.mrb[0].mxu0 %v1727
      %v1729 = vpop.f32.mrb[0].mxu0
      %v1730 = vadd.f32 %v1606, %v1729
      %v1731 = vpop.f32.mrb[0].mxu0
      %v1732 = vadd.f32 %v1606, %v1731
      %1733 = vmatprep.mubr.f32.mxu0 0.0
      %v1734 = vand.u32 %v1626, 4294901760
      %v1735 = vsub.f32 %v1626, %v1734
      %v1736 = vand.u32 %v1735, 4294901760
      %v1737 = vsub.f32 %v1735, %v1736
      %v1738 = vand.u32 %v1737, 4294901760
      %1739 = vmatmul.mubr.f32.gmra.mrb[0].mxu0 %v1738
      %v1740 = vpop.f32.mrb[0].mxu0
      %v1741 = vadd.f32 %v1611, %v1740
      %v1742 = vpop.f32.mrb[0].mxu0
      %v1743 = vadd.f32 %v1611, %v1742
      %1744 = vmatprep.mubr.f32.mxu0 0.0
      %v1745 = vand.u32 %v1629, 4294901760
      %v1746 = vsub.f32 %v1629, %v1745
      %v1747 = vand.u32 %v1746, 4294901760
      %v1748 = vsub.f32 %v1746, %v1747
      %v1749 = vand.u32 %v1748, 4294901760
      %1750 = vmatmul.mubr.f32.gmra.mrb[0].mxu0 %v1749
      %v1751 = vpop.f32.mrb[0].mxu0
      %v1752 = vadd.f32 %v1616, %v1751
      %v1753 = vpop.f32.mrb[0].mxu0
      %v1754 = vadd.f32 %v1616, %v1753
      %1755 = vdwg.mxu0
      %v1756 = vand.u32 %v1575, 4294901760
      %v1757 = vsub.f32 %v1575, %v1756
      %v1758 = vand.u32 %v1757, 4294901760
      %v1759 = vsub.f32 %v1757, %v1758
      %v1760 = vand.u32 %v1759, 4294901760
      %1761 = vmatprep.subr.mxu0 %v1760
      %v1762 = vand.u32 %v1574, 4294901760
      %v1763 = vsub.f32 %v1574, %v1762
      %v1764 = vand.u32 %v1763, 4294901760
      %v1765 = vsub.f32 %v1763, %v1764
      %v1766 = vand.u32 %v1765, 4294901760
      %1767 = vmatpush1.msra.mxu0 %v1766
      %v1768 = vand.u32 %v1577, 4294901760
      %v1769 = vsub.f32 %v1577, %v1768
      %v1770 = vand.u32 %v1769, 4294901760
      %v1771 = vsub.f32 %v1769, %v1770
      %v1772 = vand.u32 %v1771, 4294901760
      %1773 = vmatprep.subr.mxu0 %v1772
      %v1774 = vand.u32 %v1576, 4294901760
      %v1775 = vsub.f32 %v1576, %v1774
      %v1776 = vand.u32 %v1775, 4294901760
      %v1777 = vsub.f32 %v1775, %v1776
      %v1778 = vand.u32 %v1777, 4294901760
      %1779 = vmatpush1.msra.mxu0 %v1778
      %v1780 = vand.u32 %v1579, 4294901760
      %v1781 = vsub.f32 %v1579, %v1780
      %v1782 = vand.u32 %v1781, 4294901760
      %v1783 = vsub.f32 %v1781, %v1782
      %v1784 = vand.u32 %v1783, 4294901760
      %1785 = vmatprep.subr.mxu0 %v1784
      %v1786 = vand.u32 %v1578, 4294901760
      %v1787 = vsub.f32 %v1578, %v1786
      %v1788 = vand.u32 %v1787, 4294901760
      %v1789 = vsub.f32 %v1787, %v1788
      %v1790 = vand.u32 %v1789, 4294901760
      %1791 = vmatpush1.msra.mxu0 %v1790
      %v1792 = vand.u32 %v1581, 4294901760
      %v1793 = vsub.f32 %v1581, %v1792
      %v1794 = vand.u32 %v1793, 4294901760
      %v1795 = vsub.f32 %v1793, %v1794
      %v1796 = vand.u32 %v1795, 4294901760
      %1797 = vmatprep.subr.mxu0 %v1796
      %v1798 = vand.u32 %v1580, 4294901760
      %v1799 = vsub.f32 %v1580, %v1798
      %v1800 = vand.u32 %v1799, 4294901760
      %v1801 = vsub.f32 %v1799, %v1800
      %v1802 = vand.u32 %v1801, 4294901760
      %1803 = vmatpush1.msra.mxu0 %v1802
      %v1804 = vand.u32 %v1583, 4294901760
      %v1805 = vsub.f32 %v1583, %v1804
      %v1806 = vand.u32 %v1805, 4294901760
      %v1807 = vsub.f32 %v1805, %v1806
      %v1808 = vand.u32 %v1807, 4294901760
      %1809 = vmatprep.subr.mxu0 %v1808
      %v1810 = vand.u32 %v1582, 4294901760
      %v1811 = vsub.f32 %v1582, %v1810
      %v1812 = vand.u32 %v1811, 4294901760
      %v1813 = vsub.f32 %v1811, %v1812
      %v1814 = vand.u32 %v1813, 4294901760
      %1815 = vmatpush1.msra.mxu0 %v1814
      %v1816 = vand.u32 %v1585, 4294901760
      %v1817 = vsub.f32 %v1585, %v1816
      %v1818 = vand.u32 %v1817, 4294901760
      %v1819 = vsub.f32 %v1817, %v1818
      %v1820 = vand.u32 %v1819, 4294901760
      %1821 = vmatprep.subr.mxu0 %v1820
      %v1822 = vand.u32 %v1584, 4294901760
      %v1823 = vsub.f32 %v1584, %v1822
      %v1824 = vand.u32 %v1823, 4294901760
      %v1825 = vsub.f32 %v1823, %v1824
      %v1826 = vand.u32 %v1825, 4294901760
      %1827 = vmatpush1.msra.mxu0 %v1826
      %v1828 = vand.u32 %v1587, 4294901760
      %v1829 = vsub.f32 %v1587, %v1828
      %v1830 = vand.u32 %v1829, 4294901760
      %v1831 = vsub.f32 %v1829, %v1830
      %v1832 = vand.u32 %v1831, 4294901760
      %1833 = vmatprep.subr.mxu0 %v1832
      %v1834 = vand.u32 %v1586, 4294901760
      %v1835 = vsub.f32 %v1586, %v1834
      %v1836 = vand.u32 %v1835, 4294901760
      %v1837 = vsub.f32 %v1835, %v1836
      %v1838 = vand.u32 %v1837, 4294901760
      %1839 = vmatpush1.msra.mxu0 %v1838
      %v1840 = vand.u32 %v1589, 4294901760
      %v1841 = vsub.f32 %v1589, %v1840
      %v1842 = vand.u32 %v1841, 4294901760
      %v1843 = vsub.f32 %v1841, %v1842
      %v1844 = vand.u32 %v1843, 4294901760
      %1845 = vmatprep.subr.mxu0 %v1844
      %v1846 = vand.u32 %v1588, 4294901760
      %v1847 = vsub.f32 %v1588, %v1846
      %v1848 = vand.u32 %v1847, 4294901760
      %v1849 = vsub.f32 %v1847, %v1848
      %v1850 = vand.u32 %v1849, 4294901760
      %1851 = vmatpush1.msra.mxu0 %v1850
      %1852 = vmatprep.subr.mxu0 0.0
      %1853 = vmatpush1.msra.mxu0 0.0
      %1854 = vmatprep.subr.mxu0 0.0
      %1855 = vmatpush1.msra.mxu0 0.0
      %1856 = vmatprep.subr.mxu0 0.0
      %1857 = vmatpush1.msra.mxu0 0.0
      %1858 = vmatprep.subr.mxu0 0.0
      %1859 = vmatpush1.msra.mxu0 0.0
      %1860 = vmatprep.subr.mxu0 0.0
      %1861 = vmatpush1.msra.mxu0 0.0
      %1862 = vmatprep.subr.mxu0 0.0
      %1863 = vmatpush1.msra.mxu0 0.0
      %1864 = vmatprep.subr.mxu0 0.0
      %1865 = vmatpush1.msra.mxu0 0.0
      %1866 = vmatprep.subr.mxu0 0.0
      %1867 = vmatpush1.msra.mxu0 0.0
      %1868 = vmatprep.subr.mxu0 0.0
      %1869 = vmatpush1.msra.mxu0 0.0
      %1870 = vmatprep.subr.mxu0 0.0
      %1871 = vmatpush1.msra.mxu0 0.0
      %1872 = vmatprep.subr.mxu0 0.0
      %1873 = vmatpush1.msra.mxu0 0.0
      %1874 = vmatprep.subr.mxu0 0.0
      %1875 = vmatpush1.msra.mxu0 0.0
      %1876 = vmatprep.subr.mxu0 0.0
      %1877 = vmatpush1.msra.mxu0 0.0
      %1878 = vmatprep.subr.mxu0 0.0
      %1879 = vmatpush1.msra.mxu0 0.0
      %1880 = vmatprep.subr.mxu0 0.0
      %1881 = vmatpush1.msra.mxu0 0.0
      %1882 = vmatprep.subr.mxu0 0.0
      %1883 = vmatpush1.msra.mxu0 0.0
      %1884 = vmatprep.subr.mxu0 0.0
      %1885 = vmatpush1.msra.mxu0 0.0
      %1886 = vmatprep.subr.mxu0 0.0
      %1887 = vmatpush1.msra.mxu0 0.0
      %1888 = vmatprep.subr.mxu0 0.0
      %1889 = vmatpush1.msra.mxu0 0.0
      %1890 = vmatprep.subr.mxu0 0.0
      %1891 = vmatpush1.msra.mxu0 0.0
      %1892 = vmatprep.subr.mxu0 0.0
      %1893 = vmatpush1.msra.mxu0 0.0
      %1894 = vmatprep.subr.mxu0 0.0
      %1895 = vmatpush1.msra.mxu0 0.0
      %1896 = vmatprep.subr.mxu0 0.0
      %1897 = vmatpush1.msra.mxu0 0.0
      %1898 = vmatprep.subr.mxu0 0.0
      %1899 = vmatpush1.msra.mxu0 0.0
      %1900 = vmatprep.mubr.f32.mxu0 0.0
      %v1901 = vand.u32 %v1620, 4294901760
      %1902 = vmatmul.mubr.f32.gmra.mrb[0].mxu0 %v1901
      %v1903 = vpop.f32.mrb[0].mxu0
      %v1904 = vadd.f32 %v1719, %v1903
      %v1905 = vpop.f32.mrb[0].mxu0
      %v1906 = vadd.f32 %v1721, %v1905
      %1907 = vmatprep.mubr.f32.mxu0 0.0
      %v1908 = vand.u32 %v1623, 4294901760
      %1909 = vmatmul.mubr.f32.gmra.mrb[0].mxu0 %v1908
      %v1910 = vpop.f32.mrb[0].mxu0
      %v1911 = vadd.f32 %v1730, %v1910
      %v1912 = vpop.f32.mrb[0].mxu0
      %v1913 = vadd.f32 %v1732, %v1912
      %1914 = vmatprep.mubr.f32.mxu0 0.0
      %v1915 = vand.u32 %v1626, 4294901760
      %1916 = vmatmul.mubr.f32.gmra.mrb[0].mxu0 %v1915
      %v1917 = vpop.f32.mrb[0].mxu0
      %v1918 = vadd.f32 %v1741, %v1917
      %v1919 = vpop.f32.mrb[0].mxu0
      %v1920 = vadd.f32 %v1743, %v1919
      %1921 = vmatprep.mubr.f32.mxu0 0.0
      %v1922 = vand.u32 %v1629, 4294901760
      %1923 = vmatmul.mubr.f32.gmra.mrb[0].mxu0 %v1922
      %v1924 = vpop.f32.mrb[0].mxu0
      %v1925 = vadd.f32 %v1752, %v1924
      %v1926 = vpop.f32.mrb[0].mxu0
      %v1927 = vadd.f32 %v1754, %v1926
      %1928 = vdwg.mxu0
      %v1929 = vand.u32 %v1575, 4294901760
      %v1930 = vsub.f32 %v1575, %v1929
      %1931 = vmatprep.subr.mxu0 %v1930
      %v1932 = vand.u32 %v1574, 4294901760
      %v1933 = vsub.f32 %v1574, %v1932
      %1934 = vmatpush1.msra.mxu0 %v1933
      %v1935 = vand.u32 %v1577, 4294901760
      %v1936 = vsub.f32 %v1577, %v1935
      %1937 = vmatprep.subr.mxu0 %v1936
      %v1938 = vand.u32 %v1576, 4294901760
      %v1939 = vsub.f32 %v1576, %v1938
      %1940 = vmatpush1.msra.mxu0 %v1939
      %v1941 = vand.u32 %v1579, 4294901760
      %v1942 = vsub.f32 %v1579, %v1941
      %1943 = vmatprep.subr.mxu0 %v1942
      %v1944 = vand.u32 %v1578, 4294901760
      %v1945 = vsub.f32 %v1578, %v1944
      %1946 = vmatpush1.msra.mxu0 %v1945
      %v1947 = vand.u32 %v1581, 4294901760
      %v1948 = vsub.f32 %v1581, %v1947
      %1949 = vmatprep.subr.mxu0 %v1948
      %v1950 = vand.u32 %v1580, 4294901760
      %v1951 = vsub.f32 %v1580, %v1950
      %1952 = vmatpush1.msra.mxu0 %v1951
      %v1953 = vand.u32 %v1583, 4294901760
      %v1954 = vsub.f32 %v1583, %v1953
      %1955 = vmatprep.subr.mxu0 %v1954
      %v1956 = vand.u32 %v1582, 4294901760
      %v1957 = vsub.f32 %v1582, %v1956
      %1958 = vmatpush1.msra.mxu0 %v1957
      %v1959 = vand.u32 %v1585, 4294901760
      %v1960 = vsub.f32 %v1585, %v1959
      %1961 = vmatprep.subr.mxu0 %v1960
      %v1962 = vand.u32 %v1584, 4294901760
      %v1963 = vsub.f32 %v1584, %v1962
      %1964 = vmatpush1.msra.mxu0 %v1963
      %v1965 = vand.u32 %v1587, 4294901760
      %v1966 = vsub.f32 %v1587, %v1965
      %1967 = vmatprep.subr.mxu0 %v1966
      %v1968 = vand.u32 %v1586, 4294901760
      %v1969 = vsub.f32 %v1586, %v1968
      %1970 = vmatpush1.msra.mxu0 %v1969
      %v1971 = vand.u32 %v1589, 4294901760
      %v1972 = vsub.f32 %v1589, %v1971
      %1973 = vmatprep.subr.mxu0 %v1972
      %v1974 = vand.u32 %v1588, 4294901760
      %v1975 = vsub.f32 %v1588, %v1974
      %1976 = vmatpush1.msra.mxu0 %v1975
      %1977 = vmatprep.subr.mxu0 0.0
      %1978 = vmatpush1.msra.mxu0 0.0
      %1979 = vmatprep.subr.mxu0 0.0
      %1980 = vmatpush1.msra.mxu0 0.0
      %1981 = vmatprep.subr.mxu0 0.0
      %1982 = vmatpush1.msra.mxu0 0.0
      %1983 = vmatprep.subr.mxu0 0.0
      %1984 = vmatpush1.msra.mxu0 0.0
      %1985 = vmatprep.subr.mxu0 0.0
      %1986 = vmatpush1.msra.mxu0 0.0
      %1987 = vmatprep.subr.mxu0 0.0
      %1988 = vmatpush1.msra.mxu0 0.0
      %1989 = vmatprep.subr.mxu0 0.0
      %1990 = vmatpush1.msra.mxu0 0.0
      %1991 = vmatprep.subr.mxu0 0.0
      %1992 = vmatpush1.msra.mxu0 0.0
      %1993 = vmatprep.subr.mxu0 0.0
      %1994 = vmatpush1.msra.mxu0 0.0
      %1995 = vmatprep.subr.mxu0 0.0
      %1996 = vmatpush1.msra.mxu0 0.0
      %1997 = vmatprep.subr.mxu0 0.0
      %1998 = vmatpush1.msra.mxu0 0.0
      %1999 = vmatprep.subr.mxu0 0.0
      %2000 = vmatpush1.msra.mxu0 0.0
      %2001 = vmatprep.subr.mxu0 0.0
      %2002 = vmatpush1.msra.mxu0 0.0
      %2003 = vmatprep.subr.mxu0 0.0
      %2004 = vmatpush1.msra.mxu0 0.0
      %2005 = vmatprep.subr.mxu0 0.0
      %2006 = vmatpush1.msra.mxu0 0.0
      %2007 = vmatprep.subr.mxu0 0.0
      %2008 = vmatpush1.msra.mxu0 0.0
      %2009 = vmatprep.subr.mxu0 0.0
      %2010 = vmatpush1.msra.mxu0 0.0
      %2011 = vmatprep.subr.mxu0 0.0
      %2012 = vmatpush1.msra.mxu0 0.0
      %2013 = vmatprep.subr.mxu0 0.0
      %2014 = vmatpush1.msra.mxu0 0.0
      %2015 = vmatprep.subr.mxu0 0.0
      %2016 = vmatpush1.msra.mxu0 0.0
      %2017 = vmatprep.subr.mxu0 0.0
      %2018 = vmatpush1.msra.mxu0 0.0
      %2019 = vmatprep.subr.mxu0 0.0
      %2020 = vmatpush1.msra.mxu0 0.0
      %2021 = vmatprep.subr.mxu0 0.0
      %2022 = vmatpush1.msra.mxu0 0.0
      %2023 = vmatprep.subr.mxu0 0.0
      %2024 = vmatpush1.msra.mxu0 0.0
      %2025 = vmatprep.mubr.f32.mxu0 0.0
      %v2026 = vand.u32 %v1620, 4294901760
      %v2027 = vsub.f32 %v1620, %v2026
      %2028 = vmatmul.mubr.f32.gmra.mrb[0].mxu0 %v2027
      %v2029 = vpop.f32.mrb[0].mxu0
      %v2030 = vadd.f32 %v1904, %v2029
      %v2031 = vpop.f32.mrb[0].mxu0
      %v2032 = vadd.f32 %v1906, %v2031
      %2033 = vmatprep.mubr.f32.mxu0 0.0
      %v2034 = vand.u32 %v1623, 4294901760
      %v2035 = vsub.f32 %v1623, %v2034
      %2036 = vmatmul.mubr.f32.gmra.mrb[0].mxu0 %v2035
      %v2037 = vpop.f32.mrb[0].mxu0
      %v2038 = vadd.f32 %v1911, %v2037
      %v2039 = vpop.f32.mrb[0].mxu0
      %v2040 = vadd.f32 %v1913, %v2039
      %2041 = vmatprep.mubr.f32.mxu0 0.0
      %v2042 = vand.u32 %v1626, 4294901760
      %v2043 = vsub.f32 %v1626, %v2042
      %2044 = vmatmul.mubr.f32.gmra.mrb[0].mxu0 %v2043
      %v2045 = vpop.f32.mrb[0].mxu0
      %v2046 = vadd.f32 %v1918, %v2045
      %v2047 = vpop.f32.mrb[0].mxu0
      %v2048 = vadd.f32 %v1920, %v2047
      %2049 = vmatprep.mubr.f32.mxu0 0.0
      %v2050 = vand.u32 %v1629, 4294901760
      %v2051 = vsub.f32 %v1629, %v2050
      %2052 = vmatmul.mubr.f32.gmra.mrb[0].mxu0 %v2051
      %v2053 = vpop.f32.mrb[0].mxu0
      %v2054 = vadd.f32 %v1925, %v2053
      %v2055 = vpop.f32.mrb[0].mxu0
      %v2056 = vadd.f32 %v1927, %v2055
      %2057 = vdwg.mxu0
      %v2058 = vand.u32 %v1575, 4294901760
      %2059 = vmatprep.subr.mxu0 %v2058
      %v2060 = vand.u32 %v1574, 4294901760
      %2061 = vmatpush1.msra.mxu0 %v2060
      %v2062 = vand.u32 %v1577, 4294901760
      %2063 = vmatprep.subr.mxu0 %v2062
      %v2064 = vand.u32 %v1576, 4294901760
      %2065 = vmatpush1.msra.mxu0 %v2064
      %v2066 = vand.u32 %v1579, 4294901760
      %2067 = vmatprep.subr.mxu0 %v2066
      %v2068 = vand.u32 %v1578, 4294901760
      %2069 = vmatpush1.msra.mxu0 %v2068
      %v2070 = vand.u32 %v1581, 4294901760
      %2071 = vmatprep.subr.mxu0 %v2070
      %v2072 = vand.u32 %v1580, 4294901760
      %2073 = vmatpush1.msra.mxu0 %v2072
      %v2074 = vand.u32 %v1583, 4294901760
      %2075 = vmatprep.subr.mxu0 %v2074
      %v2076 = vand.u32 %v1582, 4294901760
      %2077 = vmatpush1.msra.mxu0 %v2076
      %v2078 = vand.u32 %v1585, 4294901760
      %2079 = vmatprep.subr.mxu0 %v2078
      %v2080 = vand.u32 %v1584, 4294901760
      %2081 = vmatpush1.msra.mxu0 %v2080
      %v2082 = vand.u32 %v1587, 4294901760
      %2083 = vmatprep.subr.mxu0 %v2082
      %v2084 = vand.u32 %v1586, 4294901760
      %2085 = vmatpush1.msra.mxu0 %v2084
      %v2086 = vand.u32 %v1589, 4294901760
      %2087 = vmatprep.subr.mxu0 %v2086
      %v2088 = vand.u32 %v1588, 4294901760
      %2089 = vmatpush1.msra.mxu0 %v2088
      %2090 = vmatprep.subr.mxu0 0.0
      %2091 = vmatpush1.msra.mxu0 0.0
      %2092 = vmatprep.subr.mxu0 0.0
      %2093 = vmatpush1.msra.mxu0 0.0
      %2094 = vmatprep.subr.mxu0 0.0
      %2095 = vmatpush1.msra.mxu0 0.0
      %2096 = vmatprep.subr.mxu0 0.0
      %2097 = vmatpush1.msra.mxu0 0.0
      %2098 = vmatprep.subr.mxu0 0.0
      %2099 = vmatpush1.msra.mxu0 0.0
      %2100 = vmatprep.subr.mxu0 0.0
      %2101 = vmatpush1.msra.mxu0 0.0
      %2102 = vmatprep.subr.mxu0 0.0
      %2103 = vmatpush1.msra.mxu0 0.0
      %2104 = vmatprep.subr.mxu0 0.0
      %2105 = vmatpush1.msra.mxu0 0.0
      %2106 = vmatprep.subr.mxu0 0.0
      %2107 = vmatpush1.msra.mxu0 0.0
      %2108 = vmatprep.subr.mxu0 0.0
      %2109 = vmatpush1.msra.mxu0 0.0
      %2110 = vmatprep.subr.mxu0 0.0
      %2111 = vmatpush1.msra.mxu0 0.0
      %2112 = vmatprep.subr.mxu0 0.0
      %2113 = vmatpush1.msra.mxu0 0.0
      %2114 = vmatprep.subr.mxu0 0.0
      %2115 = vmatpush1.msra.mxu0 0.0
      %2116 = vmatprep.subr.mxu0 0.0
      %2117 = vmatpush1.msra.mxu0 0.0
      %2118 = vmatprep.subr.mxu0 0.0
      %2119 = vmatpush1.msra.mxu0 0.0
      %2120 = vmatprep.subr.mxu0 0.0
      %2121 = vmatpush1.msra.mxu0 0.0
      %2122 = vmatprep.subr.mxu0 0.0
      %2123 = vmatpush1.msra.mxu0 0.0
      %2124 = vmatprep.subr.mxu0 0.0
      %2125 = vmatpush1.msra.mxu0 0.0
      %2126 = vmatprep.subr.mxu0 0.0
      %2127 = vmatpush1.msra.mxu0 0.0
      %2128 = vmatprep.subr.mxu0 0.0
      %2129 = vmatpush1.msra.mxu0 0.0
      %2130 = vmatprep.subr.mxu0 0.0
      %2131 = vmatpush1.msra.mxu0 0.0
      %2132 = vmatprep.subr.mxu0 0.0
      %2133 = vmatpush1.msra.mxu0 0.0
      %2134 = vmatprep.subr.mxu0 0.0
      %2135 = vmatpush1.msra.mxu0 0.0
      %2136 = vmatprep.subr.mxu0 0.0
      %2137 = vmatpush1.msra.mxu0 0.0
      %2138 = vmatprep.mubr.f32.mxu0 0.0
      %v2139 = vand.u32 %v1620, 4294901760
      %v2140 = vsub.f32 %v1620, %v2139
      %v2141 = vand.u32 %v2140, 4294901760
      %2142 = vmatmul.mubr.f32.gmra.mrb[0].mxu0 %v2141
      %v2143 = vpop.f32.mrb[0].mxu0
      %v2144 = vadd.f32 %v2030, %v2143
      %v2145 = vpop.f32.mrb[0].mxu0
      %v2146 = vadd.f32 %v2032, %v2145
      %2147 = vmatprep.mubr.f32.mxu0 0.0
      %v2148 = vand.u32 %v1623, 4294901760
      %v2149 = vsub.f32 %v1623, %v2148
      %v2150 = vand.u32 %v2149, 4294901760
      %2151 = vmatmul.mubr.f32.gmra.mrb[0].mxu0 %v2150
      %v2152 = vpop.f32.mrb[0].mxu0
      %v2153 = vadd.f32 %v2038, %v2152
      %v2154 = vpop.f32.mrb[0].mxu0
      %v2155 = vadd.f32 %v2040, %v2154
      %2156 = vmatprep.mubr.f32.mxu0 0.0
      %v2157 = vand.u32 %v1626, 4294901760
      %v2158 = vsub.f32 %v1626, %v2157
      %v2159 = vand.u32 %v2158, 4294901760
      %2160 = vmatmul.mubr.f32.gmra.mrb[0].mxu0 %v2159
      %v2161 = vpop.f32.mrb[0].mxu0
      %v2162 = vadd.f32 %v2046, %v2161
      %v2163 = vpop.f32.mrb[0].mxu0
      %v2164 = vadd.f32 %v2048, %v2163
      %2165 = vmatprep.mubr.f32.mxu0 0.0
      %v2166 = vand.u32 %v1629, 4294901760
      %v2167 = vsub.f32 %v1629, %v2166
      %v2168 = vand.u32 %v2167, 4294901760
      %2169 = vmatmul.mubr.f32.gmra.mrb[0].mxu0 %v2168
      %v2170 = vpop.f32.mrb[0].mxu0
      %v2171 = vadd.f32 %v2054, %v2170
      %v2172 = vpop.f32.mrb[0].mxu0
      %v2173 = vadd.f32 %v2056, %v2172
      %2174 = vdwg.mxu0
      %v2175 = vand.u32 %v1575, 4294901760
      %v2176 = vsub.f32 %v1575, %v2175
      %v2177 = vand.u32 %v2176, 4294901760
      %2178 = vmatprep.subr.mxu0 %v2177
      %v2179 = vand.u32 %v1574, 4294901760
      %v2180 = vsub.f32 %v1574, %v2179
      %v2181 = vand.u32 %v2180, 4294901760
      %2182 = vmatpush1.msra.mxu0 %v2181
      %v2183 = vand.u32 %v1577, 4294901760
      %v2184 = vsub.f32 %v1577, %v2183
      %v2185 = vand.u32 %v2184, 4294901760
      %2186 = vmatprep.subr.mxu0 %v2185
      %v2187 = vand.u32 %v1576, 4294901760
      %v2188 = vsub.f32 %v1576, %v2187
      %v2189 = vand.u32 %v2188, 4294901760
      %2190 = vmatpush1.msra.mxu0 %v2189
      %v2191 = vand.u32 %v1579, 4294901760
      %v2192 = vsub.f32 %v1579, %v2191
      %v2193 = vand.u32 %v2192, 4294901760
      %2194 = vmatprep.subr.mxu0 %v2193
      %v2195 = vand.u32 %v1578, 4294901760
      %v2196 = vsub.f32 %v1578, %v2195
      %v2197 = vand.u32 %v2196, 4294901760
      %2198 = vmatpush1.msra.mxu0 %v2197
      %v2199 = vand.u32 %v1581, 4294901760
      %v2200 = vsub.f32 %v1581, %v2199
      %v2201 = vand.u32 %v2200, 4294901760
      %2202 = vmatprep.subr.mxu0 %v2201
      %v2203 = vand.u32 %v1580, 4294901760
      %v2204 = vsub.f32 %v1580, %v2203
      %v2205 = vand.u32 %v2204, 4294901760
      %2206 = vmatpush1.msra.mxu0 %v2205
      %v2207 = vand.u32 %v1583, 4294901760
      %v2208 = vsub.f32 %v1583, %v2207
      %v2209 = vand.u32 %v2208, 4294901760
      %2210 = vmatprep.subr.mxu0 %v2209
      %v2211 = vand.u32 %v1582, 4294901760
      %v2212 = vsub.f32 %v1582, %v2211
      %v2213 = vand.u32 %v2212, 4294901760
      %2214 = vmatpush1.msra.mxu0 %v2213
      %v2215 = vand.u32 %v1585, 4294901760
      %v2216 = vsub.f32 %v1585, %v2215
      %v2217 = vand.u32 %v2216, 4294901760
      %2218 = vmatprep.subr.mxu0 %v2217
      %v2219 = vand.u32 %v1584, 4294901760
      %v2220 = vsub.f32 %v1584, %v2219
      %v2221 = vand.u32 %v2220, 4294901760
      %2222 = vmatpush1.msra.mxu0 %v2221
      %v2223 = vand.u32 %v1587, 4294901760
      %v2224 = vsub.f32 %v1587, %v2223
      %v2225 = vand.u32 %v2224, 4294901760
      %2226 = vmatprep.subr.mxu0 %v2225
      %v2227 = vand.u32 %v1586, 4294901760
      %v2228 = vsub.f32 %v1586, %v2227
      %v2229 = vand.u32 %v2228, 4294901760
      %2230 = vmatpush1.msra.mxu0 %v2229
      %v2231 = vand.u32 %v1589, 4294901760
      %v2232 = vsub.f32 %v1589, %v2231
      %v2233 = vand.u32 %v2232, 4294901760
      %2234 = vmatprep.subr.mxu0 %v2233
      %v2235 = vand.u32 %v1588, 4294901760
      %v2236 = vsub.f32 %v1588, %v2235
      %v2237 = vand.u32 %v2236, 4294901760
      %2238 = vmatpush1.msra.mxu0 %v2237
      %2239 = vmatprep.subr.mxu0 0.0
      %2240 = vmatpush1.msra.mxu0 0.0
      %2241 = vmatprep.subr.mxu0 0.0
      %2242 = vmatpush1.msra.mxu0 0.0
      %2243 = vmatprep.subr.mxu0 0.0
      %2244 = vmatpush1.msra.mxu0 0.0
      %2245 = vmatprep.subr.mxu0 0.0
      %2246 = vmatpush1.msra.mxu0 0.0
      %2247 = vmatprep.subr.mxu0 0.0
      %2248 = vmatpush1.msra.mxu0 0.0
      %2249 = vmatprep.subr.mxu0 0.0
      %2250 = vmatpush1.msra.mxu0 0.0
      %2251 = vmatprep.subr.mxu0 0.0
      %2252 = vmatpush1.msra.mxu0 0.0
      %2253 = vmatprep.subr.mxu0 0.0
      %2254 = vmatpush1.msra.mxu0 0.0
      %2255 = vmatprep.subr.mxu0 0.0
      %2256 = vmatpush1.msra.mxu0 0.0
      %2257 = vmatprep.subr.mxu0 0.0
      %2258 = vmatpush1.msra.mxu0 0.0
      %2259 = vmatprep.subr.mxu0 0.0
      %2260 = vmatpush1.msra.mxu0 0.0
      %2261 = vmatprep.subr.mxu0 0.0
      %2262 = vmatpush1.msra.mxu0 0.0
      %2263 = vmatprep.subr.mxu0 0.0
      %2264 = vmatpush1.msra.mxu0 0.0
      %2265 = vmatprep.subr.mxu0 0.0
      %2266 = vmatpush1.msra.mxu0 0.0
      %2267 = vmatprep.subr.mxu0 0.0
      %2268 = vmatpush1.msra.mxu0 0.0
      %2269 = vmatprep.subr.mxu0 0.0
      %2270 = vmatpush1.msra.mxu0 0.0
      %2271 = vmatprep.subr.mxu0 0.0
      %2272 = vmatpush1.msra.mxu0 0.0
      %2273 = vmatprep.subr.mxu0 0.0
      %2274 = vmatpush1.msra.mxu0 0.0
      %2275 = vmatprep.subr.mxu0 0.0
      %2276 = vmatpush1.msra.mxu0 0.0
      %2277 = vmatprep.subr.mxu0 0.0
      %2278 = vmatpush1.msra.mxu0 0.0
      %2279 = vmatprep.subr.mxu0 0.0
      %2280 = vmatpush1.msra.mxu0 0.0
      %2281 = vmatprep.subr.mxu0 0.0
      %2282 = vmatpush1.msra.mxu0 0.0
      %2283 = vmatprep.subr.mxu0 0.0
      %2284 = vmatpush1.msra.mxu0 0.0
      %2285 = vmatprep.subr.mxu0 0.0
      %2286 = vmatpush1.msra.mxu0 0.0
      %2287 = vmatprep.mubr.f32.mxu0 0.0
      %v2288 = vand.u32 %v1620, 4294901760
      %2289 = vmatmul.mubr.f32.gmra.mrb[0].mxu0 %v2288
      %v2290 = vpop.f32.mrb[0].mxu0
      %v2291 = vadd.f32 %v2144, %v2290
      %v2292 = vpop.f32.mrb[0].mxu0
      %v2293 = vadd.f32 %v2146, %v2292
      %2294 = vmatprep.mubr.f32.mxu0 0.0
      %v2295 = vand.u32 %v1623, 4294901760
      %2296 = vmatmul.mubr.f32.gmra.mrb[0].mxu0 %v2295
      %v2297 = vpop.f32.mrb[0].mxu0
      %v2298 = vadd.f32 %v2153, %v2297
      %v2299 = vpop.f32.mrb[0].mxu0
      %v2300 = vadd.f32 %v2155, %v2299
      %2301 = vmatprep.mubr.f32.mxu0 0.0
      %v2302 = vand.u32 %v1626, 4294901760
      %2303 = vmatmul.mubr.f32.gmra.mrb[0].mxu0 %v2302
      %v2304 = vpop.f32.mrb[0].mxu0
      %v2305 = vadd.f32 %v2162, %v2304
      %v2306 = vpop.f32.mrb[0].mxu0
      %v2307 = vadd.f32 %v2164, %v2306
      %2308 = vmatprep.mubr.f32.mxu0 0.0
      %v2309 = vand.u32 %v1629, 4294901760
      %2310 = vmatmul.mubr.f32.gmra.mrb[0].mxu0 %v2309
      %v2311 = vpop.f32.mrb[0].mxu0
      %v2312 = vadd.f32 %v2171, %v2311
      %v2313 = vpop.f32.mrb[0].mxu0
      %v2314 = vadd.f32 %v2173, %v2313
      %2315 = vdwg.mxu0
      %v2316 = vand.u32 %v1575, 4294901760
      %2317 = vmatprep.subr.mxu0 %v2316
      %v2318 = vand.u32 %v1574, 4294901760
      %2319 = vmatpush1.msra.mxu0 %v2318
      %v2320 = vand.u32 %v1577, 4294901760
      %2321 = vmatprep.subr.mxu0 %v2320
      %v2322 = vand.u32 %v1576, 4294901760
      %2323 = vmatpush1.msra.mxu0 %v2322
      %v2324 = vand.u32 %v1579, 4294901760
      %2325 = vmatprep.subr.mxu0 %v2324
      %v2326 = vand.u32 %v1578, 4294901760
      %2327 = vmatpush1.msra.mxu0 %v2326
      %v2328 = vand.u32 %v1581, 4294901760
      %2329 = vmatprep.subr.mxu0 %v2328
      %v2330 = vand.u32 %v1580, 4294901760
      %2331 = vmatpush1.msra.mxu0 %v2330
      %v2332 = vand.u32 %v1583, 4294901760
      %2333 = vmatprep.subr.mxu0 %v2332
      %v2334 = vand.u32 %v1582, 4294901760
      %2335 = vmatpush1.msra.mxu0 %v2334
      %v2336 = vand.u32 %v1585, 4294901760
      %2337 = vmatprep.subr.mxu0 %v2336
      %v2338 = vand.u32 %v1584, 4294901760
      %2339 = vmatpush1.msra.mxu0 %v2338
      %v2340 = vand.u32 %v1587, 4294901760
      %2341 = vmatprep.subr.mxu0 %v2340
      %v2342 = vand.u32 %v1586, 4294901760
      %2343 = vmatpush1.msra.mxu0 %v2342
      %v2344 = vand.u32 %v1589, 4294901760
      %2345 = vmatprep.subr.mxu0 %v2344
      %v2346 = vand.u32 %v1588, 4294901760
      %2347 = vmatpush1.msra.mxu0 %v2346
      %2348 = vmatprep.subr.mxu0 0.0
      %2349 = vmatpush1.msra.mxu0 0.0
      %2350 = vmatprep.subr.mxu0 0.0
      %2351 = vmatpush1.msra.mxu0 0.0
      %2352 = vmatprep.subr.mxu0 0.0
      %2353 = vmatpush1.msra.mxu0 0.0
      %2354 = vmatprep.subr.mxu0 0.0
      %2355 = vmatpush1.msra.mxu0 0.0
      %2356 = vmatprep.subr.mxu0 0.0
      %2357 = vmatpush1.msra.mxu0 0.0
      %2358 = vmatprep.subr.mxu0 0.0
      %2359 = vmatpush1.msra.mxu0 0.0
      %2360 = vmatprep.subr.mxu0 0.0
      %2361 = vmatpush1.msra.mxu0 0.0
      %2362 = vmatprep.subr.mxu0 0.0
      %2363 = vmatpush1.msra.mxu0 0.0
      %2364 = vmatprep.subr.mxu0 0.0
      %2365 = vmatpush1.msra.mxu0 0.0
      %2366 = vmatprep.subr.mxu0 0.0
      %2367 = vmatpush1.msra.mxu0 0.0
      %2368 = vmatprep.subr.mxu0 0.0
      %2369 = vmatpush1.msra.mxu0 0.0
      %2370 = vmatprep.subr.mxu0 0.0
      %2371 = vmatpush1.msra.mxu0 0.0
      %2372 = vmatprep.subr.mxu0 0.0
      %2373 = vmatpush1.msra.mxu0 0.0
      %2374 = vmatprep.subr.mxu0 0.0
      %2375 = vmatpush1.msra.mxu0 0.0
      %2376 = vmatprep.subr.mxu0 0.0
      %2377 = vmatpush1.msra.mxu0 0.0
      %2378 = vmatprep.subr.mxu0 0.0
      %2379 = vmatpush1.msra.mxu0 0.0
      %2380 = vmatprep.subr.mxu0 0.0
      %2381 = vmatpush1.msra.mxu0 0.0
      %2382 = vmatprep.subr.mxu0 0.0
      %2383 = vmatpush1.msra.mxu0 0.0
      %2384 = vmatprep.subr.mxu0 0.0
      %2385 = vmatpush1.msra.mxu0 0.0
      %2386 = vmatprep.subr.mxu0 0.0
      %2387 = vmatpush1.msra.mxu0 0.0
      %2388 = vmatprep.subr.mxu0 0.0
      %2389 = vmatpush1.msra.mxu0 0.0
      %2390 = vmatprep.subr.mxu0 0.0
      %2391 = vmatpush1.msra.mxu0 0.0
      %2392 = vmatprep.subr.mxu0 0.0
      %2393 = vmatpush1.msra.mxu0 0.0
      %2394 = vmatprep.subr.mxu0 0.0
      %2395 = vmatpush1.msra.mxu0 0.0
      %2396 = vmatprep.mubr.f32.mxu0 0.0
      %v2397 = vand.u32 %v1620, 4294901760
      %2398 = vmatmul.mubr.f32.gmra.mrb[0].mxu0 %v2397
      %v2399 = vpop.f32.mrb[0].mxu0
      %v2400 = vadd.f32 %v2291, %v2399
      %v2401 = vpop.f32.mrb[0].mxu0
      %v2402 = vadd.f32 %v2293, %v2401
      %2403 = vmatprep.mubr.f32.mxu0 0.0
      %v2404 = vand.u32 %v1623, 4294901760
      %2405 = vmatmul.mubr.f32.gmra.mrb[0].mxu0 %v2404
      %v2406 = vpop.f32.mrb[0].mxu0
      %v2407 = vadd.f32 %v2298, %v2406
      %v2408 = vpop.f32.mrb[0].mxu0
      %v2409 = vadd.f32 %v2300, %v2408
      %2410 = vmatprep.mubr.f32.mxu0 0.0
      %v2411 = vand.u32 %v1626, 4294901760
      %2412 = vmatmul.mubr.f32.gmra.mrb[0].mxu0 %v2411
      %v2413 = vpop.f32.mrb[0].mxu0
      %v2414 = vadd.f32 %v2305, %v2413
      %v2415 = vpop.f32.mrb[0].mxu0
      %v2416 = vadd.f32 %v2307, %v2415
      %2417 = vmatprep.mubr.f32.mxu0 0.0
      %v2418 = vand.u32 %v1629, 4294901760
      %2419 = vmatmul.mubr.f32.gmra.mrb[0].mxu0 %v2418
      %v2420 = vpop.f32.mrb[0].mxu0
      %v2421 = vadd.f32 %v2312, %v2420
      %v2422 = vpop.f32.mrb[0].mxu0
      %v2423 = vadd.f32 %v2314, %v2422
      %2424 = vdwg.mxu0
      %vm2425 = vcmp.ge.f32.partialorder %v2400, 0.0
      %vm2426 = vcmp.ge.f32.partialorder %v2402, 0.0
      %vm2427 = vcmp.ge.f32.partialorder %v2407, 0.0
      %vm2428 = vcmp.ge.f32.partialorder %v2409, 0.0
      %vm2429 = vcmp.ge.f32.partialorder %v2414, 0.0
      %vm2430 = vcmp.ge.f32.partialorder %v2416, 0.0
      %vm2431 = vcmp.ge.f32.partialorder %v2421, 0.0
      %vm2432 = vcmp.ge.f32.partialorder %v2423, 0.0
      %s2433 = sld [smem:[#allocation3]]
      %v2434 = vstv %s2433
      %v2435 = vmul.f32 %v2434, %v2400
      %v2436 = vmul.f32 %v2434, %v2402
      %v2437 = vmul.f32 %v2434, %v2407
      %v2438 = vmul.f32 %v2434, %v2409
      %v2439 = vmul.f32 %v2434, %v2414
      %v2440 = vmul.f32 %v2434, %v2416
      %v2441 = vmul.f32 %v2434, %v2421
      %v2442 = vmul.f32 %v2434, %v2423
      %v2443 = vsel %vm2425, %v2400, %v2435
      %v2444 = vsel %vm2426, %v2402, %v2436
      %v2445 = vsel %vm2427, %v2407, %v2437
      %v2446 = vsel %vm2428, %v2409, %v2438
      %v2447 = vsel %vm2429, %v2414, %v2439
      %v2448 = vsel %vm2430, %v2416, %v2440
      %v2449 = vsel %vm2431, %v2421, %v2441
      %v2450 = vsel %vm2432, %v2423, %v2442
      %v2451 = vld [vmem:[%s8] sm:$0xff]
      %v2452 = vld [vmem:[%s8 + $0x8] sm:$0xff]
      %v2453 = vld [vmem:[%s8 + $0x10] sm:$0xff]
      %v2454 = vld [vmem:[%s8 + $0x18] sm:$0xff]
      %v2455 = vld [vmem:[%s8 + $0x20] sm:$0xff]
      %v2456 = vld [vmem:[%s8 + $0x28] sm:$0xff]
      %v2457 = vld [vmem:[%s8 + $0x30] sm:$0xff]
      %v2458 = vld [vmem:[%s8 + $0x38] sm:$0xff]
      %v2459 = vld [vmem:[%s8 + $0x40] sm:$0xff]
      %v2460 = vld [vmem:[%s8 + $0x48] sm:$0xff]
      %v2461 = vld [vmem:[%s8 + $0x50] sm:$0xff]
      %v2462 = vld [vmem:[%s8 + $0x58] sm:$0xff]
      %v2463 = vld [vmem:[%s8 + $0x60] sm:$0xf]
      %vm2464 = vcmask 261120
      %v2466 = vsel %vm2464, %v2451, 0
      %v2469 = vsel %vm2464, %v2452, 0
      %v2472 = vsel %vm2464, %v2453, 0
      %v2475 = vsel %vm2464, %v2454, 0
      %v2478 = vsel %vm2464, %v2455, 0
      %v2481 = vsel %vm2464, %v2456, 0
      %v2484 = vsel %vm2464, %v2457, 0
      %v2487 = vsel %vm2464, %v2458, 0
      %v2490 = vsel %vm2464, %v2459, 0
      %v2493 = vsel %vm2464, %v2460, 0
      %v2496 = vsel %vm2464, %v2461, 0
      %v2499 = vsel %vm2464, %v2462, 0
      %v2502 = vsel %vm2464, %v2463, 0
      %v2504 = vand.u32 %v2444, 4294901760
      %2505 = vmatprep.subr.mxu0 %v2504
      %v2506 = vand.u32 %v2443, 4294901760
      %2507 = vmatpush1.msra.mxu0 %v2506
      %v2508 = vand.u32 %v2446, 4294901760
      %2509 = vmatprep.subr.mxu0 %v2508
      %v2510 = vand.u32 %v2445, 4294901760
      %2511 = vmatpush1.msra.mxu0 %v2510
      %v2512 = vand.u32 %v2448, 4294901760
      %2513 = vmatprep.subr.mxu0 %v2512
      %v2514 = vand.u32 %v2447, 4294901760
      %2515 = vmatpush1.msra.mxu0 %v2514
      %v2516 = vand.u32 %v2450, 4294901760
      %2517 = vmatprep.subr.mxu0 %v2516
      %v2518 = vand.u32 %v2449, 4294901760
      %2519 = vmatpush1.msra.mxu0 %v2518
      %2520 = vmatprep.subr.mxu0 0.0
      %2521 = vmatpush1.msra.mxu0 0.0
      %2522 = vmatprep.subr.mxu0 0.0
      %2523 = vmatpush1.msra.mxu0 0.0
      %2524 = vmatprep.subr.mxu0 0.0
      %2525 = vmatpush1.msra.mxu0 0.0
      %2526 = vmatprep.subr.mxu0 0.0
      %2527 = vmatpush1.msra.mxu0 0.0
      %2528 = vmatprep.subr.mxu0 0.0
      %2529 = vmatpush1.msra.mxu0 0.0
      %2530 = vmatprep.subr.mxu0 0.0
      %2531 = vmatpush1.msra.mxu0 0.0
      %2532 = vmatprep.subr.mxu0 0.0
      %2533 = vmatpush1.msra.mxu0 0.0
      %2534 = vmatprep.subr.mxu0 0.0
      %2535 = vmatpush1.msra.mxu0 0.0
      %2536 = vmatprep.subr.mxu0 0.0
      %2537 = vmatpush1.msra.mxu0 0.0
      %2538 = vmatprep.subr.mxu0 0.0
      %2539 = vmatpush1.msra.mxu0 0.0
      %2540 = vmatprep.subr.mxu0 0.0
      %2541 = vmatpush1.msra.mxu0 0.0
      %2542 = vmatprep.subr.mxu0 0.0
      %2543 = vmatpush1.msra.mxu0 0.0
      %2544 = vmatprep.subr.mxu0 0.0
      %2545 = vmatpush1.msra.mxu0 0.0
      %2546 = vmatprep.subr.mxu0 0.0
      %2547 = vmatpush1.msra.mxu0 0.0
      %2548 = vmatprep.subr.mxu0 0.0
      %2549 = vmatpush1.msra.mxu0 0.0
      %2550 = vmatprep.subr.mxu0 0.0
      %2551 = vmatpush1.msra.mxu0 0.0
      %2552 = vmatprep.subr.mxu0 0.0
      %2553 = vmatpush1.msra.mxu0 0.0
      %2554 = vmatprep.subr.mxu0 0.0
      %2555 = vmatpush1.msra.mxu0 0.0
      %2556 = vmatprep.subr.mxu0 0.0
      %2557 = vmatpush1.msra.mxu0 0.0
      %2558 = vmatprep.subr.mxu0 0.0
      %2559 = vmatpush1.msra.mxu0 0.0
      %2560 = vmatprep.subr.mxu0 0.0
      %2561 = vmatpush1.msra.mxu0 0.0
      %2562 = vmatprep.subr.mxu0 0.0
      %2563 = vmatpush1.msra.mxu0 0.0
      %2564 = vmatprep.subr.mxu0 0.0
      %2565 = vmatpush1.msra.mxu0 0.0
      %2566 = vmatprep.subr.mxu0 0.0
      %2567 = vmatpush1.msra.mxu0 0.0
      %2568 = vmatprep.subr.mxu0 0.0
      %2569 = vmatpush1.msra.mxu0 0.0
      %2570 = vmatprep.subr.mxu0 0.0
      %2571 = vmatpush1.msra.mxu0 0.0
      %2572 = vmatprep.subr.mxu0 0.0
      %2573 = vmatpush1.msra.mxu0 0.0
      %2574 = vmatprep.subr.mxu0 0.0
      %2575 = vmatpush1.msra.mxu0 0.0
      %2576 = vmatprep.mubr.f32.mxu0 0.0
      %v2577 = vand.u32 %v2466, 4294901760
      %v2578 = vsub.f32 %v2466, %v2577
      %v2579 = vand.u32 %v2578, 4294901760
      %v2580 = vsub.f32 %v2578, %v2579
      %v2581 = vand.u32 %v2580, 4294901760
      %2582 = vmatmul.mubr.f32.gmra.mrb[0].mxu0 %v2581
      %v2583 = vpop.f32.mrb[0].mxu0
      %v2584 = vadd.f32 0.0, %v2583
      %v2585 = vpop.f32.mrb[0].mxu0
      %v2586 = vadd.f32 0.0, %v2585
      %2587 = vmatprep.mubr.f32.mxu0 0.0
      %v2588 = vand.u32 %v2469, 4294901760
      %v2589 = vsub.f32 %v2469, %v2588
      %v2590 = vand.u32 %v2589, 4294901760
      %v2591 = vsub.f32 %v2589, %v2590
      %v2592 = vand.u32 %v2591, 4294901760
      %2593 = vmatmul.mubr.f32.gmra.mrb[0].mxu0 %v2592
      %v2594 = vpop.f32.mrb[0].mxu0
      %v2595 = vadd.f32 0.0, %v2594
      %v2596 = vpop.f32.mrb[0].mxu0
      %v2597 = vadd.f32 0.0, %v2596
      %2598 = vmatprep.mubr.f32.mxu0 0.0
      %v2599 = vand.u32 %v2472, 4294901760
      %v2600 = vsub.f32 %v2472, %v2599
      %v2601 = vand.u32 %v2600, 4294901760
      %v2602 = vsub.f32 %v2600, %v2601
      %v2603 = vand.u32 %v2602, 4294901760
      %2604 = vmatmul.mubr.f32.gmra.mrb[0].mxu0 %v2603
      %v2605 = vpop.f32.mrb[0].mxu0
      %v2606 = vadd.f32 0.0, %v2605
      %v2607 = vpop.f32.mrb[0].mxu0
      %v2608 = vadd.f32 0.0, %v2607
      %2609 = vmatprep.mubr.f32.mxu0 0.0
      %v2610 = vand.u32 %v2475, 4294901760
      %v2611 = vsub.f32 %v2475, %v2610
      %v2612 = vand.u32 %v2611, 4294901760
      %v2613 = vsub.f32 %v2611, %v2612
      %v2614 = vand.u32 %v2613, 4294901760
      %2615 = vmatmul.mubr.f32.gmra.mrb[0].mxu0 %v2614
      %v2616 = vpop.f32.mrb[0].mxu0
      %v2617 = vadd.f32 0.0, %v2616
      %v2618 = vpop.f32.mrb[0].mxu0
      %v2619 = vadd.f32 0.0, %v2618
      %2620 = vmatprep.mubr.f32.mxu0 0.0
      %v2621 = vand.u32 %v2478, 4294901760
      %v2622 = vsub.f32 %v2478, %v2621
      %v2623 = vand.u32 %v2622, 4294901760
      %v2624 = vsub.f32 %v2622, %v2623
      %v2625 = vand.u32 %v2624, 4294901760
      %2626 = vmatmul.mubr.f32.gmra.mrb[0].mxu0 %v2625
      %v2627 = vpop.f32.mrb[0].mxu0
      %v2628 = vadd.f32 0.0, %v2627
      %v2629 = vpop.f32.mrb[0].mxu0
      %v2630 = vadd.f32 0.0, %v2629
      %2631 = vmatprep.mubr.f32.mxu0 0.0
      %v2632 = vand.u32 %v2481, 4294901760
      %v2633 = vsub.f32 %v2481, %v2632
      %v2634 = vand.u32 %v2633, 4294901760
      %v2635 = vsub.f32 %v2633, %v2634
      %v2636 = vand.u32 %v2635, 4294901760
      %2637 = vmatmul.mubr.f32.gmra.mrb[0].mxu0 %v2636
      %v2638 = vpop.f32.mrb[0].mxu0
      %v2639 = vadd.f32 0.0, %v2638
      %v2640 = vpop.f32.mrb[0].mxu0
      %v2641 = vadd.f32 0.0, %v2640
      %2642 = vmatprep.mubr.f32.mxu0 0.0
      %v2643 = vand.u32 %v2484, 4294901760
      %v2644 = vsub.f32 %v2484, %v2643
      %v2645 = vand.u32 %v2644, 4294901760
      %v2646 = vsub.f32 %v2644, %v2645
      %v2647 = vand.u32 %v2646, 4294901760
      %2648 = vmatmul.mubr.f32.gmra.mrb[0].mxu0 %v2647
      %v2649 = vpop.f32.mrb[0].mxu0
      %v2650 = vadd.f32 0.0, %v2649
      %v2651 = vpop.f32.mrb[0].mxu0
      %v2652 = vadd.f32 0.0, %v2651
      %2653 = vmatprep.mubr.f32.mxu0 0.0
      %v2654 = vand.u32 %v2487, 4294901760
      %v2655 = vsub.f32 %v2487, %v2654
      %v2656 = vand.u32 %v2655, 4294901760
      %v2657 = vsub.f32 %v2655, %v2656
      %v2658 = vand.u32 %v2657, 4294901760
      %2659 = vmatmul.mubr.f32.gmra.mrb[0].mxu0 %v2658
      %v2660 = vpop.f32.mrb[0].mxu0
      %v2661 = vadd.f32 0.0, %v2660
      %v2662 = vpop.f32.mrb[0].mxu0
      %v2663 = vadd.f32 0.0, %v2662
      %2664 = vmatprep.mubr.f32.mxu0 0.0
      %v2665 = vand.u32 %v2490, 4294901760
      %v2666 = vsub.f32 %v2490, %v2665
      %v2667 = vand.u32 %v2666, 4294901760
      %v2668 = vsub.f32 %v2666, %v2667
      %v2669 = vand.u32 %v2668, 4294901760
      %2670 = vmatmul.mubr.f32.gmra.mrb[0].mxu0 %v2669
      %v2671 = vpop.f32.mrb[0].mxu0
      %v2672 = vadd.f32 0.0, %v2671
      %v2673 = vpop.f32.mrb[0].mxu0
      %v2674 = vadd.f32 0.0, %v2673
      %2675 = vmatprep.mubr.f32.mxu0 0.0
      %v2676 = vand.u32 %v2493, 4294901760
      %v2677 = vsub.f32 %v2493, %v2676
      %v2678 = vand.u32 %v2677, 4294901760
      %v2679 = vsub.f32 %v2677, %v2678
      %v2680 = vand.u32 %v2679, 4294901760
      %2681 = vmatmul.mubr.f32.gmra.mrb[0].mxu0 %v2680
      %v2682 = vpop.f32.mrb[0].mxu0
      %v2683 = vadd.f32 0.0, %v2682
      %v2684 = vpop.f32.mrb[0].mxu0
      %v2685 = vadd.f32 0.0, %v2684
      %2686 = vmatprep.mubr.f32.mxu0 0.0
      %v2687 = vand.u32 %v2496, 4294901760
      %v2688 = vsub.f32 %v2496, %v2687
      %v2689 = vand.u32 %v2688, 4294901760
      %v2690 = vsub.f32 %v2688, %v2689
      %v2691 = vand.u32 %v2690, 4294901760
      %2692 = vmatmul.mubr.f32.gmra.mrb[0].mxu0 %v2691
      %v2693 = vpop.f32.mrb[0].mxu0
      %v2694 = vadd.f32 0.0, %v2693
      %v2695 = vpop.f32.mrb[0].mxu0
      %v2696 = vadd.f32 0.0, %v2695
      %2697 = vmatprep.mubr.f32.mxu0 0.0
      %v2698 = vand.u32 %v2499, 4294901760
      %v2699 = vsub.f32 %v2499, %v2698
      %v2700 = vand.u32 %v2699, 4294901760
      %v2701 = vsub.f32 %v2699, %v2700
      %v2702 = vand.u32 %v2701, 4294901760
      %2703 = vmatmul.mubr.f32.gmra.mrb[0].mxu0 %v2702
      %v2704 = vpop.f32.mrb[0].mxu0
      %v2705 = vadd.f32 0.0, %v2704
      %v2706 = vpop.f32.mrb[0].mxu0
      %v2707 = vadd.f32 0.0, %v2706
      %2708 = vmatprep.mubr.f32.mxu0 0.0
      %v2709 = vand.u32 %v2502, 4294901760
      %v2710 = vsub.f32 %v2502, %v2709
      %v2711 = vand.u32 %v2710, 4294901760
      %v2712 = vsub.f32 %v2710, %v2711
      %v2713 = vand.u32 %v2712, 4294901760
      %2714 = vmatmul.mubr.f32.gmra.mrb[0].mxu0 %v2713
      %v2715 = vpop.f32.mrb[0].mxu0
      %v2716 = vadd.f32 0.0, %v2715
      %v2717 = vpop.f32.mrb[0].mxu0
      %v2718 = vadd.f32 0.0, %v2717
      %2719 = vdwg.mxu0
      %v2720 = vand.u32 %v2444, 4294901760
      %v2721 = vsub.f32 %v2444, %v2720
      %v2722 = vand.u32 %v2721, 4294901760
      %v2723 = vsub.f32 %v2721, %v2722
      %v2724 = vand.u32 %v2723, 4294901760
      %2725 = vmatprep.subr.mxu0 %v2724
      %v2726 = vand.u32 %v2443, 4294901760
      %v2727 = vsub.f32 %v2443, %v2726
      %v2728 = vand.u32 %v2727, 4294901760
      %v2729 = vsub.f32 %v2727, %v2728
      %v2730 = vand.u32 %v2729, 4294901760
      %2731 = vmatpush1.msra.mxu0 %v2730
      %v2732 = vand.u32 %v2446, 4294901760
      %v2733 = vsub.f32 %v2446, %v2732
      %v2734 = vand.u32 %v2733, 4294901760
      %v2735 = vsub.f32 %v2733, %v2734
      %v2736 = vand.u32 %v2735, 4294901760
      %2737 = vmatprep.subr.mxu0 %v2736
      %v2738 = vand.u32 %v2445, 4294901760
      %v2739 = vsub.f32 %v2445, %v2738
      %v2740 = vand.u32 %v2739, 4294901760
      %v2741 = vsub.f32 %v2739, %v2740
      %v2742 = vand.u32 %v2741, 4294901760
      %2743 = vmatpush1.msra.mxu0 %v2742
      %v2744 = vand.u32 %v2448, 4294901760
      %v2745 = vsub.f32 %v2448, %v2744
      %v2746 = vand.u32 %v2745, 4294901760
      %v2747 = vsub.f32 %v2745, %v2746
      %v2748 = vand.u32 %v2747, 4294901760
      %2749 = vmatprep.subr.mxu0 %v2748
      %v2750 = vand.u32 %v2447, 4294901760
      %v2751 = vsub.f32 %v2447, %v2750
      %v2752 = vand.u32 %v2751, 4294901760
      %v2753 = vsub.f32 %v2751, %v2752
      %v2754 = vand.u32 %v2753, 4294901760
      %2755 = vmatpush1.msra.mxu0 %v2754
      %v2756 = vand.u32 %v2450, 4294901760
      %v2757 = vsub.f32 %v2450, %v2756
      %v2758 = vand.u32 %v2757, 4294901760
      %v2759 = vsub.f32 %v2757, %v2758
      %v2760 = vand.u32 %v2759, 4294901760
      %2761 = vmatprep.subr.mxu0 %v2760
      %v2762 = vand.u32 %v2449, 4294901760
      %v2763 = vsub.f32 %v2449, %v2762
      %v2764 = vand.u32 %v2763, 4294901760
      %v2765 = vsub.f32 %v2763, %v2764
      %v2766 = vand.u32 %v2765, 4294901760
      %2767 = vmatpush1.msra.mxu0 %v2766
      %2768 = vmatprep.subr.mxu0 0.0
      %2769 = vmatpush1.msra.mxu0 0.0
      %2770 = vmatprep.subr.mxu0 0.0
      %2771 = vmatpush1.msra.mxu0 0.0
      %2772 = vmatprep.subr.mxu0 0.0
      %2773 = vmatpush1.msra.mxu0 0.0
      %2774 = vmatprep.subr.mxu0 0.0
      %2775 = vmatpush1.msra.mxu0 0.0
      %2776 = vmatprep.subr.mxu0 0.0
      %2777 = vmatpush1.msra.mxu0 0.0
      %2778 = vmatprep.subr.mxu0 0.0
      %2779 = vmatpush1.msra.mxu0 0.0
      %2780 = vmatprep.subr.mxu0 0.0
      %2781 = vmatpush1.msra.mxu0 0.0
      %2782 = vmatprep.subr.mxu0 0.0
      %2783 = vmatpush1.msra.mxu0 0.0
      %2784 = vmatprep.subr.mxu0 0.0
      %2785 = vmatpush1.msra.mxu0 0.0
      %2786 = vmatprep.subr.mxu0 0.0
      %2787 = vmatpush1.msra.mxu0 0.0
      %2788 = vmatprep.subr.mxu0 0.0
      %2789 = vmatpush1.msra.mxu0 0.0
      %2790 = vmatprep.subr.mxu0 0.0
      %2791 = vmatpush1.msra.mxu0 0.0
      %2792 = vmatprep.subr.mxu0 0.0
      %2793 = vmatpush1.msra.mxu0 0.0
      %2794 = vmatprep.subr.mxu0 0.0
      %2795 = vmatpush1.msra.mxu0 0.0
      %2796 = vmatprep.subr.mxu0 0.0
      %2797 = vmatpush1.msra.mxu0 0.0
      %2798 = vmatprep.subr.mxu0 0.0
      %2799 = vmatpush1.msra.mxu0 0.0
      %2800 = vmatprep.subr.mxu0 0.0
      %2801 = vmatpush1.msra.mxu0 0.0
      %2802 = vmatprep.subr.mxu0 0.0
      %2803 = vmatpush1.msra.mxu0 0.0
      %2804 = vmatprep.subr.mxu0 0.0
      %2805 = vmatpush1.msra.mxu0 0.0
      %2806 = vmatprep.subr.mxu0 0.0
      %2807 = vmatpush1.msra.mxu0 0.0
      %2808 = vmatprep.subr.mxu0 0.0
      %2809 = vmatpush1.msra.mxu0 0.0
      %2810 = vmatprep.subr.mxu0 0.0
      %2811 = vmatpush1.msra.mxu0 0.0
      %2812 = vmatprep.subr.mxu0 0.0
      %2813 = vmatpush1.msra.mxu0 0.0
      %2814 = vmatprep.subr.mxu0 0.0
      %2815 = vmatpush1.msra.mxu0 0.0
      %2816 = vmatprep.subr.mxu0 0.0
      %2817 = vmatpush1.msra.mxu0 0.0
      %2818 = vmatprep.subr.mxu0 0.0
      %2819 = vmatpush1.msra.mxu0 0.0
      %2820 = vmatprep.subr.mxu0 0.0
      %2821 = vmatpush1.msra.mxu0 0.0
      %2822 = vmatprep.subr.mxu0 0.0
      %2823 = vmatpush1.msra.mxu0 0.0
      %2824 = vmatprep.mubr.f32.mxu0 0.0
      %v2825 = vand.u32 %v2466, 4294901760
      %2826 = vmatmul.mubr.f32.gmra.mrb[0].mxu0 %v2825
      %v2827 = vpop.f32.mrb[0].mxu0
      %v2828 = vadd.f32 %v2584, %v2827
      %v2829 = vpop.f32.mrb[0].mxu0
      %v2830 = vadd.f32 %v2586, %v2829
      %2831 = vmatprep.mubr.f32.mxu0 0.0
      %v2832 = vand.u32 %v2469, 4294901760
      %2833 = vmatmul.mubr.f32.gmra.mrb[0].mxu0 %v2832
      %v2834 = vpop.f32.mrb[0].mxu0
      %v2835 = vadd.f32 %v2595, %v2834
      %v2836 = vpop.f32.mrb[0].mxu0
      %v2837 = vadd.f32 %v2597, %v2836
      %2838 = vmatprep.mubr.f32.mxu0 0.0
      %v2839 = vand.u32 %v2472, 4294901760
      %2840 = vmatmul.mubr.f32.gmra.mrb[0].mxu0 %v2839
      %v2841 = vpop.f32.mrb[0].mxu0
      %v2842 = vadd.f32 %v2606, %v2841
      %v2843 = vpop.f32.mrb[0].mxu0
      %v2844 = vadd.f32 %v2608, %v2843
      %2845 = vmatprep.mubr.f32.mxu0 0.0
      %v2846 = vand.u32 %v2475, 4294901760
      %2847 = vmatmul.mubr.f32.gmra.mrb[0].mxu0 %v2846
      %v2848 = vpop.f32.mrb[0].mxu0
      %v2849 = vadd.f32 %v2617, %v2848
      %v2850 = vpop.f32.mrb[0].mxu0
      %v2851 = vadd.f32 %v2619, %v2850
      %2852 = vmatprep.mubr.f32.mxu0 0.0
      %v2853 = vand.u32 %v2478, 4294901760
      %2854 = vmatmul.mubr.f32.gmra.mrb[0].mxu0 %v2853
      %v2855 = vpop.f32.mrb[0].mxu0
      %v2856 = vadd.f32 %v2628, %v2855
      %v2857 = vpop.f32.mrb[0].mxu0
      %v2858 = vadd.f32 %v2630, %v2857
      %2859 = vmatprep.mubr.f32.mxu0 0.0
      %v2860 = vand.u32 %v2481, 4294901760
      %2861 = vmatmul.mubr.f32.gmra.mrb[0].mxu0 %v2860
      %v2862 = vpop.f32.mrb[0].mxu0
      %v2863 = vadd.f32 %v2639, %v2862
      %v2864 = vpop.f32.mrb[0].mxu0
      %v2865 = vadd.f32 %v2641, %v2864
      %2866 = vmatprep.mubr.f32.mxu0 0.0
      %v2867 = vand.u32 %v2484, 4294901760
      %2868 = vmatmul.mubr.f32.gmra.mrb[0].mxu0 %v2867
      %v2869 = vpop.f32.mrb[0].mxu0
      %v2870 = vadd.f32 %v2650, %v2869
      %v2871 = vpop.f32.mrb[0].mxu0
      %v2872 = vadd.f32 %v2652, %v2871
      %2873 = vmatprep.mubr.f32.mxu0 0.0
      %v2874 = vand.u32 %v2487, 4294901760
      %2875 = vmatmul.mubr.f32.gmra.mrb[0].mxu0 %v2874
      %v2876 = vpop.f32.mrb[0].mxu0
      %v2877 = vadd.f32 %v2661, %v2876
      %v2878 = vpop.f32.mrb[0].mxu0
      %v2879 = vadd.f32 %v2663, %v2878
      %2880 = vmatprep.mubr.f32.mxu0 0.0
      %v2881 = vand.u32 %v2490, 4294901760
      %2882 = vmatmul.mubr.f32.gmra.mrb[0].mxu0 %v2881
      %v2883 = vpop.f32.mrb[0].mxu0
      %v2884 = vadd.f32 %v2672, %v2883
      %v2885 = vpop.f32.mrb[0].mxu0
      %v2886 = vadd.f32 %v2674, %v2885
      %2887 = vmatprep.mubr.f32.mxu0 0.0
      %v2888 = vand.u32 %v2493, 4294901760
      %2889 = vmatmul.mubr.f32.gmra.mrb[0].mxu0 %v2888
      %v2890 = vpop.f32.mrb[0].mxu0
      %v2891 = vadd.f32 %v2683, %v2890
      %v2892 = vpop.f32.mrb[0].mxu0
      %v2893 = vadd.f32 %v2685, %v2892
      %2894 = vmatprep.mubr.f32.mxu0 0.0
      %v2895 = vand.u32 %v2496, 4294901760
      %2896 = vmatmul.mubr.f32.gmra.mrb[0].mxu0 %v2895
      %v2897 = vpop.f32.mrb[0].mxu0
      %v2898 = vadd.f32 %v2694, %v2897
      %v2899 = vpop.f32.mrb[0].mxu0
      %v2900 = vadd.f32 %v2696, %v2899
      %2901 = vmatprep.mubr.f32.mxu0 0.0
      %v2902 = vand.u32 %v2499, 4294901760
      %2903 = vmatmul.mubr.f32.gmra.mrb[0].mxu0 %v2902
      %v2904 = vpop.f32.mrb[0].mxu0
      %v2905 = vadd.f32 %v2705, %v2904
      %v2906 = vpop.f32.mrb[0].mxu0
      %v2907 = vadd.f32 %v2707, %v2906
      %2908 = vmatprep.mubr.f32.mxu0 0.0
      %v2909 = vand.u32 %v2502, 4294901760
      %2910 = vmatmul.mubr.f32.gmra.mrb[0].mxu0 %v2909
      %v2911 = vpop.f32.mrb[0].mxu0
      %v2912 = vadd.f32 %v2716, %v2911
      %v2913 = vpop.f32.mrb[0].mxu0
      %v2914 = vadd.f32 %v2718, %v2913
      %2915 = vdwg.mxu0
      %v2916 = vand.u32 %v2444, 4294901760
      %v2917 = vsub.f32 %v2444, %v2916
      %2918 = vmatprep.subr.mxu0 %v2917
      %v2919 = vand.u32 %v2443, 4294901760
      %v2920 = vsub.f32 %v2443, %v2919
      %2921 = vmatpush1.msra.mxu0 %v2920
      %v2922 = vand.u32 %v2446, 4294901760
      %v2923 = vsub.f32 %v2446, %v2922
      %2924 = vmatprep.subr.mxu0 %v2923
      %v2925 = vand.u32 %v2445, 4294901760
      %v2926 = vsub.f32 %v2445, %v2925
      %2927 = vmatpush1.msra.mxu0 %v2926
      %v2928 = vand.u32 %v2448, 4294901760
      %v2929 = vsub.f32 %v2448, %v2928
      %2930 = vmatprep.subr.mxu0 %v2929
      %v2931 = vand.u32 %v2447, 4294901760
      %v2932 = vsub.f32 %v2447, %v2931
      %2933 = vmatpush1.msra.mxu0 %v2932
      %v2934 = vand.u32 %v2450, 4294901760
      %v2935 = vsub.f32 %v2450, %v2934
      %2936 = vmatprep.subr.mxu0 %v2935
      %v2937 = vand.u32 %v2449, 4294901760
      %v2938 = vsub.f32 %v2449, %v2937
      %2939 = vmatpush1.msra.mxu0 %v2938
      %2940 = vmatprep.subr.mxu0 0.0
      %2941 = vmatpush1.msra.mxu0 0.0
      %2942 = vmatprep.subr.mxu0 0.0
      %2943 = vmatpush1.msra.mxu0 0.0
      %2944 = vmatprep.subr.mxu0 0.0
      %2945 = vmatpush1.msra.mxu0 0.0
      %2946 = vmatprep.subr.mxu0 0.0
      %2947 = vmatpush1.msra.mxu0 0.0
      %2948 = vmatprep.subr.mxu0 0.0
      %2949 = vmatpush1.msra.mxu0 0.0
      %2950 = vmatprep.subr.mxu0 0.0
      %2951 = vmatpush1.msra.mxu0 0.0
      %2952 = vmatprep.subr.mxu0 0.0
      %2953 = vmatpush1.msra.mxu0 0.0
      %2954 = vmatprep.subr.mxu0 0.0
      %2955 = vmatpush1.msra.mxu0 0.0
      %2956 = vmatprep.subr.mxu0 0.0
      %2957 = vmatpush1.msra.mxu0 0.0
      %2958 = vmatprep.subr.mxu0 0.0
      %2959 = vmatpush1.msra.mxu0 0.0
      %2960 = vmatprep.subr.mxu0 0.0
      %2961 = vmatpush1.msra.mxu0 0.0
      %2962 = vmatprep.subr.mxu0 0.0
      %2963 = vmatpush1.msra.mxu0 0.0
      %2964 = vmatprep.subr.mxu0 0.0
      %2965 = vmatpush1.msra.mxu0 0.0
      %2966 = vmatprep.subr.mxu0 0.0
      %2967 = vmatpush1.msra.mxu0 0.0
      %2968 = vmatprep.subr.mxu0 0.0
      %2969 = vmatpush1.msra.mxu0 0.0
      %2970 = vmatprep.subr.mxu0 0.0
      %2971 = vmatpush1.msra.mxu0 0.0
      %2972 = vmatprep.subr.mxu0 0.0
      %2973 = vmatpush1.msra.mxu0 0.0
      %2974 = vmatprep.subr.mxu0 0.0
      %2975 = vmatpush1.msra.mxu0 0.0
      %2976 = vmatprep.subr.mxu0 0.0
      %2977 = vmatpush1.msra.mxu0 0.0
      %2978 = vmatprep.subr.mxu0 0.0
      %2979 = vmatpush1.msra.mxu0 0.0
      %2980 = vmatprep.subr.mxu0 0.0
      %2981 = vmatpush1.msra.mxu0 0.0
      %2982 = vmatprep.subr.mxu0 0.0
      %2983 = vmatpush1.msra.mxu0 0.0
      %2984 = vmatprep.subr.mxu0 0.0
      %2985 = vmatpush1.msra.mxu0 0.0
      %2986 = vmatprep.subr.mxu0 0.0
      %2987 = vmatpush1.msra.mxu0 0.0
      %2988 = vmatprep.subr.mxu0 0.0
      %2989 = vmatpush1.msra.mxu0 0.0
      %2990 = vmatprep.subr.mxu0 0.0
      %2991 = vmatpush1.msra.mxu0 0.0
      %2992 = vmatprep.subr.mxu0 0.0
      %2993 = vmatpush1.msra.mxu0 0.0
      %2994 = vmatprep.subr.mxu0 0.0
      %2995 = vmatpush1.msra.mxu0 0.0
      %2996 = vmatprep.mubr.f32.mxu0 0.0
      %v2997 = vand.u32 %v2466, 4294901760
      %v2998 = vsub.f32 %v2466, %v2997
      %2999 = vmatmul.mubr.f32.gmra.mrb[0].mxu0 %v2998
      %v3000 = vpop.f32.mrb[0].mxu0
      %v3001 = vadd.f32 %v2828, %v3000
      %v3002 = vpop.f32.mrb[0].mxu0
      %v3003 = vadd.f32 %v2830, %v3002
      %3004 = vmatprep.mubr.f32.mxu0 0.0
      %v3005 = vand.u32 %v2469, 4294901760
      %v3006 = vsub.f32 %v2469, %v3005
      %3007 = vmatmul.mubr.f32.gmra.mrb[0].mxu0 %v3006
      %v3008 = vpop.f32.mrb[0].mxu0
      %v3009 = vadd.f32 %v2835, %v3008
      %v3010 = vpop.f32.mrb[0].mxu0
      %v3011 = vadd.f32 %v2837, %v3010
      %3012 = vmatprep.mubr.f32.mxu0 0.0
      %v3013 = vand.u32 %v2472, 4294901760
      %v3014 = vsub.f32 %v2472, %v3013
      %3015 = vmatmul.mubr.f32.gmra.mrb[0].mxu0 %v3014
      %v3016 = vpop.f32.mrb[0].mxu0
      %v3017 = vadd.f32 %v2842, %v3016
      %v3018 = vpop.f32.mrb[0].mxu0
      %v3019 = vadd.f32 %v2844, %v3018
      %3020 = vmatprep.mubr.f32.mxu0 0.0
      %v3021 = vand.u32 %v2475, 4294901760
      %v3022 = vsub.f32 %v2475, %v3021
      %3023 = vmatmul.mubr.f32.gmra.mrb[0].mxu0 %v3022
      %v3024 = vpop.f32.mrb[0].mxu0
      %v3025 = vadd.f32 %v2849, %v3024
      %v3026 = vpop.f32.mrb[0].mxu0
      %v3027 = vadd.f32 %v2851, %v3026
      %3028 = vmatprep.mubr.f32.mxu0 0.0
      %v3029 = vand.u32 %v2478, 4294901760
      %v3030 = vsub.f32 %v2478, %v3029
      %3031 = vmatmul.mubr.f32.gmra.mrb[0].mxu0 %v3030
      %v3032 = vpop.f32.mrb[0].mxu0
      %v3033 = vadd.f32 %v2856, %v3032
      %v3034 = vpop.f32.mrb[0].mxu0
      %v3035 = vadd.f32 %v2858, %v3034
      %3036 = vmatprep.mubr.f32.mxu0 0.0
      %v3037 = vand.u32 %v2481, 4294901760
      %v3038 = vsub.f32 %v2481, %v3037
      %3039 = vmatmul.mubr.f32.gmra.mrb[0].mxu0 %v3038
      %v3040 = vpop.f32.mrb[0].mxu0
      %v3041 = vadd.f32 %v2863, %v3040
      %v3042 = vpop.f32.mrb[0].mxu0
      %v3043 = vadd.f32 %v2865, %v3042
      %3044 = vmatprep.mubr.f32.mxu0 0.0
      %v3045 = vand.u32 %v2484, 4294901760
      %v3046 = vsub.f32 %v2484, %v3045
      %3047 = vmatmul.mubr.f32.gmra.mrb[0].mxu0 %v3046
      %v3048 = vpop.f32.mrb[0].mxu0
      %v3049 = vadd.f32 %v2870, %v3048
      %v3050 = vpop.f32.mrb[0].mxu0
      %v3051 = vadd.f32 %v2872, %v3050
      %3052 = vmatprep.mubr.f32.mxu0 0.0
      %v3053 = vand.u32 %v2487, 4294901760
      %v3054 = vsub.f32 %v2487, %v3053
      %3055 = vmatmul.mubr.f32.gmra.mrb[0].mxu0 %v3054
      %v3056 = vpop.f32.mrb[0].mxu0
      %v3057 = vadd.f32 %v2877, %v3056
      %v3058 = vpop.f32.mrb[0].mxu0
      %v3059 = vadd.f32 %v2879, %v3058
      %3060 = vmatprep.mubr.f32.mxu0 0.0
      %v3061 = vand.u32 %v2490, 4294901760
      %v3062 = vsub.f32 %v2490, %v3061
      %3063 = vmatmul.mubr.f32.gmra.mrb[0].mxu0 %v3062
      %v3064 = vpop.f32.mrb[0].mxu0
      %v3065 = vadd.f32 %v2884, %v3064
      %v3066 = vpop.f32.mrb[0].mxu0
      %v3067 = vadd.f32 %v2886, %v3066
      %3068 = vmatprep.mubr.f32.mxu0 0.0
      %v3069 = vand.u32 %v2493, 4294901760
      %v3070 = vsub.f32 %v2493, %v3069
      %3071 = vmatmul.mubr.f32.gmra.mrb[0].mxu0 %v3070
      %v3072 = vpop.f32.mrb[0].mxu0
      %v3073 = vadd.f32 %v2891, %v3072
      %v3074 = vpop.f32.mrb[0].mxu0
      %v3075 = vadd.f32 %v2893, %v3074
      %3076 = vmatprep.mubr.f32.mxu0 0.0
      %v3077 = vand.u32 %v2496, 4294901760
      %v3078 = vsub.f32 %v2496, %v3077
      %3079 = vmatmul.mubr.f32.gmra.mrb[0].mxu0 %v3078
      %v3080 = vpop.f32.mrb[0].mxu0
      %v3081 = vadd.f32 %v2898, %v3080
      %v3082 = vpop.f32.mrb[0].mxu0
      %v3083 = vadd.f32 %v2900, %v3082
      %3084 = vmatprep.mubr.f32.mxu0 0.0
      %v3085 = vand.u32 %v2499, 4294901760
      %v3086 = vsub.f32 %v2499, %v3085
      %3087 = vmatmul.mubr.f32.gmra.mrb[0].mxu0 %v3086
      %v3088 = vpop.f32.mrb[0].mxu0
      %v3089 = vadd.f32 %v2905, %v3088
      %v3090 = vpop.f32.mrb[0].mxu0
      %v3091 = vadd.f32 %v2907, %v3090
      %3092 = vmatprep.mubr.f32.mxu0 0.0
      %v3093 = vand.u32 %v2502, 4294901760
      %v3094 = vsub.f32 %v2502, %v3093
      %3095 = vmatmul.mubr.f32.gmra.mrb[0].mxu0 %v3094
      %v3096 = vpop.f32.mrb[0].mxu0
      %v3097 = vadd.f32 %v2912, %v3096
      %v3098 = vpop.f32.mrb[0].mxu0
      %v3099 = vadd.f32 %v2914, %v3098
      %3100 = vdwg.mxu0
      %v3101 = vand.u32 %v2444, 4294901760
      %3102 = vmatprep.subr.mxu0 %v3101
      %v3103 = vand.u32 %v2443, 4294901760
      %3104 = vmatpush1.msra.mxu0 %v3103
      %v3105 = vand.u32 %v2446, 4294901760
      %3106 = vmatprep.subr.mxu0 %v3105
      %v3107 = vand.u32 %v2445, 4294901760
      %3108 = vmatpush1.msra.mxu0 %v3107
      %v3109 = vand.u32 %v2448, 4294901760
      %3110 = vmatprep.subr.mxu0 %v3109
      %v3111 = vand.u32 %v2447, 4294901760
      %3112 = vmatpush1.msra.mxu0 %v3111
      %v3113 = vand.u32 %v2450, 4294901760
      %3114 = vmatprep.subr.mxu0 %v3113
      %v3115 = vand.u32 %v2449, 4294901760
      %3116 = vmatpush1.msra.mxu0 %v3115
      %3117 = vmatprep.subr.mxu0 0.0
      %3118 = vmatpush1.msra.mxu0 0.0
      %3119 = vmatprep.subr.mxu0 0.0
      %3120 = vmatpush1.msra.mxu0 0.0
      %3121 = vmatprep.subr.mxu0 0.0
      %3122 = vmatpush1.msra.mxu0 0.0
      %3123 = vmatprep.subr.mxu0 0.0
      %3124 = vmatpush1.msra.mxu0 0.0
      %3125 = vmatprep.subr.mxu0 0.0
      %3126 = vmatpush1.msra.mxu0 0.0
      %3127 = vmatprep.subr.mxu0 0.0
      %3128 = vmatpush1.msra.mxu0 0.0
      %3129 = vmatprep.subr.mxu0 0.0
      %3130 = vmatpush1.msra.mxu0 0.0
      %3131 = vmatprep.subr.mxu0 0.0
      %3132 = vmatpush1.msra.mxu0 0.0
      %3133 = vmatprep.subr.mxu0 0.0
      %3134 = vmatpush1.msra.mxu0 0.0
      %3135 = vmatprep.subr.mxu0 0.0
      %3136 = vmatpush1.msra.mxu0 0.0
      %3137 = vmatprep.subr.mxu0 0.0
      %3138 = vmatpush1.msra.mxu0 0.0
      %3139 = vmatprep.subr.mxu0 0.0
      %3140 = vmatpush1.msra.mxu0 0.0
      %3141 = vmatprep.subr.mxu0 0.0
      %3142 = vmatpush1.msra.mxu0 0.0
      %3143 = vmatprep.subr.mxu0 0.0
      %3144 = vmatpush1.msra.mxu0 0.0
      %3145 = vmatprep.subr.mxu0 0.0
      %3146 = vmatpush1.msra.mxu0 0.0
      %3147 = vmatprep.subr.mxu0 0.0
      %3148 = vmatpush1.msra.mxu0 0.0
      %3149 = vmatprep.subr.mxu0 0.0
      %3150 = vmatpush1.msra.mxu0 0.0
      %3151 = vmatprep.subr.mxu0 0.0
      %3152 = vmatpush1.msra.mxu0 0.0
      %3153 = vmatprep.subr.mxu0 0.0
      %3154 = vmatpush1.msra.mxu0 0.0
      %3155 = vmatprep.subr.mxu0 0.0
      %3156 = vmatpush1.msra.mxu0 0.0
      %3157 = vmatprep.subr.mxu0 0.0
      %3158 = vmatpush1.msra.mxu0 0.0
      %3159 = vmatprep.subr.mxu0 0.0
      %3160 = vmatpush1.msra.mxu0 0.0
      %3161 = vmatprep.subr.mxu0 0.0
      %3162 = vmatpush1.msra.mxu0 0.0
      %3163 = vmatprep.subr.mxu0 0.0
      %3164 = vmatpush1.msra.mxu0 0.0
      %3165 = vmatprep.subr.mxu0 0.0
      %3166 = vmatpush1.msra.mxu0 0.0
      %3167 = vmatprep.subr.mxu0 0.0
      %3168 = vmatpush1.msra.mxu0 0.0
      %3169 = vmatprep.subr.mxu0 0.0
      %3170 = vmatpush1.msra.mxu0 0.0
      %3171 = vmatprep.subr.mxu0 0.0
      %3172 = vmatpush1.msra.mxu0 0.0
      %3173 = vmatprep.mubr.f32.mxu0 0.0
      %v3174 = vand.u32 %v2466, 4294901760
      %v3175 = vsub.f32 %v2466, %v3174
      %v3176 = vand.u32 %v3175, 4294901760
      %3177 = vmatmul.mubr.f32.gmra.mrb[0].mxu0 %v3176
      %v3178 = vpop.f32.mrb[0].mxu0
      %v3179 = vadd.f32 %v3001, %v3178
      %v3180 = vpop.f32.mrb[0].mxu0
      %v3181 = vadd.f32 %v3003, %v3180
      %3182 = vmatprep.mubr.f32.mxu0 0.0
      %v3183 = vand.u32 %v2469, 4294901760
      %v3184 = vsub.f32 %v2469, %v3183
      %v3185 = vand.u32 %v3184, 4294901760
      %3186 = vmatmul.mubr.f32.gmra.mrb[0].mxu0 %v3185
      %v3187 = vpop.f32.mrb[0].mxu0
      %v3188 = vadd.f32 %v3009, %v3187
      %v3189 = vpop.f32.mrb[0].mxu0
      %v3190 = vadd.f32 %v3011, %v3189
      %3191 = vmatprep.mubr.f32.mxu0 0.0
      %v3192 = vand.u32 %v2472, 4294901760
      %v3193 = vsub.f32 %v2472, %v3192
      %v3194 = vand.u32 %v3193, 4294901760
      %3195 = vmatmul.mubr.f32.gmra.mrb[0].mxu0 %v3194
      %v3196 = vpop.f32.mrb[0].mxu0
      %v3197 = vadd.f32 %v3017, %v3196
      %v3198 = vpop.f32.mrb[0].mxu0
      %v3199 = vadd.f32 %v3019, %v3198
      %3200 = vmatprep.mubr.f32.mxu0 0.0
      %v3201 = vand.u32 %v2475, 4294901760
      %v3202 = vsub.f32 %v2475, %v3201
      %v3203 = vand.u32 %v3202, 4294901760
      %3204 = vmatmul.mubr.f32.gmra.mrb[0].mxu0 %v3203
      %v3205 = vpop.f32.mrb[0].mxu0
      %v3206 = vadd.f32 %v3025, %v3205
      %v3207 = vpop.f32.mrb[0].mxu0
      %v3208 = vadd.f32 %v3027, %v3207
      %3209 = vmatprep.mubr.f32.mxu0 0.0
      %v3210 = vand.u32 %v2478, 4294901760
      %v3211 = vsub.f32 %v2478, %v3210
      %v3212 = vand.u32 %v3211, 4294901760
      %3213 = vmatmul.mubr.f32.gmra.mrb[0].mxu0 %v3212
      %v3214 = vpop.f32.mrb[0].mxu0
      %v3215 = vadd.f32 %v3033, %v3214
      %v3216 = vpop.f32.mrb[0].mxu0
      %v3217 = vadd.f32 %v3035, %v3216
      %3218 = vmatprep.mubr.f32.mxu0 0.0
      %v3219 = vand.u32 %v2481, 4294901760
      %v3220 = vsub.f32 %v2481, %v3219
      %v3221 = vand.u32 %v3220, 4294901760
      %3222 = vmatmul.mubr.f32.gmra.mrb[0].mxu0 %v3221
      %v3223 = vpop.f32.mrb[0].mxu0
      %v3224 = vadd.f32 %v3041, %v3223
      %v3225 = vpop.f32.mrb[0].mxu0
      %v3226 = vadd.f32 %v3043, %v3225
      %3227 = vmatprep.mubr.f32.mxu0 0.0
      %v3228 = vand.u32 %v2484, 4294901760
      %v3229 = vsub.f32 %v2484, %v3228
      %v3230 = vand.u32 %v3229, 4294901760
      %3231 = vmatmul.mubr.f32.gmra.mrb[0].mxu0 %v3230
      %v3232 = vpop.f32.mrb[0].mxu0
      %v3233 = vadd.f32 %v3049, %v3232
      %v3234 = vpop.f32.mrb[0].mxu0
      %v3235 = vadd.f32 %v3051, %v3234
      %3236 = vmatprep.mubr.f32.mxu0 0.0
      %v3237 = vand.u32 %v2487, 4294901760
      %v3238 = vsub.f32 %v2487, %v3237
      %v3239 = vand.u32 %v3238, 4294901760
      %3240 = vmatmul.mubr.f32.gmra.mrb[0].mxu0 %v3239
      %v3241 = vpop.f32.mrb[0].mxu0
      %v3242 = vadd.f32 %v3057, %v3241
      %v3243 = vpop.f32.mrb[0].mxu0
      %v3244 = vadd.f32 %v3059, %v3243
      %3245 = vmatprep.mubr.f32.mxu0 0.0
      %v3246 = vand.u32 %v2490, 4294901760
      %v3247 = vsub.f32 %v2490, %v3246
      %v3248 = vand.u32 %v3247, 4294901760
      %3249 = vmatmul.mubr.f32.gmra.mrb[0].mxu0 %v3248
      %v3250 = vpop.f32.mrb[0].mxu0
      %v3251 = vadd.f32 %v3065, %v3250
      %v3252 = vpop.f32.mrb[0].mxu0
      %v3253 = vadd.f32 %v3067, %v3252
      %3254 = vmatprep.mubr.f32.mxu0 0.0
      %v3255 = vand.u32 %v2493, 4294901760
      %v3256 = vsub.f32 %v2493, %v3255
      %v3257 = vand.u32 %v3256, 4294901760
      %3258 = vmatmul.mubr.f32.gmra.mrb[0].mxu0 %v3257
      %v3259 = vpop.f32.mrb[0].mxu0
      %v3260 = vadd.f32 %v3073, %v3259
      %v3261 = vpop.f32.mrb[0].mxu0
      %v3262 = vadd.f32 %v3075, %v3261
      %3263 = vmatprep.mubr.f32.mxu0 0.0
      %v3264 = vand.u32 %v2496, 4294901760
      %v3265 = vsub.f32 %v2496, %v3264
      %v3266 = vand.u32 %v3265, 4294901760
      %3267 = vmatmul.mubr.f32.gmra.mrb[0].mxu0 %v3266
      %v3268 = vpop.f32.mrb[0].mxu0
      %v3269 = vadd.f32 %v3081, %v3268
      %v3270 = vpop.f32.mrb[0].mxu0
      %v3271 = vadd.f32 %v3083, %v3270
      %3272 = vmatprep.mubr.f32.mxu0 0.0
      %v3273 = vand.u32 %v2499, 4294901760
      %v3274 = vsub.f32 %v2499, %v3273
      %v3275 = vand.u32 %v3274, 4294901760
      %3276 = vmatmul.mubr.f32.gmra.mrb[0].mxu0 %v3275
      %v3277 = vpop.f32.mrb[0].mxu0
      %v3278 = vadd.f32 %v3089, %v3277
      %v3279 = vpop.f32.mrb[0].mxu0
      %v3280 = vadd.f32 %v3091, %v3279
      %3281 = vmatprep.mubr.f32.mxu0 0.0
      %v3282 = vand.u32 %v2502, 4294901760
      %v3283 = vsub.f32 %v2502, %v3282
      %v3284 = vand.u32 %v3283, 4294901760
      %3285 = vmatmul.mubr.f32.gmra.mrb[0].mxu0 %v3284
      %v3286 = vpop.f32.mrb[0].mxu0
      %v3287 = vadd.f32 %v3097, %v3286
      %v3288 = vpop.f32.mrb[0].mxu0
      %v3289 = vadd.f32 %v3099, %v3288
      %3290 = vdwg.mxu0
      %v3291 = vand.u32 %v2444, 4294901760
      %v3292 = vsub.f32 %v2444, %v3291
      %v3293 = vand.u32 %v3292, 4294901760
      %3294 = vmatprep.subr.mxu0 %v3293
      %v3295 = vand.u32 %v2443, 4294901760
      %v3296 = vsub.f32 %v2443, %v3295
      %v3297 = vand.u32 %v3296, 4294901760
      %3298 = vmatpush1.msra.mxu0 %v3297
      %v3299 = vand.u32 %v2446, 4294901760
      %v3300 = vsub.f32 %v2446, %v3299
      %v3301 = vand.u32 %v3300, 4294901760
      %3302 = vmatprep.subr.mxu0 %v3301
      %v3303 = vand.u32 %v2445, 4294901760
      %v3304 = vsub.f32 %v2445, %v3303
      %v3305 = vand.u32 %v3304, 4294901760
      %3306 = vmatpush1.msra.mxu0 %v3305
      %v3307 = vand.u32 %v2448, 4294901760
      %v3308 = vsub.f32 %v2448, %v3307
      %v3309 = vand.u32 %v3308, 4294901760
      %3310 = vmatprep.subr.mxu0 %v3309
      %v3311 = vand.u32 %v2447, 4294901760
      %v3312 = vsub.f32 %v2447, %v3311
      %v3313 = vand.u32 %v3312, 4294901760
      %3314 = vmatpush1.msra.mxu0 %v3313
      %v3315 = vand.u32 %v2450, 4294901760
      %v3316 = vsub.f32 %v2450, %v3315
      %v3317 = vand.u32 %v3316, 4294901760
      %3318 = vmatprep.subr.mxu0 %v3317
      %v3319 = vand.u32 %v2449, 4294901760
      %v3320 = vsub.f32 %v2449, %v3319
      %v3321 = vand.u32 %v3320, 4294901760
      %3322 = vmatpush1.msra.mxu0 %v3321
      %3323 = vmatprep.subr.mxu0 0.0
      %3324 = vmatpush1.msra.mxu0 0.0
      %3325 = vmatprep.subr.mxu0 0.0
      %3326 = vmatpush1.msra.mxu0 0.0
      %3327 = vmatprep.subr.mxu0 0.0
      %3328 = vmatpush1.msra.mxu0 0.0
      %3329 = vmatprep.subr.mxu0 0.0
      %3330 = vmatpush1.msra.mxu0 0.0
      %3331 = vmatprep.subr.mxu0 0.0
      %3332 = vmatpush1.msra.mxu0 0.0
      %3333 = vmatprep.subr.mxu0 0.0
      %3334 = vmatpush1.msra.mxu0 0.0
      %3335 = vmatprep.subr.mxu0 0.0
      %3336 = vmatpush1.msra.mxu0 0.0
      %3337 = vmatprep.subr.mxu0 0.0
      %3338 = vmatpush1.msra.mxu0 0.0
      %3339 = vmatprep.subr.mxu0 0.0
      %3340 = vmatpush1.msra.mxu0 0.0
      %3341 = vmatprep.subr.mxu0 0.0
      %3342 = vmatpush1.msra.mxu0 0.0
      %3343 = vmatprep.subr.mxu0 0.0
      %3344 = vmatpush1.msra.mxu0 0.0
      %3345 = vmatprep.subr.mxu0 0.0
      %3346 = vmatpush1.msra.mxu0 0.0
      %3347 = vmatprep.subr.mxu0 0.0
      %3348 = vmatpush1.msra.mxu0 0.0
      %3349 = vmatprep.subr.mxu0 0.0
      %3350 = vmatpush1.msra.mxu0 0.0
      %3351 = vmatprep.subr.mxu0 0.0
      %3352 = vmatpush1.msra.mxu0 0.0
      %3353 = vmatprep.subr.mxu0 0.0
      %3354 = vmatpush1.msra.mxu0 0.0
      %3355 = vmatprep.subr.mxu0 0.0
      %3356 = vmatpush1.msra.mxu0 0.0
      %3357 = vmatprep.subr.mxu0 0.0
      %3358 = vmatpush1.msra.mxu0 0.0
      %3359 = vmatprep.subr.mxu0 0.0
      %3360 = vmatpush1.msra.mxu0 0.0
      %3361 = vmatprep.subr.mxu0 0.0
      %3362 = vmatpush1.msra.mxu0 0.0
      %3363 = vmatprep.subr.mxu0 0.0
      %3364 = vmatpush1.msra.mxu0 0.0
      %3365 = vmatprep.subr.mxu0 0.0
      %3366 = vmatpush1.msra.mxu0 0.0
      %3367 = vmatprep.subr.mxu0 0.0
      %3368 = vmatpush1.msra.mxu0 0.0
      %3369 = vmatprep.subr.mxu0 0.0
      %3370 = vmatpush1.msra.mxu0 0.0
      %3371 = vmatprep.subr.mxu0 0.0
      %3372 = vmatpush1.msra.mxu0 0.0
      %3373 = vmatprep.subr.mxu0 0.0
      %3374 = vmatpush1.msra.mxu0 0.0
      %3375 = vmatprep.subr.mxu0 0.0
      %3376 = vmatpush1.msra.mxu0 0.0
      %3377 = vmatprep.subr.mxu0 0.0
      %3378 = vmatpush1.msra.mxu0 0.0
      %3379 = vmatprep.mubr.f32.mxu0 0.0
      %v3380 = vand.u32 %v2466, 4294901760
      %3381 = vmatmul.mubr.f32.gmra.mrb[0].mxu0 %v3380
      %v3382 = vpop.f32.mrb[0].mxu0
      %v3383 = vadd.f32 %v3179, %v3382
      %v3384 = vpop.f32.mrb[0].mxu0
      %v3385 = vadd.f32 %v3181, %v3384
      %3386 = vmatprep.mubr.f32.mxu0 0.0
      %v3387 = vand.u32 %v2469, 4294901760
      %3388 = vmatmul.mubr.f32.gmra.mrb[0].mxu0 %v3387
      %v3389 = vpop.f32.mrb[0].mxu0
      %v3390 = vadd.f32 %v3188, %v3389
      %v3391 = vpop.f32.mrb[0].mxu0
      %v3392 = vadd.f32 %v3190, %v3391
      %3393 = vmatprep.mubr.f32.mxu0 0.0
      %v3394 = vand.u32 %v2472, 4294901760
      %3395 = vmatmul.mubr.f32.gmra.mrb[0].mxu0 %v3394
      %v3396 = vpop.f32.mrb[0].mxu0
      %v3397 = vadd.f32 %v3197, %v3396
      %v3398 = vpop.f32.mrb[0].mxu0
      %v3399 = vadd.f32 %v3199, %v3398
      %3400 = vmatprep.mubr.f32.mxu0 0.0
      %v3401 = vand.u32 %v2475, 4294901760
      %3402 = vmatmul.mubr.f32.gmra.mrb[0].mxu0 %v3401
      %v3403 = vpop.f32.mrb[0].mxu0
      %v3404 = vadd.f32 %v3206, %v3403
      %v3405 = vpop.f32.mrb[0].mxu0
      %v3406 = vadd.f32 %v3208, %v3405
      %3407 = vmatprep.mubr.f32.mxu0 0.0
      %v3408 = vand.u32 %v2478, 4294901760
      %3409 = vmatmul.mubr.f32.gmra.mrb[0].mxu0 %v3408
      %v3410 = vpop.f32.mrb[0].mxu0
      %v3411 = vadd.f32 %v3215, %v3410
      %v3412 = vpop.f32.mrb[0].mxu0
      %v3413 = vadd.f32 %v3217, %v3412
      %3414 = vmatprep.mubr.f32.mxu0 0.0
      %v3415 = vand.u32 %v2481, 4294901760
      %3416 = vmatmul.mubr.f32.gmra.mrb[0].mxu0 %v3415
      %v3417 = vpop.f32.mrb[0].mxu0
      %v3418 = vadd.f32 %v3224, %v3417
      %v3419 = vpop.f32.mrb[0].mxu0
      %v3420 = vadd.f32 %v3226, %v3419
      %3421 = vmatprep.mubr.f32.mxu0 0.0
      %v3422 = vand.u32 %v2484, 4294901760
      %3423 = vmatmul.mubr.f32.gmra.mrb[0].mxu0 %v3422
      %v3424 = vpop.f32.mrb[0].mxu0
      %v3425 = vadd.f32 %v3233, %v3424
      %v3426 = vpop.f32.mrb[0].mxu0
      %v3427 = vadd.f32 %v3235, %v3426
      %3428 = vmatprep.mubr.f32.mxu0 0.0
      %v3429 = vand.u32 %v2487, 4294901760
      %3430 = vmatmul.mubr.f32.gmra.mrb[0].mxu0 %v3429
      %v3431 = vpop.f32.mrb[0].mxu0
      %v3432 = vadd.f32 %v3242, %v3431
      %v3433 = vpop.f32.mrb[0].mxu0
      %v3434 = vadd.f32 %v3244, %v3433
      %3435 = vmatprep.mubr.f32.mxu0 0.0
      %v3436 = vand.u32 %v2490, 4294901760
      %3437 = vmatmul.mubr.f32.gmra.mrb[0].mxu0 %v3436
      %v3438 = vpop.f32.mrb[0].mxu0
      %v3439 = vadd.f32 %v3251, %v3438
      %v3440 = vpop.f32.mrb[0].mxu0
      %v3441 = vadd.f32 %v3253, %v3440
      %3442 = vmatprep.mubr.f32.mxu0 0.0
      %v3443 = vand.u32 %v2493, 4294901760
      %3444 = vmatmul.mubr.f32.gmra.mrb[0].mxu0 %v3443
      %v3445 = vpop.f32.mrb[0].mxu0
      %v3446 = vadd.f32 %v3260, %v3445
      %v3447 = vpop.f32.mrb[0].mxu0
      %v3448 = vadd.f32 %v3262, %v3447
      %3449 = vmatprep.mubr.f32.mxu0 0.0
      %v3450 = vand.u32 %v2496, 4294901760
      %3451 = vmatmul.mubr.f32.gmra.mrb[0].mxu0 %v3450
      %v3452 = vpop.f32.mrb[0].mxu0
      %v3453 = vadd.f32 %v3269, %v3452
      %v3454 = vpop.f32.mrb[0].mxu0
      %v3455 = vadd.f32 %v3271, %v3454
      %3456 = vmatprep.mubr.f32.mxu0 0.0
      %v3457 = vand.u32 %v2499, 4294901760
      %3458 = vmatmul.mubr.f32.gmra.mrb[0].mxu0 %v3457
      %v3459 = vpop.f32.mrb[0].mxu0
      %v3460 = vadd.f32 %v3278, %v3459
      %v3461 = vpop.f32.mrb[0].mxu0
      %v3462 = vadd.f32 %v3280, %v3461
      %3463 = vmatprep.mubr.f32.mxu0 0.0
      %v3464 = vand.u32 %v2502, 4294901760
      %3465 = vmatmul.mubr.f32.gmra.mrb[0].mxu0 %v3464
      %v3466 = vpop.f32.mrb[0].mxu0
      %v3467 = vadd.f32 %v3287, %v3466
      %v3468 = vpop.f32.mrb[0].mxu0
      %v3469 = vadd.f32 %v3289, %v3468
      %3470 = vdwg.mxu0
      %v3471 = vand.u32 %v2444, 4294901760
      %3472 = vmatprep.subr.mxu0 %v3471
      %v3473 = vand.u32 %v2443, 4294901760
      %3474 = vmatpush1.msra.mxu0 %v3473
      %v3475 = vand.u32 %v2446, 4294901760
      %3476 = vmatprep.subr.mxu0 %v3475
      %v3477 = vand.u32 %v2445, 4294901760
      %3478 = vmatpush1.msra.mxu0 %v3477
      %v3479 = vand.u32 %v2448, 4294901760
      %3480 = vmatprep.subr.mxu0 %v3479
      %v3481 = vand.u32 %v2447, 4294901760
      %3482 = vmatpush1.msra.mxu0 %v3481
      %v3483 = vand.u32 %v2450, 4294901760
      %3484 = vmatprep.subr.mxu0 %v3483
      %v3485 = vand.u32 %v2449, 4294901760
      %3486 = vmatpush1.msra.mxu0 %v3485
      %3487 = vmatprep.subr.mxu0 0.0
      %3488 = vmatpush1.msra.mxu0 0.0
      %3489 = vmatprep.subr.mxu0 0.0
      %3490 = vmatpush1.msra.mxu0 0.0
      %3491 = vmatprep.subr.mxu0 0.0
      %3492 = vmatpush1.msra.mxu0 0.0
      %3493 = vmatprep.subr.mxu0 0.0
      %3494 = vmatpush1.msra.mxu0 0.0
      %3495 = vmatprep.subr.mxu0 0.0
      %3496 = vmatpush1.msra.mxu0 0.0
      %3497 = vmatprep.subr.mxu0 0.0
      %3498 = vmatpush1.msra.mxu0 0.0
      %3499 = vmatprep.subr.mxu0 0.0
      %3500 = vmatpush1.msra.mxu0 0.0
      %3501 = vmatprep.subr.mxu0 0.0
      %3502 = vmatpush1.msra.mxu0 0.0
      %3503 = vmatprep.subr.mxu0 0.0
      %3504 = vmatpush1.msra.mxu0 0.0
      %3505 = vmatprep.subr.mxu0 0.0
      %3506 = vmatpush1.msra.mxu0 0.0
      %3507 = vmatprep.subr.mxu0 0.0
      %3508 = vmatpush1.msra.mxu0 0.0
      %3509 = vmatprep.subr.mxu0 0.0
      %3510 = vmatpush1.msra.mxu0 0.0
      %3511 = vmatprep.subr.mxu0 0.0
      %3512 = vmatpush1.msra.mxu0 0.0
      %3513 = vmatprep.subr.mxu0 0.0
      %3514 = vmatpush1.msra.mxu0 0.0
      %3515 = vmatprep.subr.mxu0 0.0
      %3516 = vmatpush1.msra.mxu0 0.0
      %3517 = vmatprep.subr.mxu0 0.0
      %3518 = vmatpush1.msra.mxu0 0.0
      %3519 = vmatprep.subr.mxu0 0.0
      %3520 = vmatpush1.msra.mxu0 0.0
      %3521 = vmatprep.subr.mxu0 0.0
      %3522 = vmatpush1.msra.mxu0 0.0
      %3523 = vmatprep.subr.mxu0 0.0
      %3524 = vmatpush1.msra.mxu0 0.0
      %3525 = vmatprep.subr.mxu0 0.0
      %3526 = vmatpush1.msra.mxu0 0.0
      %3527 = vmatprep.subr.mxu0 0.0
      %3528 = vmatpush1.msra.mxu0 0.0
      %3529 = vmatprep.subr.mxu0 0.0
      %3530 = vmatpush1.msra.mxu0 0.0
      %3531 = vmatprep.subr.mxu0 0.0
      %3532 = vmatpush1.msra.mxu0 0.0
      %3533 = vmatprep.subr.mxu0 0.0
      %3534 = vmatpush1.msra.mxu0 0.0
      %3535 = vmatprep.subr.mxu0 0.0
      %3536 = vmatpush1.msra.mxu0 0.0
      %3537 = vmatprep.subr.mxu0 0.0
      %3538 = vmatpush1.msra.mxu0 0.0
      %3539 = vmatprep.subr.mxu0 0.0
      %3540 = vmatpush1.msra.mxu0 0.0
      %3541 = vmatprep.subr.mxu0 0.0
      %3542 = vmatpush1.msra.mxu0 0.0
      %3543 = vmatprep.mubr.f32.mxu0 0.0
      %v3544 = vand.u32 %v2466, 4294901760
      %3545 = vmatmul.mubr.f32.gmra.mrb[0].mxu0 %v3544
      %v3546 = vpop.f32.mrb[0].mxu0
      %v3547 = vadd.f32 %v3383, %v3546
      %v3548 = vpop.f32.mrb[0].mxu0
      %v3549 = vadd.f32 %v3385, %v3548
      %3550 = vmatprep.mubr.f32.mxu0 0.0
      %v3551 = vand.u32 %v2469, 4294901760
      %3552 = vmatmul.mubr.f32.gmra.mrb[0].mxu0 %v3551
      %v3553 = vpop.f32.mrb[0].mxu0
      %v3554 = vadd.f32 %v3390, %v3553
      %v3555 = vpop.f32.mrb[0].mxu0
      %v3556 = vadd.f32 %v3392, %v3555
      %3557 = vmatprep.mubr.f32.mxu0 0.0
      %v3558 = vand.u32 %v2472, 4294901760
      %3559 = vmatmul.mubr.f32.gmra.mrb[0].mxu0 %v3558
      %v3560 = vpop.f32.mrb[0].mxu0
      %v3561 = vadd.f32 %v3397, %v3560
      %v3562 = vpop.f32.mrb[0].mxu0
      %v3563 = vadd.f32 %v3399, %v3562
      %3564 = vmatprep.mubr.f32.mxu0 0.0
      %v3565 = vand.u32 %v2475, 4294901760
      %3566 = vmatmul.mubr.f32.gmra.mrb[0].mxu0 %v3565
      %v3567 = vpop.f32.mrb[0].mxu0
      %v3568 = vadd.f32 %v3404, %v3567
      %v3569 = vpop.f32.mrb[0].mxu0
      %v3570 = vadd.f32 %v3406, %v3569
      %3571 = vmatprep.mubr.f32.mxu0 0.0
      %v3572 = vand.u32 %v2478, 4294901760
      %3573 = vmatmul.mubr.f32.gmra.mrb[0].mxu0 %v3572
      %v3574 = vpop.f32.mrb[0].mxu0
      %v3575 = vadd.f32 %v3411, %v3574
      %v3576 = vpop.f32.mrb[0].mxu0
      %v3577 = vadd.f32 %v3413, %v3576
      %3578 = vmatprep.mubr.f32.mxu0 0.0
      %v3579 = vand.u32 %v2481, 4294901760
      %3580 = vmatmul.mubr.f32.gmra.mrb[0].mxu0 %v3579
      %v3581 = vpop.f32.mrb[0].mxu0
      %v3582 = vadd.f32 %v3418, %v3581
      %v3583 = vpop.f32.mrb[0].mxu0
      %v3584 = vadd.f32 %v3420, %v3583
      %3585 = vmatprep.mubr.f32.mxu0 0.0
      %v3586 = vand.u32 %v2484, 4294901760
      %3587 = vmatmul.mubr.f32.gmra.mrb[0].mxu0 %v3586
      %v3588 = vpop.f32.mrb[0].mxu0
      %v3589 = vadd.f32 %v3425, %v3588
      %v3590 = vpop.f32.mrb[0].mxu0
      %v3591 = vadd.f32 %v3427, %v3590
      %3592 = vmatprep.mubr.f32.mxu0 0.0
      %v3593 = vand.u32 %v2487, 4294901760
      %3594 = vmatmul.mubr.f32.gmra.mrb[0].mxu0 %v3593
      %v3595 = vpop.f32.mrb[0].mxu0
      %v3596 = vadd.f32 %v3432, %v3595
      %v3597 = vpop.f32.mrb[0].mxu0
      %v3598 = vadd.f32 %v3434, %v3597
      %3599 = vmatprep.mubr.f32.mxu0 0.0
      %v3600 = vand.u32 %v2490, 4294901760
      %3601 = vmatmul.mubr.f32.gmra.mrb[0].mxu0 %v3600
      %v3602 = vpop.f32.mrb[0].mxu0
      %v3603 = vadd.f32 %v3439, %v3602
      %v3604 = vpop.f32.mrb[0].mxu0
      %v3605 = vadd.f32 %v3441, %v3604
      %3606 = vmatprep.mubr.f32.mxu0 0.0
      %v3607 = vand.u32 %v2493, 4294901760
      %3608 = vmatmul.mubr.f32.gmra.mrb[0].mxu0 %v3607
      %v3609 = vpop.f32.mrb[0].mxu0
      %v3610 = vadd.f32 %v3446, %v3609
      %v3611 = vpop.f32.mrb[0].mxu0
      %v3612 = vadd.f32 %v3448, %v3611
      %3613 = vmatprep.mubr.f32.mxu0 0.0
      %v3614 = vand.u32 %v2496, 4294901760
      %3615 = vmatmul.mubr.f32.gmra.mrb[0].mxu0 %v3614
      %v3616 = vpop.f32.mrb[0].mxu0
      %v3617 = vadd.f32 %v3453, %v3616
      %v3618 = vpop.f32.mrb[0].mxu0
      %v3619 = vadd.f32 %v3455, %v3618
      %3620 = vmatprep.mubr.f32.mxu0 0.0
      %v3621 = vand.u32 %v2499, 4294901760
      %3622 = vmatmul.mubr.f32.gmra.mrb[0].mxu0 %v3621
      %v3623 = vpop.f32.mrb[0].mxu0
      %v3624 = vadd.f32 %v3460, %v3623
      %v3625 = vpop.f32.mrb[0].mxu0
      %v3626 = vadd.f32 %v3462, %v3625
      %3627 = vmatprep.mubr.f32.mxu0 0.0
      %v3628 = vand.u32 %v2502, 4294901760
      %3629 = vmatmul.mubr.f32.gmra.mrb[0].mxu0 %v3628
      %v3630 = vpop.f32.mrb[0].mxu0
      %v3631 = vadd.f32 %v3467, %v3630
      %v3632 = vpop.f32.mrb[0].mxu0
      %v3633 = vadd.f32 %v3469, %v3632
      %3634 = vdwg.mxu0
      %v3635 = vld [vmem:[%s1] sm:$0xff]
      %v3636 = vadd.s32 %v3635, 4294967294
      %vm3637 = vcmp.ge.s32.totalorder %v3636, 0
      %vm3638 = vcmp.lt.s32.totalorder %v3636, 16
      %vm3639 = vmand %vm3637, %vm3638
      %v3640 = vadd.s32 %v3635, 4294967295
      %vm3641 = vcmp.ge.s32.totalorder %v3640, 0
      %vm3642 = vcmp.lt.s32.totalorder %v3640, 16
      %vm3643 = vmand %vm3641, %vm3642
      %v3644 = vadd.s32 %v3635, 1
      %vm3645 = vcmp.ge.s32.totalorder %v3644, 0
      %vm3646 = vcmp.lt.s32.totalorder %v3644, 16
      %vm3647 = vmand %vm3645, %vm3646
      %v3648 = vadd.s32 %v3635, 2
      %vm3649 = vcmp.ge.s32.totalorder %v3648, 0
      %vm3650 = vcmp.lt.s32.totalorder %v3648, 16
      %vm3651 = vmand %vm3649, %vm3650
      %3654 = vrot.lane.b32.xlu0 %v3547, 34
      %v3655 = vpop.permute.xlu0 %3654
      %3656 = vrot.lane.b32.xlu0 %v3549, 34
      %v3657 = vpop.permute.xlu0 %3656
      %vm3658 = vcmask 277504
      %v3659 = vsel %vm3658, %v3655, %v3657
      %v3661 = vsel %vm3658, 0.0, %v3655
      %v3663 = vcombine.low %v3661, %v3659
      %v3665 = vsel %vm3639, %v3663, 0.0
      %v3666 = vadd.f32 %v3665, 0.0
      %v3667 = vrot.slane %v3547, 4
      %v3668 = vrot.slane %v3549, 4
      %3669 = vrot.lane.b32.xlu0 %v3667, 33
      %v3670 = vpop.permute.xlu0 %3669
      %3671 = vrot.lane.b32.xlu0 %v3668, 33
      %v3672 = vpop.permute.xlu0 %3671
      %vm3673 = vcmask 269312
      %v3674 = vsel %vm3673, %v3670, %v3672
      %v3676 = vsel %vm3673, 0.0, %v3670
      %v3678 = vcombine.low %v3676, %v3674
      %v3680 = vsel %vm3643, %v3678, 0.0
      %v3681 = vadd.f32 %v3666, %v3680
      %3684 = vrot.lane.b32.xlu0 %v3554, 32
      %v3685 = vpop.permute.xlu0 %3684
      %3686 = vrot.lane.b32.xlu0 %v3556, 32
      %v3687 = vpop.permute.xlu0 %3686
      %v3688 = vsel %vm2464, %v3685, %v3687
      %v3690 = vsel %vm2464, 0.0, %v3685
      %v3692 = vcombine.low %v3690, %v3688
      %v3694 = vadd.f32 %v3681, %v3692
      %v3695 = vrot.slane %v3554, 4
      %v3696 = vrot.slane %v3556, 4
      %3697 = vrot.lane.b32.xlu0 %v3695, 31
      %v3698 = vpop.permute.xlu0 %3697
      %3699 = vrot.lane.b32.xlu0 %v3696, 31
      %v3700 = vpop.permute.xlu0 %3699
      %vm3701 = vcmask 252928
      %v3702 = vsel %vm3701, %v3698, %v3700
      %v3704 = vsel %vm3701, 0.0, %v3698
      %v3706 = vcombine.low %v3704, %v3702
      %v3708 = vsel %vm3647, %v3706, 0.0
      %v3709 = vadd.f32 %v3694, %v3708
      %3712 = vrot.lane.b32.xlu0 %v3561, 30
      %v3713 = vpop.permute.xlu0 %3712
      %3714 = vrot.lane.b32.xlu0 %v3563, 30
      %v3715 = vpop.permute.xlu0 %3714
      %vm3716 = vcmask 244736
      %v3717 = vsel %vm3716, %v3713, %v3715
      %v3719 = vsel %vm3716, 0.0, %v3713
      %v3721 = vcombine.low %v3719, %v3717
      %v3723 = vsel %vm3651, %v3721, 0.0
      %v3724 = vadd.f32 %v3709, %v3723
      %v3725 = vrot.slane %v3561, 4
      %v3726 = vrot.slane %v3563, 4
      %3727 = vrot.lane.b32.xlu0 %v3725, 18
      %v3728 = vpop.permute.xlu0 %3727
      %3729 = vrot.lane.b32.xlu0 %v3726, 18
      %v3730 = vpop.permute.xlu0 %3729
      %vm3731 = vcmask 146432
      %v3732 = vsel %vm3731, %v3728, %v3730
      %v3734 = vsel %vm3731, 0.0, %v3728
      %v3736 = vcombine.low %v3734, %v3732
      %v3738 = vsel %vm3639, %v3736, 0.0
      %v3739 = vadd.f32 %v3724, %v3738
      %3742 = vrot.lane.b32.xlu0 %v3568, 17
      %v3743 = vpop.permute.xlu0 %3742
      %3744 = vrot.lane.b32.xlu0 %v3570, 17
      %v3745 = vpop.permute.xlu0 %3744
      %vm3746 = vcmask 138240
      %v3747 = vsel %vm3746, %v3743, %v3745
      %v3749 = vsel %vm3746, 0.0, %v3743
      %v3751 = vcombine.low %v3749, %v3747
      %v3753 = vsel %vm3643, %v3751, 0.0
      %v3754 = vadd.f32 %v3739, %v3753
      %v3755 = vrot.slane %v3568, 4
      %v3756 = vrot.slane %v3570, 4
      %3757 = vrot.lane.b32.xlu0 %v3755, 16
      %v3758 = vpop.permute.xlu0 %3757
      %3759 = vrot.lane.b32.xlu0 %v3756, 16
      %v3760 = vpop.permute.xlu0 %3759
      %vm3761 = vcmask 130048
      %v3762 = vsel %vm3761, %v3758, %v3760
      %v3764 = vsel %vm3761, 0.0, %v3758
      %v3766 = vcombine.low %v3764, %v3762
      %v3768 = vadd.f32 %v3754, %v3766
      %3771 = vrot.lane.b32.xlu0 %v3575, 15
      %v3772 = vpop.permute.xlu0 %3771
      %3773 = vrot.lane.b32.xlu0 %v3577, 15
      %v3774 = vpop.permute.xlu0 %3773
      %vm3775 = vcmask 121856
      %v3776 = vsel %vm3775, %v3772, %v3774
      %v3778 = vsel %vm3775, 0.0, %v3772
      %v3780 = vcombine.low %v3778, %v3776
      %v3782 = vsel %vm3647, %v3780, 0.0
      %v3783 = vadd.f32 %v3768, %v3782
      %v3784 = vrot.slane %v3575, 4
      %v3785 = vrot.slane %v3577, 4
      %3786 = vrot.lane.b32.xlu0 %v3784, 14
      %v3787 = vpop.permute.xlu0 %3786
      %3788 = vrot.lane.b32.xlu0 %v3785, 14
      %v3789 = vpop.permute.xlu0 %3788
      %vm3790 = vcmask 113664
      %v3791 = vsel %vm3790, %v3787, %v3789
      %v3793 = vsel %vm3790, 0.0, %v3787
      %v3795 = vcombine.low %v3793, %v3791
      %v3797 = vsel %vm3651, %v3795, 0.0
      %v3798 = vadd.f32 %v3783, %v3797
      %3801 = vrot.lane.b32.xlu0 %v3582, 2
      %v3802 = vpop.permute.xlu0 %3801
      %3803 = vrot.lane.b32.xlu0 %v3584, 2
      %v3804 = vpop.permute.xlu0 %3803
      %vm3805 = vcmask 15360
      %v3806 = vsel %vm3805, %v3802, %v3804
      %v3808 = vsel %vm3805, 0.0, %v3802
      %v3810 = vcombine.low %v3808, %v3806
      %v3812 = vsel %vm3639, %v3810, 0.0
      %v3813 = vadd.f32 %v3798, %v3812
      %v3814 = vrot.slane %v3582, 4
      %v3815 = vrot.slane %v3584, 4
      %3816 = vrot.lane.b32.xlu0 %v3814, 1
      %v3817 = vpop.permute.xlu0 %3816
      %3818 = vrot.lane.b32.xlu0 %v3815, 1
      %v3819 = vpop.permute.xlu0 %3818
      %vm3820 = vcmask 7168
      %v3821 = vsel %vm3820, %v3817, %v3819
      %v3823 = vsel %vm3820, 0.0, %v3817
      %v3825 = vcombine.low %v3823, %v3821
      %v3827 = vsel %vm3643, %v3825, 0.0
      %v3828 = vadd.f32 %v3813, %v3827
      %v3831 = vcombine.low %v3589, %v3591
      %v3833 = vadd.f32 %v3828, %v3831
      %3834 = vrot.lane.b32.xlu0 %v3589, 127
      %v3835 = vpop.permute.xlu0 %3834
      %3836 = vrot.lane.b32.xlu0 %v3591, 127
      %v3837 = vpop.permute.xlu0 %3836
      %vm3838 = vcmask 1039360
      %v3839 = vsel %vm3838, %v3835, %v3837
      %v3841 = vsel %vm3838, %v3837, 0.0
      %v3843 = vcombine.high %v3839, %v3841
      %v3845 = vsel %vm3647, %v3843, 0.0
      %v3846 = vadd.f32 %v3833, %v3845
      %3849 = vrot.lane.b32.xlu0 %v3596, 126
      %v3850 = vpop.permute.xlu0 %3849
      %3851 = vrot.lane.b32.xlu0 %v3598, 126
      %v3852 = vpop.permute.xlu0 %3851
      %vm3853 = vcmask 1031168
      %v3854 = vsel %vm3853, %v3850, %v3852
      %v3856 = vsel %vm3853, %v3852, 0.0
      %v3858 = vcombine.low %v3854, %v3856
      %v3860 = vsel %vm3651, %v3858, 0.0
      %v3861 = vadd.f32 %v3846, %v3860
      %3862 = vrot.lane.b32.xlu0 %v3596, 114
      %v3863 = vpop.permute.xlu0 %3862
      %3864 = vrot.lane.b32.xlu0 %v3598, 114
      %v3865 = vpop.permute.xlu0 %3864
      %vm3866 = vcmask 932864
      %v3867 = vsel %vm3866, %v3863, %v3865
      %v3869 = vsel %vm3866, %v3865, 0.0
      %v3871 = vcombine.high %v3867, %v3869
      %v3873 = vsel %vm3639, %v3871, 0.0
      %v3874 = vadd.f32 %v3861, %v3873
      %3877 = vrot.lane.b32.xlu0 %v3603, 113
      %v3878 = vpop.permute.xlu0 %3877
      %3879 = vrot.lane.b32.xlu0 %v3605, 113
      %v3880 = vpop.permute.xlu0 %3879
      %vm3881 = vcmask 924672
      %v3882 = vsel %vm3881, %v3878, %v3880
      %v3884 = vsel %vm3881, %v3880, 0.0
      %v3886 = vcombine.low %v3882, %v3884
      %v3888 = vsel %vm3643, %v3886, 0.0
      %v3889 = vadd.f32 %v3874, %v3888
      %3890 = vrot.lane.b32.xlu0 %v3603, 112
      %v3891 = vpop.permute.xlu0 %3890
      %3892 = vrot.lane.b32.xlu0 %v3605, 112
      %v3893 = vpop.permute.xlu0 %3892
      %vm3894 = vcmask 916480
      %v3895 = vsel %vm3894, %v3891, %v3893
      %v3897 = vsel %vm3894, %v3893, 0.0
      %v3899 = vcombine.high %v3895, %v3897
      %v3901 = vadd.f32 %v3889, %v3899
      %3904 = vrot.lane.b32.xlu0 %v3610, 111
      %v3905 = vpop.permute.xlu0 %3904
      %3906 = vrot.lane.b32.xlu0 %v3612, 111
      %v3907 = vpop.permute.xlu0 %3906
      %vm3908 = vcmask 908288
      %v3909 = vsel %vm3908, %v3905, %v3907
      %v3911 = vsel %vm3908, %v3907, 0.0
      %v3913 = vcombine.low %v3909, %v3911
      %v3915 = vsel %vm3647, %v3913, 0.0
      %v3916 = vadd.f32 %v3901, %v3915
      %3917 = vrot.lane.b32.xlu0 %v3610, 110
      %v3918 = vpop.permute.xlu0 %3917
      %3919 = vrot.lane.b32.xlu0 %v3612, 110
      %v3920 = vpop.permute.xlu0 %3919
      %vm3921 = vcmask 900096
      %v3922 = vsel %vm3921, %v3918, %v3920
      %v3924 = vsel %vm3921, %v3920, 0.0
      %v3926 = vcombine.high %v3922, %v3924
      %v3928 = vsel %vm3651, %v3926, 0.0
      %v3929 = vadd.f32 %v3916, %v3928
      %3932 = vrot.lane.b32.xlu0 %v3617, 98
      %v3933 = vpop.permute.xlu0 %3932
      %3934 = vrot.lane.b32.xlu0 %v3619, 98
      %v3935 = vpop.permute.xlu0 %3934
      %vm3936 = vcmask 801792
      %v3937 = vsel %vm3936, %v3933, %v3935
      %v3939 = vsel %vm3936, %v3935, 0.0
      %v3941 = vcombine.low %v3937, %v3939
      %v3943 = vsel %vm3639, %v3941, 0.0
      %v3944 = vadd.f32 %v3929, %v3943
      %3945 = vrot.lane.b32.xlu0 %v3617, 97
      %v3946 = vpop.permute.xlu0 %3945
      %3947 = vrot.lane.b32.xlu0 %v3619, 97
      %v3948 = vpop.permute.xlu0 %3947
      %vm3949 = vcmask 793600
      %v3950 = vsel %vm3949, %v3946, %v3948
      %v3952 = vsel %vm3949, %v3948, 0.0
      %v3954 = vcombine.high %v3950, %v3952
      %v3956 = vsel %vm3643, %v3954, 0.0
      %v3957 = vadd.f32 %v3944, %v3956
      %3960 = vrot.lane.b32.xlu0 %v3624, 96
      %v3961 = vpop.permute.xlu0 %3960
      %3962 = vrot.lane.b32.xlu0 %v3626, 96
      %v3963 = vpop.permute.xlu0 %3962
      %vm3964 = vcmask 785408
      %v3965 = vsel %vm3964, %v3961, %v3963
      %v3967 = vsel %vm3964, %v3963, 0.0
      %v3969 = vcombine.low %v3965, %v3967
      %v3971 = vadd.f32 %v3957, %v3969
      %3972 = vrot.lane.b32.xlu0 %v3624, 95
      %v3973 = vpop.permute.xlu0 %3972
      %3974 = vrot.lane.b32.xlu0 %v3626, 95
      %v3975 = vpop.permute.xlu0 %3974
      %vm3976 = vcmask 777216
      %v3977 = vsel %vm3976, %v3973, %v3975
      %v3979 = vsel %vm3976, %v3975, 0.0
      %v3981 = vcombine.high %v3977, %v3979
      %v3983 = vsel %vm3647, %v3981, 0.0
      %v3984 = vadd.f32 %v3971, %v3983
      %3987 = vrot.lane.b32.xlu0 %v3631, 94
      %v3988 = vpop.permute.xlu0 %3987
      %3989 = vrot.lane.b32.xlu0 %v3633, 94
      %v3990 = vpop.permute.xlu0 %3989
      %vm3991 = vcmask 769024
      %v3992 = vsel %vm3991, %v3988, %v3990
      %v3994 = vsel %vm3991, %v3990, 0.0
      %v3996 = vcombine.low %v3992, %v3994
      %v3998 = vsel %vm3651, %v3996, 0.0
      %v3999 = vadd.f32 %v3984, %v3998
      %v4000 = vld [vmem:[%s9] sm:$0xf]
      %4002 = vset.pattern.permute.xlu0 0
      %4003 = vperm.xlu0 %4002, %v4000
      %v4004 = vpop.permute.xlu0 %4003
      %v4006 = vunpack.c.l.s4 839922192
      %v4007 = vunpack.c.0.s8 %v4006
      %v4008 = vlaneseq
      %v4009 = vshrl.u32 %v4008, 7
      %v4010 = vsub.s32 %v4007, %v4009
      %v4011 = vrot.slane %v4004, %v4010
      %v4013 = vadd.f32 %v3999, %v4011
      %4014 = vst [vmem:[%s361] sm:$0xff] %v4013
      %p4015 = scmp.lt.s32.totalorder %s23, 1
      %s4016 = scalar_select %p4015, %s23, 1
      %s4017 = smul.addr %s4016, 2
      %s4018 = smul.addr %s4017, 4
      %s4019 = scalar_lea.vmem %s10, %s4018
      // Predicated region
      $region61: #{_lambda_.1} parent=59 // pred_check
        %p4020 = pneg %p256
      $region62: #{_lambda_.1} parent=59 // pred_check_branch
        %4022 = sbr.rel (%p4020) target = $region64
      $region63: #{_lambda_.1} parent=59 // pred_region
        _
      $region64: #{_lambda_.1} parent=59 // pred_fallthru
        _
    $region60: #{_lambda_.1} parent=5 // pred_fallthru
      _
    %p4023 = scmp.le.s32.totalorder 2, %s18
    // Predicated region
    $region65: #{_lambda_.1} parent=5 // pred_check
      %p4024 = pneg %p4023
    $region66: #{_lambda_.1} parent=5 // pred_check_branch
      %4026 = sbr.rel (%p4024) target = $region68
    $region67: #{_lambda_.1} parent=5 // pred_region
      %s4027 = ssub.s32 %s18, 2
      // Predicated region
      $region69: #{_lambda_.1} parent=67 // pred_check
        %p4028 = pneg %p262
      $region70: #{_lambda_.1} parent=67 // pred_check_branch
        %4030 = sbr.rel (%p4028) target = $region72
      $region71: #{_lambda_.1} parent=67 // pred_region
        %p4031 = scmp.lt.s32.totalorder %s24, 1
        %s4032 = scalar_select %p4031, %s24, 1
        %s4033 = smul.addr %s4032, 2
        %s4034 = smul.addr %s4033, 4
        %s4035 = scalar_lea.vmem %s10, %s4034
      $region72: #{_lambda_.1} parent=67 // pred_fallthru
        _
    $region68: #{_lambda_.1} parent=5 // pred_fallthru
      _
  $region6: #{_lambda_.1} parent=0 // loop_footer
    %s22 = sadd.s32 1, %s18
  $region7: #{_lambda_.1} parent=0 // loop_footer_branch
    %17 = sbr.rel target = $region3
  $region8: #{_lambda_.1} parent=0 // loop_exit
    _

</llo_original>
